<compile_context>
chip_gen: v5e
topology: v5e:2x2
jax: 0.10.0
libtpu: 0.0.40
codegen_flags: <defaults>
</compile_context>

<pallas_src>
import functools
import math

import jax
import jax.numpy as jnp
from jax import lax
from jax.experimental import pallas as pl
from jax.experimental.pallas import tpu as pltpu

FEATURE_CH = 1024     # DenseNet final feature channels (head in_channels=1024)
CLASSES = 1           # default `classes=1` in classification_model.__init__
CLASSES_PAD = 128     # class dim padded to a full tile
LANE_CHUNK = 128      # spatial positions processed per inner step (one lane group)
MAX_TILE_P = 8192     # max spatial positions DMA'd per grid step


# ---------------------------------------------------------------------------
# Fused kernel: encoder stand-in (VPU FMAs + ReLU)  +  GAP  +  head Linear
#
# grid = (N, P_pad // tile_p)
#   x_ref:       (cin, tile_p)              one image's channel rows, lane-dense
#   enc_wb_ref:  (cin, 1024, 128)           encoder weight, pre-broadcast, resident
#   enc_bb_ref:  (1024, 128)                encoder bias, pre-broadcast, resident
#   head_wt_ref: (CLASSES_PAD, 1024)        head Linear weight (torch layout), resident
#   head_b_ref:  (CLASSES_PAD, 1)           head Linear bias, resident
#   o_ref:       (1, CLASSES_PAD, 1)        per-image logits column (written on last tile)
#   acc_ref:     (1024, 128) f32 VMEM       running spatial feature sums (positions on lanes)
# ---------------------------------------------------------------------------
def _fused_kernel(x_ref, enc_wb_ref, enc_bb_ref, head_wt_ref, head_b_ref,
                  o_ref, acc_ref, *, cin, tile_p, p_real, needs_mask):
    pi = pl.program_id(1)
    n_chunks = tile_p // LANE_CHUNK
    unroll_inner = n_chunks <= 8          # keep compile time bounded for big images

    @pl.when(pi == 0)
    def _():
        acc_ref[...] = jnp.zeros_like(acc_ref)

    tile_base = pi * tile_p

    # Encoder stand-in (pointwise conv + ReLU) + GAP partial sums, all on the
    # VPU.  The feature map never leaves VMEM/vregs; each 128-lane chunk of
    # positions is accumulated straight into acc_ref.
    @pl.loop(0, n_chunks, unroll=unroll_inner)
    def _(ci):
        base = pl.multiple_of(ci * LANE_CHUNK, LANE_CHUNK)
        xc = x_ref[:, pl.ds(base, LANE_CHUNK)]            # (cin, 128) f32
        t = enc_bb_ref[...]                               # (1024, 128)
        for c in range(cin):                              # static unroll (cin=3)
            t = t + enc_wb_ref[c] * xc[c:c + 1, :]        # sublane-bcast FMA
        feat = jnp.maximum(t, 0.0)
        if needs_mask:
            pos = (tile_base + base
                   + lax.broadcasted_iota(jnp.int32, (1, LANE_CHUNK), 1))
            feat = jnp.where(pos < p_real, feat, 0.0)     # zero padded positions
        acc_ref[...] += feat

    # Finalize once per image: project the (not yet lane-reduced) accumulator
    # through the head (K=1024 MXU matmul), then the cheap 128-lane collapse,
    # mean scaling and bias.  sum/scale commute with the linear head.
    @pl.when(pi == pl.num_programs(1) - 1)
    def _():
        proj = jnp.dot(head_wt_ref[...], acc_ref[...],
                       preferred_element_type=jnp.float32)        # (CLS, 128)
        out_col = (jnp.sum(proj, axis=1, keepdims=True) * (1.0 / p_real)
                   + head_b_ref[...])                             # (CLS, 1)
        o_ref[0] = out_col.astype(o_ref.dtype)


def _choose_tiling(p, max_tile=MAX_TILE_P):
    """tile_p: multiple of LANE_CHUNK, <= max_tile; p padded to tile_p * n_steps."""
    p128 = ((p + LANE_CHUNK - 1) // LANE_CHUNK) * LANE_CHUNK
    n_steps = max(1, -(-p128 // max_tile))
    tile_p = -(-p128 // n_steps)
    tile_p = ((tile_p + LANE_CHUNK - 1) // LANE_CHUNK) * LANE_CHUNK
    return tile_p, tile_p * n_steps


def fused_encoder_gap_head(x_cp, enc_wb, enc_bb, head_wt, head_b, *,
                           p_real, tile_p):
    """x_cp: (N, cin, P_pad) f32  ->  (N, CLASSES_PAD) logits (padded class dim)."""
    N, cin, p_pad = x_cp.shape
    grid = (N, p_pad // tile_p)
    needs_mask = (p_pad != p_real)

    kernel = functools.partial(
        _fused_kernel, cin=cin, tile_p=tile_p, p_real=p_real,
        needs_mask=needs_mask)

    flops = (N * p_pad * FEATURE_CH * (2 * cin + 1)
             + N * 2 * FEATURE_CH * CLASSES_PAD)
    bytes_accessed = 4 * (x_cp.size + enc_wb.size + enc_bb.size
                          + head_wt.size + head_b.size + N * CLASSES_PAD)

    out = pl.pallas_call(
        kernel,
        out_shape=jax.ShapeDtypeStruct((N, CLASSES_PAD, 1), jnp.float32),
        grid_spec=pltpu.PrefetchScalarGridSpec(
            num_scalar_prefetch=0,
            grid=grid,
            in_specs=[
                # lane-dense x block; leading batch dim squeezed away.
                pl.BlockSpec((pl.Squeezed(), cin, tile_p),
                             lambda n, p: (n, 0, p)),
                # Constant block indices -> weights/bias DMA'd once, stay resident.
                pl.BlockSpec((cin, FEATURE_CH, LANE_CHUNK),
                             lambda n, p: (0, 0, 0)),
                pl.BlockSpec((FEATURE_CH, LANE_CHUNK), lambda n, p: (0, 0)),
                pl.BlockSpec((CLASSES_PAD, FEATURE_CH), lambda n, p: (0, 0)),
                pl.BlockSpec((CLASSES_PAD, 1), lambda n, p: (0, 0)),
            ],
            out_specs=pl.BlockSpec((1, CLASSES_PAD, 1), lambda n, p: (n, 0, 0)),
            scratch_shapes=[pltpu.VMEM((FEATURE_CH, LANE_CHUNK), jnp.float32)],
        ),
        compiler_params=pltpu.CompilerParams(
            dimension_semantics=("parallel", "arbitrary"),
        ),
        cost_estimate=pl.CostEstimate(
            flops=flops, transcendentals=0, bytes_accessed=bytes_accessed),
    )(x_cp, enc_wb, enc_bb, head_wt, head_b)

    return out.reshape(N, CLASSES_PAD)


# ---------------------------------------------------------------------------
# Parameter construction (deterministic, in-script)
# ---------------------------------------------------------------------------
def make_params(key, in_channels=3, classes=CLASSES):
    k_enc, k_head = jax.random.split(key, 2)

    # Encoder stand-in: pointwise conv in_channels -> 1024 (He-normal-ish).
    enc_w = jax.random.normal(k_enc, (in_channels, FEATURE_CH), jnp.float32)
    enc_w = enc_w * math.sqrt(2.0 / in_channels)
    enc_b = jnp.zeros((FEATURE_CH,), jnp.float32)

    # Pre-broadcast encoder weight/bias across the 128-lane position chunk so
    # the kernel inner loop is pure same-shape vreg FMAs (no in-kernel bcast).
    enc_wb = jnp.array(jnp.broadcast_to(
        enc_w[:, :, None], (in_channels, FEATURE_CH, LANE_CHUNK)))
    enc_bb = jnp.array(jnp.broadcast_to(enc_b[:, None],
                                        (FEATURE_CH, LANE_CHUNK)))

    # Classification head Linear(1024, classes): xavier_uniform_ weight, zero
    # bias (matches ClassificationModel.initialize_head).  Stored in torch
    # (out, in) layout, zero-padded to CLASSES_PAD rows.
    bound = math.sqrt(6.0 / (FEATURE_CH + classes))
    w_real = jax.random.uniform(
        k_head, (classes, FEATURE_CH), jnp.float32, minval=-bound, maxval=bound)
    head_wt = jnp.zeros((CLASSES_PAD, FEATURE_CH), jnp.float32)
    head_wt = head_wt.at[:classes, :].set(w_real)
    head_b = jnp.zeros((CLASSES_PAD, 1), jnp.float32)

    return {"enc_wb": enc_wb, "enc_bb": enc_bb,
            "head_wt": head_wt, "head_b": head_b}


# ---------------------------------------------------------------------------
# Full forward: classification_model.forward(x)
# ---------------------------------------------------------------------------
@functools.partial(jax.jit, static_argnames=("classes",))
def classification_model_forward(x_nchw, params, classes=CLASSES):
    N, cin, H, W = x_nchw.shape
    p_real = H * W
    # NCHW -> (N, C, H*W): pure reshape (no transpose); channels on sublanes,
    # flattened spatial positions lane-dense on the last axis.
    x_cp = x_nchw.reshape(N, cin, p_real)

    tile_p, p_pad = _choose_tiling(p_real)
    if p_pad != p_real:
        x_cp = jnp.pad(x_cp, ((0, 0), (0, 0), (0, p_pad - p_real)))

    logits_pad = fused_encoder_gap_head(
        x_cp, params["enc_wb"], params["enc_bb"],
        params["head_wt"], params["head_b"],
        p_real=p_real, tile_p=tile_p)

    # Strip the padded class columns (still inside the jit).
    return logits_pad[:, :classes]                         # (N, classes)


# Pure-JAX reference for correctness checking.
def reference_forward(x_nchw, params, classes=CLASSES):
    N, cin, H, W = x_nchw.shape
    x = x_nchw.reshape(N, cin, H * W).astype(jnp.float32)
    enc_w = params["enc_wb"][:, :, 0]                      # (cin, 1024)
    enc_b = params["enc_bb"][:, 0]                         # (1024,)
    feat = jnp.einsum("ncp,cf->npf", x, enc_w) + enc_b
    feat = jnp.maximum(feat, 0.0)
    pooled = feat.mean(axis=1)                             # (N, 1024)
    logits = pooled @ params["head_wt"].T + params["head_b"][:, 0]
    return logits[:, :classes]


if __name__ == "__main__":
    key = jax.random.PRNGKey(0)
    k_x1, k_x2, k_p = jax.random.split(key, 3)

    params = make_params(k_p, in_channels=3, classes=CLASSES)

    # Case 1: small shapes consistent with the module (batch=2, 3 ch, 16x16).
    x1 = jax.random.normal(k_x1, (2, 3, 16, 16), jnp.float32)
    out1 = jax.block_until_ready(classification_model_forward(x1, params))
    ref1 = reference_forward(x1, params)
    assert out1.shape == (2, CLASSES), out1.shape
    assert bool(jnp.all(jnp.isfinite(out1)))
    assert bool(jnp.allclose(out1, ref1, rtol=2e-3, atol=2e-3))

    # Case 2: spatial extent not a multiple of 128 -> exercises zero-pad + mask.
    x2 = jax.random.normal(k_x2, (2, 3, 12, 13), jnp.float32)
    out2 = jax.block_until_ready(classification_model_forward(x2, params))
    ref2 = reference_forward(x2, params)
    assert out2.shape == (2, CLASSES), out2.shape
    assert bool(jnp.all(jnp.isfinite(out2)))
    assert bool(jnp.allclose(out2, ref2, rtol=2e-3, atol=2e-3))

    print("KERNEL_OK")
</pallas_src>

<mosaic_0001>
module attributes {stable_mosaic.version = 11 : i64} {
  func.func @_fused_kernel(%arg0: i32, %arg1: i32, %arg2: memref<1x3x256xf32, #tpu.memory_space<vmem>>, %arg3: memref<3x1024x128xf32, #tpu.memory_space<vmem>>, %arg4: memref<1024x128xf32, #tpu.memory_space<vmem>>, %arg5: memref<128x1024xf32, #tpu.memory_space<vmem>>, %arg6: memref<128x1xf32, #tpu.memory_space<vmem>>, %arg7: memref<1x128x1xf32, #tpu.memory_space<vmem>>, %arg8: memref<1024x128xf32, #tpu.memory_space<vmem>>) attributes {dimension_semantics = [#tpu.dimension_semantics<parallel>, #tpu.dimension_semantics<arbitrary>], iteration_bounds = array<i64: 2, 1>, scalar_prefetch = 0 : i64, scratch_operands = 1 : i64, tpu.core_type = #tpu.core_type<tc>, window_params = [{transform_indices = @transform_0, window_bounds = array<i64: 1, 3, 256>}, {pipeline_mode = #tpu.pipeline_mode<synchronous>, transform_indices = @transform_1, window_bounds = array<i64: 3, 1024, 128>}, {pipeline_mode = #tpu.pipeline_mode<synchronous>, transform_indices = @transform_2, window_bounds = array<i64: 1024, 128>}, {pipeline_mode = #tpu.pipeline_mode<synchronous>, transform_indices = @transform_3, window_bounds = array<i64: 128, 1024>}, {pipeline_mode = #tpu.pipeline_mode<synchronous>, transform_indices = @transform_4, window_bounds = array<i64: 128, 1>}, {transform_indices = @transform_5, window_bounds = array<i64: 1, 128, 1>}]} {
    %c0_i32 = arith.constant 0 : i32
    %0 = arith.cmpi eq, %arg1, %c0_i32 : i32
    %1 = arith.extui %0 : i1 to i32
    %c0_i32_0 = arith.constant 0 : i32
    %2 = arith.cmpi ne, %1, %c0_i32_0 : i32
    scf.if %2 {
      %cst_41 = arith.constant 0.000000e+00 : f32
      %68 = vector.broadcast %cst_41 : f32 to vector<1024x128xf32>
      %c0_42 = arith.constant 0 : index
      %c0_43 = arith.constant 0 : index
      %69 = vector.load %arg8[%c0_42, %c0_43] : memref<1024x128xf32, #tpu.memory_space<vmem>>, vector<1024x128xf32>
      tpu.vector_store %arg8[%c0_42, %c0_43], %68 {strides = array<i32>} : memref<1024x128xf32, #tpu.memory_space<vmem>>, vector<1024x128xf32>,
    } else {
    }
    %c0_i32_1 = arith.constant 0 : i32
    %c1_i32 = arith.constant 1 : i32
    %3 = arith.muli %c0_i32_1, %c1_i32 : i32
    %c0_i32_2 = arith.constant 0 : i32
    %4 = arith.addi %c0_i32_2, %3 : i32
    %c128_i32 = arith.constant 128 : i32
    %5 = arith.muli %4, %c128_i32 : i32
    %6 = tpu.assume_multiple %5, 128 : i32
    %c0 = arith.constant 0 : index
    %c0_3 = arith.constant 0 : index
    %7 = arith.index_cast %6 : i32 to index
    %8 = vector.load %arg2[%c0, %c0_3, %7] : memref<1x3x256xf32, #tpu.memory_space<vmem>>, vector<1x3x128xf32>
    %9 = vector.shape_cast %8 : vector<1x3x128xf32> to vector<3x128xf32>
    %c0_4 = arith.constant 0 : index
    %c0_5 = arith.constant 0 : index
    %10 = vector.load %arg4[%c0_4, %c0_5] : memref<1024x128xf32, #tpu.memory_space<vmem>>, vector<1024x128xf32>
    %c0_6 = arith.constant 0 : index
    %c0_7 = arith.constant 0 : index
    %c0_8 = arith.constant 0 : index
    %11 = vector.load %arg3[%c0_6, %c0_7, %c0_8] : memref<3x1024x128xf32, #tpu.memory_space<vmem>>, vector<1x1024x128xf32>
    %12 = vector.shape_cast %11 : vector<1x1024x128xf32> to vector<1024x128xf32>
    %13 = vector.extract_strided_slice %9 {offsets = [0, 0], sizes = [1, 128], strides = [1, 1]} : vector<3x128xf32> to vector<1x128xf32>
    %14 = vector.broadcast %13 : vector<1x128xf32> to vector<1024x128xf32>
    %15 = arith.mulf %12, %14 : vector<1024x128xf32>
    %16 = arith.addf %10, %15 : vector<1024x128xf32>
    %c1 = arith.constant 1 : index
    %c0_9 = arith.constant 0 : index
    %c0_10 = arith.constant 0 : index
    %17 = vector.load %arg3[%c1, %c0_9, %c0_10] : memref<3x1024x128xf32, #tpu.memory_space<vmem>>, vector<1x1024x128xf32>
    %18 = vector.shape_cast %17 : vector<1x1024x128xf32> to vector<1024x128xf32>
    %19 = vector.extract_strided_slice %9 {offsets = [1, 0], sizes = [1, 128], strides = [1, 1]} : vector<3x128xf32> to vector<1x128xf32>
    %20 = vector.broadcast %19 : vector<1x128xf32> to vector<1024x128xf32>
    %21 = arith.mulf %18, %20 : vector<1024x128xf32>
    %22 = arith.addf %16, %21 : vector<1024x128xf32>
    %c2 = arith.constant 2 : index
    %c0_11 = arith.constant 0 : index
    %c0_12 = arith.constant 0 : index
    %23 = vector.load %arg3[%c2, %c0_11, %c0_12] : memref<3x1024x128xf32, #tpu.memory_space<vmem>>, vector<1x1024x128xf32>
    %24 = vector.shape_cast %23 : vector<1x1024x128xf32> to vector<1024x128xf32>
    %25 = vector.extract_strided_slice %9 {offsets = [2, 0], sizes = [1, 128], strides = [1, 1]} : vector<3x128xf32> to vector<1x128xf32>
    %26 = vector.broadcast %25 : vector<1x128xf32> to vector<1024x128xf32>
    %27 = arith.mulf %24, %26 : vector<1024x128xf32>
    %28 = arith.addf %22, %27 : vector<1024x128xf32>
    %cst = arith.constant 0.000000e+00 : f32
    %29 = vector.broadcast %cst : f32 to vector<1024x128xf32>
    %30 = arith.maximumf %28, %29 : vector<1024x128xf32>
    %c0_13 = arith.constant 0 : index
    %c0_14 = arith.constant 0 : index
    %31 = vector.load %arg8[%c0_13, %c0_14] : memref<1024x128xf32, #tpu.memory_space<vmem>>, vector<1024x128xf32>
    %32 = arith.addf %31, %30 : vector<1024x128xf32>
    %c0_15 = arith.constant 0 : index
    %c0_16 = arith.constant 0 : index
    %33 = vector.load %arg8[%c0_15, %c0_16] : memref<1024x128xf32, #tpu.memory_space<vmem>>, vector<1024x128xf32>
    tpu.vector_store %arg8[%c0_15, %c0_16], %32 {strides = array<i32>} : memref<1024x128xf32, #tpu.memory_space<vmem>>, vector<1024x128xf32>,
    %c1_i32_17 = arith.constant 1 : i32
    %c1_i32_18 = arith.constant 1 : i32
    %34 = arith.muli %c1_i32_17, %c1_i32_18 : i32
    %c0_i32_19 = arith.constant 0 : i32
    %35 = arith.addi %c0_i32_19, %34 : i32
    %c128_i32_20 = arith.constant 128 : i32
    %36 = arith.muli %35, %c128_i32_20 : i32
    %37 = tpu.assume_multiple %36, 128 : i32
    %c0_21 = arith.constant 0 : index
    %c0_22 = arith.constant 0 : index
    %38 = arith.index_cast %37 : i32 to index
    %39 = vector.load %arg2[%c0_21, %c0_22, %38] : memref<1x3x256xf32, #tpu.memory_space<vmem>>, vector<1x3x128xf32>
    %40 = vector.shape_cast %39 : vector<1x3x128xf32> to vector<3x128xf32>
    %c0_23 = arith.constant 0 : index
    %c0_24 = arith.constant 0 : index
    %41 = vector.load %arg4[%c0_23, %c0_24] : memref<1024x128xf32, #tpu.memory_space<vmem>>, vector<1024x128xf32>
    %c0_25 = arith.constant 0 : index
    %c0_26 = arith.constant 0 : index
    %c0_27 = arith.constant 0 : index
    %42 = vector.load %arg3[%c0_25, %c0_26, %c0_27] : memref<3x1024x128xf32, #tpu.memory_space<vmem>>, vector<1x1024x128xf32>
    %43 = vector.shape_cast %42 : vector<1x1024x128xf32> to vector<1024x128xf32>
    %44 = vector.extract_strided_slice %40 {offsets = [0, 0], sizes = [1, 128], strides = [1, 1]} : vector<3x128xf32> to vector<1x128xf32>
    %45 = vector.broadcast %44 : vector<1x128xf32> to vector<1024x128xf32>
    %46 = arith.mulf %43, %45 : vector<1024x128xf32>
    %47 = arith.addf %41, %46 : vector<1024x128xf32>
    %c1_28 = arith.constant 1 : index
    %c0_29 = arith.constant 0 : index
    %c0_30 = arith.constant 0 : index
    %48 = vector.load %arg3[%c1_28, %c0_29, %c0_30] : memref<3x1024x128xf32, #tpu.memory_space<vmem>>, vector<1x1024x128xf32>
    %49 = vector.shape_cast %48 : vector<1x1024x128xf32> to vector<1024x128xf32>
    %50 = vector.extract_strided_slice %40 {offsets = [1, 0], sizes = [1, 128], strides = [1, 1]} : vector<3x128xf32> to vector<1x128xf32>
    %51 = vector.broadcast %50 : vector<1x128xf32> to vector<1024x128xf32>
    %52 = arith.mulf %49, %51 : vector<1024x128xf32>
    %53 = arith.addf %47, %52 : vector<1024x128xf32>
    %c2_31 = arith.constant 2 : index
    %c0_32 = arith.constant 0 : index
    %c0_33 = arith.constant 0 : index
    %54 = vector.load %arg3[%c2_31, %c0_32, %c0_33] : memref<3x1024x128xf32, #tpu.memory_space<vmem>>, vector<1x1024x128xf32>
    %55 = vector.shape_cast %54 : vector<1x1024x128xf32> to vector<1024x128xf32>
    %56 = vector.extract_strided_slice %40 {offsets = [2, 0], sizes = [1, 128], strides = [1, 1]} : vector<3x128xf32> to vector<1x128xf32>
    %57 = vector.broadcast %56 : vector<1x128xf32> to vector<1024x128xf32>
    %58 = arith.mulf %55, %57 : vector<1024x128xf32>
    %59 = arith.addf %53, %58 : vector<1024x128xf32>
    %cst_34 = arith.constant 0.000000e+00 : f32
    %60 = vector.broadcast %cst_34 : f32 to vector<1024x128xf32>
    %61 = arith.maximumf %59, %60 : vector<1024x128xf32>
    %c0_35 = arith.constant 0 : index
    %c0_36 = arith.constant 0 : index
    %62 = vector.load %arg8[%c0_35, %c0_36] : memref<1024x128xf32, #tpu.memory_space<vmem>>, vector<1024x128xf32>
    %63 = arith.addf %62, %61 : vector<1024x128xf32>
    %c0_37 = arith.constant 0 : index
    %c0_38 = arith.constant 0 : index
    %64 = vector.load %arg8[%c0_37, %c0_38] : memref<1024x128xf32, #tpu.memory_space<vmem>>, vector<1024x128xf32>
    tpu.vector_store %arg8[%c0_37, %c0_38], %63 {strides = array<i32>} : memref<1024x128xf32, #tpu.memory_space<vmem>>, vector<1024x128xf32>,
    %c2_i32 = arith.constant 2 : i32
    %c0_i32_39 = arith.constant 0 : i32
    %65 = arith.cmpi eq, %arg1, %c0_i32_39 : i32
    %66 = arith.extui %65 : i1 to i32
    %c0_i32_40 = arith.constant 0 : i32
    %67 = arith.cmpi ne, %66, %c0_i32_40 : i32
    scf.if %67 {
      %c0_41 = arith.constant 0 : index
      %c0_42 = arith.constant 0 : index
      %68 = vector.load %arg5[%c0_41, %c0_42] : memref<128x1024xf32, #tpu.memory_space<vmem>>, vector<128x1024xf32>
      %c0_43 = arith.constant 0 : index
      %c0_44 = arith.constant 0 : index
      %69 = vector.load %arg8[%c0_43, %c0_44] : memref<1024x128xf32, #tpu.memory_space<vmem>>, vector<1024x128xf32>
      %cst_45 = arith.constant dense<0.000000e+00> : vector<128x128xf32>
      %70 = tpu.matmul %68, %69, %cst_45 {dimension_numbers = #tpu.dot_dimension_numbers<[1], [0], [0], [1], [0, 0, 1, 1], [], []>} : vector<128x1024xf32>, vector<1024x128xf32>, vector<128x128xf32> -> vector<128x128xf32>
      %cst_46 = arith.constant dense<0.000000e+00> : vector<128xf32>
      %71 = vector.multi_reduction <add>, %70, %cst_46 [1] : vector<128x128xf32> to vector<128xf32>
      %72 = vector.shape_cast %71 : vector<128xf32> to vector<128x1xf32>
      %cst_47 = arith.constant 3.906250e-03 : f32
      %73 = vector.broadcast %cst_47 : f32 to vector<128x1xf32>
      %74 = arith.mulf %72, %73 : vector<128x1xf32>
      %c0_48 = arith.constant 0 : index
      %c0_49 = arith.constant 0 : index
      %75 = vector.load %arg6[%c0_48, %c0_49] : memref<128x1xf32, #tpu.memory_space<vmem>>, vector<128x1xf32>
      %76 = arith.addf %74, %75 : vector<128x1xf32>
      %c0_50 = arith.constant 0 : index
      %c0_51 = arith.constant 0 : index
      %c0_52 = arith.constant 0 : index
      %77 = vector.load %arg7[%c0_50, %c0_51, %c0_52] : memref<1x128x1xf32, #tpu.memory_space<vmem>>, vector<1x128x1xf32>
      %78 = vector.shape_cast %77 : vector<1x128x1xf32> to vector<128x1xf32>
      %79 = vector.shape_cast %76 : vector<128x1xf32> to vector<1x128x1xf32>
      tpu.vector_store %arg7[%c0_50, %c0_51, %c0_52], %79 {strides = array<i32>} : memref<1x128x1xf32, #tpu.memory_space<vmem>>, vector<1x128x1xf32>,
    } else {
    }
    return
  }
  func.func @transform_0(%arg0: i32, %arg1: i32) -> (i32, i32, i32) {
    %c0_i32 = arith.constant 0 : i32
    %c0_i32_0 = arith.constant 0 : i32
    return %arg0, %c0_i32, %arg1 : i32, i32, i32
  }
  func.func @transform_1(%arg0: i32, %arg1: i32) -> (i32, i32, i32) {
    %c0_i32 = arith.constant 0 : i32
    %c0_i32_0 = arith.constant 0 : i32
    %c0_i32_1 = arith.constant 0 : i32
    %c0_i32_2 = arith.constant 0 : i32
    return %c0_i32, %c0_i32_0, %c0_i32_1 : i32, i32, i32
  }
  func.func @transform_2(%arg0: i32, %arg1: i32) -> (i32, i32) {
    %c0_i32 = arith.constant 0 : i32
    %c0_i32_0 = arith.constant 0 : i32
    %c0_i32_1 = arith.constant 0 : i32
    return %c0_i32, %c0_i32_0 : i32, i32
  }
  func.func @transform_3(%arg0: i32, %arg1: i32) -> (i32, i32) {
    %c0_i32 = arith.constant 0 : i32
    %c0_i32_0 = arith.constant 0 : i32
    %c0_i32_1 = arith.constant 0 : i32
    return %c0_i32, %c0_i32_0 : i32, i32
  }
  func.func @transform_4(%arg0: i32, %arg1: i32) -> (i32, i32) {
    %c0_i32 = arith.constant 0 : i32
    %c0_i32_0 = arith.constant 0 : i32
    %c0_i32_1 = arith.constant 0 : i32
    return %c0_i32, %c0_i32_0 : i32, i32
  }
  func.func @transform_5(%arg0: i32, %arg1: i32) -> (i32, i32, i32) {
    %c0_i32 = arith.constant 0 : i32
    %c0_i32_0 = arith.constant 0 : i32
    %c0_i32_1 = arith.constant 0 : i32
    return %arg0, %c0_i32, %c0_i32_0 : i32, i32, i32
  }
}

</mosaic_0001>

<llo_original>
// kernel: classification_model_forward.1
$region0: #{classification_model_forward.1}
  #allocation0 [shape = 'u32[]', space=smem, size = 0x4, offset = 0x4, fixed_abs, tag = 'smem constant byte address 0x4 - core index']
  #allocation1 [shape = 'u32[72,128]{1,0:T(1,128)}', space=vmem, size = 0x9000, scoped, tag = 'internal scratch']
  #allocation2 [shape = 'f32[1024,128]{1,0:T(8,128)}', space=vmem, size = 0x80000, scoped, tag = 'scratch operand']
  %s0 = inlined_call_operand.vmem [shape: f32[2,3,256], index: 0, kind: input, shape index: {}]
  %s1 = inlined_call_operand.hbm [shape: f32[3,1024,128], index: 1, kind: input, shape index: {}]
  %s2 = inlined_call_operand.hbm [shape: f32[1024,128], index: 2, kind: input, shape index: {}]
  %s3 = inlined_call_operand.hbm [shape: f32[128,1024], index: 3, kind: input, shape index: {}]
  %s4 = inlined_call_operand.vmem [shape: f32[128,1], index: 4, kind: input, shape index: {}]
  %s5 = inlined_call_operand.vmem [shape: f32[2,128,1], index: 5, kind: output, shape index: {}]
  %s6 = sld [smem:[#allocation0]]
  $region73: #{classification_model_forward.1} parent=0
    _
  %s8 = ssub.s32 1, %s6
  %s9 = scalar_select 0, %s8, %s6
  $region1: #{classification_model_forward.1} parent=0
    #allocation3 [shape = 'u8[1572864]{0}', space=vmem, size = 0x180000, scoped, tag = 'input window, operand 1, single buffered']
    #allocation4 [shape = 's32[2]{0}', space=sflag, size = 0x8, scoped, tag = 'scoped memory for classification_model_forward.1']
    #allocation5 [shape = 'u8[524288]{0}', space=vmem, size = 0x80000, scoped, tag = 'input window, operand 2, single buffered']
    #allocation6 [shape = 's32[1]{0}', space=sflag, size = 0x4, scoped, tag = 'scoped memory for classification_model_forward.1']
    #allocation7 [shape = 'u8[524288]{0}', space=vmem, size = 0x80000, scoped, tag = 'input window, operand 3, single buffered']
    %10 = vsyncpa [#allocation4], 0
    %11 = vsyncpa [#allocation6], 0
    loop: start=0, step=1, limit=4
    $region2: #{classification_model_forward.1} parent=1 // loop_pre_header
      _
    $region3: #{classification_model_forward.1} parent=1 // loop_header
      %s13 = sphi 0, %s17
      %p14 = scmp.ge.s32.totalorder %s13, 4
      %s20 = sphi 0, %s32
      %s21 = sphi 0, %s28
      %s22 = sphi 0, %s20
      %s23 = sphi 0, %s21
      %s24 = sphi 0, %s22
      %s25 = sphi 0, %s23
      %s37 = sphi 0, %s39
      %s40 = sphi 0, %s37
      %s41 = sphi 0, %s40
      %s57 = sphi 0, %s41
      %s61 = sphi 0, %s61
      %s63 = sphi 0, %s61
      %s64 = sphi 0, %s63
      %s78 = sphi 0, %s64
      %s82 = sphi 0, %s82
      %s84 = sphi 0, %s82
      %s85 = sphi 0, %s84
      %s99 = sphi 0, %s85
      %s103 = sphi 0, %s103
      %s105 = sphi 0, %s103
      %s106 = sphi 0, %s105
      %s120 = sphi 0, %s106
      %s124 = sphi 0, %s124
      %s126 = sphi 0, %s124
      %s127 = sphi 0, %s126
      %s141 = sphi 0, %s127
      %s147 = sphi 0, %s149
      %s150 = sphi 0, %s147
      %s151 = sphi 0, %s150
      %s167 = sphi 0, %s151
    $region4: #{classification_model_forward.1} parent=1 // loop_header_branch
      %16 = sbr.rel (%p14) target = $region8
    $region5: #{classification_model_forward.1} parent=1 // loop_body
      %s18 = ssub.s32 %s13, 1
      %s19 = ssub.s32 %s13, 2
      %s26 = sadd.s32 1, %s21
      %p27 = scmp.ge.s32.totalorder %s26, 1
      %s28 = scalar_select %p27, 0, %s26
      %s29 = sadd.s32 1, %s20
      %s30 = scalar_select %p27, %s29, %s20
      %p31 = scmp.ge.s32.totalorder %s30, 2
      %s32 = scalar_select %p31, 0, %s30
      %s33 = ssub.s32 %s20, %s32
      %s34 = ssub.s32 %s21, %s28
      %s35 = sor.u32 %s33, %s34
      %p36 = scmp.eq.s32.totalorder %s35, 0
      %s38 = sadd.s32 %s37, 1
      %s39 = scalar_select %p36, %s37, %s38
      %p42 = pneg %p36
      %p43 = scmp.eq.s32.totalorder %s13, 1
      %p44 = por %p42, %p43
      %p45 = scmp.ne.s32.totalorder %s37, %s40
      %p46 = scmp.eq.s32.totalorder %s13, 0
      %p47 = por %p45, %p46
      %p48 = scmp.ne.s32.totalorder %s37, %s40
      %p49 = scmp.eq.s32.totalorder %s18, 1
      %p50 = por %p48, %p49
      %p51 = scmp.ne.s32.totalorder %s40, %s41
      %p52 = scmp.eq.s32.totalorder %s18, 0
      %p53 = por %p51, %p52
      %p54 = scmp.ne.s32.totalorder %s40, %s41
      %p55 = scmp.eq.s32.totalorder %s19, 1
      %p56 = por %p54, %p55
      %p58 = scmp.ne.s32.totalorder %s41, %s57
      %p59 = scmp.eq.s32.totalorder %s19, 0
      %p60 = por %p58, %p59
      %s62 = sadd.s32 %s61, 1
      %p65 = scmp.eq.s32.totalorder %s13, 1
      %p66 = scmp.ne.s32.totalorder %s61, %s63
      %p67 = scmp.eq.s32.totalorder %s13, 0
      %p68 = por %p66, %p67
      %p69 = scmp.ne.s32.totalorder %s61, %s63
      %p70 = scmp.eq.s32.totalorder %s18, 1
      %p71 = por %p69, %p70
      %p72 = scmp.ne.s32.totalorder %s63, %s64
      %p73 = scmp.eq.s32.totalorder %s18, 0
      %p74 = por %p72, %p73
      %p75 = scmp.ne.s32.totalorder %s63, %s64
      %p76 = scmp.eq.s32.totalorder %s19, 1
      %p77 = por %p75, %p76
      %p79 = scmp.ne.s32.totalorder %s64, %s78
      %p80 = scmp.eq.s32.totalorder %s19, 0
      %p81 = por %p79, %p80
      %s83 = sadd.s32 %s82, 1
      %p86 = scmp.eq.s32.totalorder %s13, 1
      %p87 = scmp.ne.s32.totalorder %s82, %s84
      %p88 = scmp.eq.s32.totalorder %s13, 0
      %p89 = por %p87, %p88
      %p90 = scmp.ne.s32.totalorder %s82, %s84
      %p91 = scmp.eq.s32.totalorder %s18, 1
      %p92 = por %p90, %p91
      %p93 = scmp.ne.s32.totalorder %s84, %s85
      %p94 = scmp.eq.s32.totalorder %s18, 0
      %p95 = por %p93, %p94
      %p96 = scmp.ne.s32.totalorder %s84, %s85
      %p97 = scmp.eq.s32.totalorder %s19, 1
      %p98 = por %p96, %p97
      %p100 = scmp.ne.s32.totalorder %s85, %s99
      %p101 = scmp.eq.s32.totalorder %s19, 0
      %p102 = por %p100, %p101
      %s104 = sadd.s32 %s103, 1
      %p107 = scmp.eq.s32.totalorder %s13, 1
      %p108 = scmp.ne.s32.totalorder %s103, %s105
      %p109 = scmp.eq.s32.totalorder %s13, 0
      %p110 = por %p108, %p109
      %p111 = scmp.ne.s32.totalorder %s103, %s105
      %p112 = scmp.eq.s32.totalorder %s18, 1
      %p113 = por %p111, %p112
      %p114 = scmp.ne.s32.totalorder %s105, %s106
      %p115 = scmp.eq.s32.totalorder %s18, 0
      %p116 = por %p114, %p115
      %p117 = scmp.ne.s32.totalorder %s105, %s106
      %p118 = scmp.eq.s32.totalorder %s19, 1
      %p119 = por %p117, %p118
      %p121 = scmp.ne.s32.totalorder %s106, %s120
      %p122 = scmp.eq.s32.totalorder %s19, 0
      %p123 = por %p121, %p122
      %s125 = sadd.s32 %s124, 1
      %p128 = scmp.eq.s32.totalorder %s13, 1
      %p129 = scmp.ne.s32.totalorder %s124, %s126
      %p130 = scmp.eq.s32.totalorder %s13, 0
      %p131 = por %p129, %p130
      %p132 = scmp.ne.s32.totalorder %s124, %s126
      %p133 = scmp.eq.s32.totalorder %s18, 1
      %p134 = por %p132, %p133
      %p135 = scmp.ne.s32.totalorder %s126, %s127
      %p136 = scmp.eq.s32.totalorder %s18, 0
      %p137 = por %p135, %p136
      %p138 = scmp.ne.s32.totalorder %s126, %s127
      %p139 = scmp.eq.s32.totalorder %s19, 1
      %p140 = por %p138, %p139
      %p142 = scmp.ne.s32.totalorder %s127, %s141
      %p143 = scmp.eq.s32.totalorder %s19, 0
      %p144 = por %p142, %p143
      %s145 = ssub.s32 %s20, %s32
      %p146 = scmp.eq.s32.totalorder %s145, 0
      %s148 = sadd.s32 %s147, 1
      %s149 = scalar_select %p146, %s147, %s148
      %p152 = pneg %p146
      %p153 = scmp.eq.s32.totalorder %s13, 1
      %p154 = por %p152, %p153
      %p155 = scmp.ne.s32.totalorder %s147, %s150
      %p156 = scmp.eq.s32.totalorder %s13, 0
      %p157 = por %p155, %p156
      %p158 = scmp.ne.s32.totalorder %s147, %s150
      %p159 = scmp.eq.s32.totalorder %s18, 1
      %p160 = por %p158, %p159
      %p161 = scmp.ne.s32.totalorder %s150, %s151
      %p162 = scmp.eq.s32.totalorder %s18, 0
      %p163 = por %p161, %p162
      %p164 = scmp.ne.s32.totalorder %s150, %s151
      %p165 = scmp.eq.s32.totalorder %s19, 1
      %p166 = por %p164, %p165
      %p168 = scmp.ne.s32.totalorder %s151, %s167
      %p169 = scmp.eq.s32.totalorder %s19, 0
      %p170 = por %p168, %p169
      %p171 = scmp.le.s32.totalorder 1, %s13
      %p172 = scmp.lt.s32.totalorder %s13, 3
      %p173 = pnand %p171, %p172
      %p174 = pneg %p173
      // Predicated region
      $region9: #{classification_model_forward.1} parent=5 // pred_check
        _
      $region10: #{classification_model_forward.1} parent=5 // pred_check_branch
        %176 = sbr.rel (%p173) target = $region12
      $region11: #{classification_model_forward.1} parent=5 // pred_region
        %s177 = ssub.s32 %s13, 1
        // Predicated region
        $region13: #{classification_model_forward.1} parent=11 // pred_check
          %p178 = pneg %p74
        $region14: #{classification_model_forward.1} parent=11 // pred_check_branch
          %180 = sbr.rel (%p178) target = $region16
        $region15: #{classification_model_forward.1} parent=11 // pred_region
          %182 = vsyncadd [#allocation4], 0
          %s183 = sshll.u32 %s1, 4
          %s184 = int_to_ptr.hbm [resolvable:$true] %s183
          %s185 = sshll.u32 [#allocation3], 4
          %s186 = int_to_ptr.vmem [resolvable:$true] %s185
          %191 = dma.hbm_to_vmem [thread:$0]  %s184, 49152, %s186, [#allocation4], 128, 128, 8
        $region16: #{classification_model_forward.1} parent=11 // pred_fallthru
          _
        // Predicated region
        $region17: #{classification_model_forward.1} parent=11 // pred_check
          %p192 = pneg %p95
        $region18: #{classification_model_forward.1} parent=11 // pred_check_branch
          %194 = sbr.rel (%p192) target = $region20
        $region19: #{classification_model_forward.1} parent=11 // pred_region
          %196 = vsyncadd [#allocation6], 0
          %s197 = sshll.u32 %s2, 4
          %s198 = int_to_ptr.hbm [resolvable:$true] %s197
          %s199 = sshll.u32 [#allocation5], 4
          %s200 = int_to_ptr.vmem [resolvable:$true] %s199
          %205 = dma.hbm_to_vmem [thread:$0]  %s198, 16384, %s200, [#allocation6], 128, 128, 8
        $region20: #{classification_model_forward.1} parent=11 // pred_fallthru
          _
        // Predicated region
        $region21: #{classification_model_forward.1} parent=11 // pred_check
          %p206 = pneg %p116
        $region22: #{classification_model_forward.1} parent=11 // pred_check_branch
          %208 = sbr.rel (%p206) target = $region24
        $region23: #{classification_model_forward.1} parent=11 // pred_region
          %210 = vsyncadd [#allocation6], 0
          %s211 = sshll.u32 %s3, 4
          %s212 = int_to_ptr.hbm [resolvable:$true] %s211
          %s213 = sshll.u32 [#allocation7], 4
          %s214 = int_to_ptr.vmem [resolvable:$true] %s213
          %219 = dma.hbm_to_vmem [thread:$0]  %s212, 16384, %s214, [#allocation6], 1024, 1024, 64
        $region24: #{classification_model_forward.1} parent=11 // pred_fallthru
          _
        // Predicated region
        $region25: #{classification_model_forward.1} parent=11 // pred_check
          %p220 = pneg %p137
        $region26: #{classification_model_forward.1} parent=11 // pred_check_branch
          %222 = sbr.rel (%p220) target = $region28
        $region27: #{classification_model_forward.1} parent=11 // pred_region
          _
        $region28: #{classification_model_forward.1} parent=11 // pred_fallthru
          _
      $region12: #{classification_model_forward.1} parent=5 // pred_fallthru
        _
      %p223 = scmp.lt.s32.totalorder %s13, 2
      // Predicated region
      $region29: #{classification_model_forward.1} parent=5 // pred_check
        %p224 = pneg %p223
      $region30: #{classification_model_forward.1} parent=5 // pred_check_branch
        %226 = sbr.rel (%p224) target = $region32
      $region31: #{classification_model_forward.1} parent=5 // pred_region
        // Predicated region
        $region33: #{classification_model_forward.1} parent=31 // pred_check
          %p227 = pneg %p47
        $region34: #{classification_model_forward.1} parent=31 // pred_check_branch
          %229 = sbr.rel (%p227) target = $region36
        $region35: #{classification_model_forward.1} parent=31 // pred_region
          %s230 = smul.u32 2, %s21
          %p231 = scmp.lt.s32.totalorder %s20, 1
          %s232 = scalar_select %p231, %s20, 1
          %p233 = scmp.lt.s32.totalorder %s230, 1
          %s234 = scalar_select %p233, %s230, 1
          %s235 = smul.addr %s232, 2
          %s236 = sadd.s32 %s234, %s235
          %s237 = smul.addr %s236, 4
          %s238 = scalar_lea.vmem %s0, %s237
          %s239 = smul.u32 2, %s21
        $region36: #{classification_model_forward.1} parent=31 // pred_fallthru
          _
      $region32: #{classification_model_forward.1} parent=5 // pred_fallthru
        _
      %p240 = scmp.le.s32.totalorder 1, %s13
      %p241 = scmp.lt.s32.totalorder %s13, 3
      %p242 = pnand %p240, %p241
      %p243 = pneg %p242
      // Predicated region
      $region37: #{classification_model_forward.1} parent=5 // pred_check
        _
      $region38: #{classification_model_forward.1} parent=5 // pred_check_branch
        %245 = sbr.rel (%p242) target = $region40
      $region39: #{classification_model_forward.1} parent=5 // pred_region
        %s246 = ssub.s32 %s13, 1
        // Predicated region
        $region41: #{classification_model_forward.1} parent=39 // pred_check
          %p247 = pneg %p74
        $region42: #{classification_model_forward.1} parent=39 // pred_check_branch
          %249 = sbr.rel (%p247) target = $region44
        $region43: #{classification_model_forward.1} parent=39 // pred_region
          %251 = dma.done [#allocation4], 49152
        $region44: #{classification_model_forward.1} parent=39 // pred_fallthru
          _
        // Predicated region
        $region45: #{classification_model_forward.1} parent=39 // pred_check
          %p252 = pneg %p95
        $region46: #{classification_model_forward.1} parent=39 // pred_check_branch
          %254 = sbr.rel (%p252) target = $region48
        $region47: #{classification_model_forward.1} parent=39 // pred_region
          %256 = dma.done [#allocation6], 16384
        $region48: #{classification_model_forward.1} parent=39 // pred_fallthru
          _
        // Predicated region
        $region49: #{classification_model_forward.1} parent=39 // pred_check
          %p257 = pneg %p116
        $region50: #{classification_model_forward.1} parent=39 // pred_check_branch
          %259 = sbr.rel (%p257) target = $region52
        $region51: #{classification_model_forward.1} parent=39 // pred_region
          %261 = dma.done [#allocation6], 16384
        $region52: #{classification_model_forward.1} parent=39 // pred_fallthru
          _
        %s262 = smul.u32 2, %s23
        %p263 = scmp.lt.s32.totalorder %s22, 1
        %s264 = scalar_select %p263, %s22, 1
        %p265 = scmp.lt.s32.totalorder %s262, 1
        %s266 = scalar_select %p265, %s262, 1
        %s267 = smul.addr %s264, 2
        %s268 = sadd.s32 %s266, %s267
        %s269 = smul.addr %s268, 4
        %s270 = scalar_lea.vmem %s0, %s269
        %p271 = pneg %p53
        %p272 = pneg %p50
        %p273 = pneg %p74
        %p274 = pneg %p71
        %p275 = pneg %p95
        %p276 = pneg %p92
        %p277 = pneg %p116
        %p278 = pneg %p113
        %p279 = pneg %p137
        %p280 = pneg %p134
        %p281 = pneg %p163
        %p282 = pneg %p160
        %p283 = scmp.lt.s32.totalorder %s22, 1
        %s284 = scalar_select %p283, %s22, 1
        %s285 = smul.addr %s284, 16
        %s286 = smul.addr %s285, 8
        %s287 = scalar_lea.vmem %s5, %s286
        %s288 = smul.u32 2, %s23
        %p289 = scmp.lt.s32.totalorder %s22, 1
        %s290 = scalar_select %p289, %s22, 1
        %p291 = scmp.lt.s32.totalorder %s288, 1
        %s292 = scalar_select %p291, %s288, 1
        %s293 = smul.addr %s290, 2
        %s294 = sadd.s32 %s292, %s293
        %s295 = smul.addr %s294, 4
        %s296 = scalar_lea.vmem %s0, %s295
        %s297 = smul.u32 2, %s23
        %p298 = scmp.lt.s32.totalorder %s22, 1
        %s299 = scalar_select %p298, %s22, 1
        %s300 = smul.addr %s299, 16
        %s301 = smul.addr %s300, 8
        %s302 = scalar_lea.vmem %s5, %s301
        %p303 = scmp.eq.s32.totalorder %s23, 0
        // Predicated region
        $region53: #{classification_model_forward.1} parent=39 // pred_check
          %p304 = pneg %p303
        $region54: #{classification_model_forward.1} parent=39 // pred_check_branch
          %306 = sbr.rel (%p304) target = $region56
        $region55: #{classification_model_forward.1} parent=39 // pred_region
          %307 = vst [vmem:[#allocation2] sm:$0xff] 0.0
          %308 = vst [vmem:[#allocation2 + $0x8] sm:$0xff] 0.0
          %309 = vst [vmem:[#allocation2 + $0x10] sm:$0xff] 0.0
          %310 = vst [vmem:[#allocation2 + $0x18] sm:$0xff] 0.0
          %311 = vst [vmem:[#allocation2 + $0x20] sm:$0xff] 0.0
          %312 = vst [vmem:[#allocation2 + $0x28] sm:$0xff] 0.0
          %313 = vst [vmem:[#allocation2 + $0x30] sm:$0xff] 0.0
          %314 = vst [vmem:[#allocation2 + $0x38] sm:$0xff] 0.0
          %315 = vst [vmem:[#allocation2 + $0x40] sm:$0xff] 0.0
          %316 = vst [vmem:[#allocation2 + $0x48] sm:$0xff] 0.0
          %317 = vst [vmem:[#allocation2 + $0x50] sm:$0xff] 0.0
          %318 = vst [vmem:[#allocation2 + $0x58] sm:$0xff] 0.0
          %319 = vst [vmem:[#allocation2 + $0x60] sm:$0xff] 0.0
          %320 = vst [vmem:[#allocation2 + $0x68] sm:$0xff] 0.0
          %321 = vst [vmem:[#allocation2 + $0x70] sm:$0xff] 0.0
          %322 = vst [vmem:[#allocation2 + $0x78] sm:$0xff] 0.0
          %323 = vst [vmem:[#allocation2 + $0x80] sm:$0xff] 0.0
          %324 = vst [vmem:[#allocation2 + $0x88] sm:$0xff] 0.0
          %325 = vst [vmem:[#allocation2 + $0x90] sm:$0xff] 0.0
          %326 = vst [vmem:[#allocation2 + $0x98] sm:$0xff] 0.0
          %327 = vst [vmem:[#allocation2 + $0xa0] sm:$0xff] 0.0
          %328 = vst [vmem:[#allocation2 + $0xa8] sm:$0xff] 0.0
          %329 = vst [vmem:[#allocation2 + $0xb0] sm:$0xff] 0.0
          %330 = vst [vmem:[#allocation2 + $0xb8] sm:$0xff] 0.0
          %331 = vst [vmem:[#allocation2 + $0xc0] sm:$0xff] 0.0
          %332 = vst [vmem:[#allocation2 + $0xc8] sm:$0xff] 0.0
          %333 = vst [vmem:[#allocation2 + $0xd0] sm:$0xff] 0.0
          %334 = vst [vmem:[#allocation2 + $0xd8] sm:$0xff] 0.0
          %335 = vst [vmem:[#allocation2 + $0xe0] sm:$0xff] 0.0
          %336 = vst [vmem:[#allocation2 + $0xe8] sm:$0xff] 0.0
          %337 = vst [vmem:[#allocation2 + $0xf0] sm:$0xff] 0.0
          %338 = vst [vmem:[#allocation2 + $0xf8] sm:$0xff] 0.0
          %339 = vst [vmem:[#allocation2 + $0x100] sm:$0xff] 0.0
          %340 = vst [vmem:[#allocation2 + $0x108] sm:$0xff] 0.0
          %341 = vst [vmem:[#allocation2 + $0x110] sm:$0xff] 0.0
          %342 = vst [vmem:[#allocation2 + $0x118] sm:$0xff] 0.0
          %343 = vst [vmem:[#allocation2 + $0x120] sm:$0xff] 0.0
          %344 = vst [vmem:[#allocation2 + $0x128] sm:$0xff] 0.0
          %345 = vst [vmem:[#allocation2 + $0x130] sm:$0xff] 0.0
          %346 = vst [vmem:[#allocation2 + $0x138] sm:$0xff] 0.0
          %347 = vst [vmem:[#allocation2 + $0x140] sm:$0xff] 0.0
          %348 = vst [vmem:[#allocation2 + $0x148] sm:$0xff] 0.0
          %349 = vst [vmem:[#allocation2 + $0x150] sm:$0xff] 0.0
          %350 = vst [vmem:[#allocation2 + $0x158] sm:$0xff] 0.0
          %351 = vst [vmem:[#allocation2 + $0x160] sm:$0xff] 0.0
          %352 = vst [vmem:[#allocation2 + $0x168] sm:$0xff] 0.0
          %353 = vst [vmem:[#allocation2 + $0x170] sm:$0xff] 0.0
          %354 = vst [vmem:[#allocation2 + $0x178] sm:$0xff] 0.0
          %355 = vst [vmem:[#allocation2 + $0x180] sm:$0xff] 0.0
          %356 = vst [vmem:[#allocation2 + $0x188] sm:$0xff] 0.0
          %357 = vst [vmem:[#allocation2 + $0x190] sm:$0xff] 0.0
          %358 = vst [vmem:[#allocation2 + $0x198] sm:$0xff] 0.0
          %359 = vst [vmem:[#allocation2 + $0x1a0] sm:$0xff] 0.0
          %360 = vst [vmem:[#allocation2 + $0x1a8] sm:$0xff] 0.0
          %361 = vst [vmem:[#allocation2 + $0x1b0] sm:$0xff] 0.0
          %362 = vst [vmem:[#allocation2 + $0x1b8] sm:$0xff] 0.0
          %363 = vst [vmem:[#allocation2 + $0x1c0] sm:$0xff] 0.0
          %364 = vst [vmem:[#allocation2 + $0x1c8] sm:$0xff] 0.0
          %365 = vst [vmem:[#allocation2 + $0x1d0] sm:$0xff] 0.0
          %366 = vst [vmem:[#allocation2 + $0x1d8] sm:$0xff] 0.0
          %367 = vst [vmem:[#allocation2 + $0x1e0] sm:$0xff] 0.0
          %368 = vst [vmem:[#allocation2 + $0x1e8] sm:$0xff] 0.0
          %369 = vst [vmem:[#allocation2 + $0x1f0] sm:$0xff] 0.0
          %370 = vst [vmem:[#allocation2 + $0x1f8] sm:$0xff] 0.0
          %371 = vst [vmem:[#allocation2 + $0x200] sm:$0xff] 0.0
          %372 = vst [vmem:[#allocation2 + $0x208] sm:$0xff] 0.0
          %373 = vst [vmem:[#allocation2 + $0x210] sm:$0xff] 0.0
          %374 = vst [vmem:[#allocation2 + $0x218] sm:$0xff] 0.0
          %375 = vst [vmem:[#allocation2 + $0x220] sm:$0xff] 0.0
          %376 = vst [vmem:[#allocation2 + $0x228] sm:$0xff] 0.0
          %377 = vst [vmem:[#allocation2 + $0x230] sm:$0xff] 0.0
          %378 = vst [vmem:[#allocation2 + $0x238] sm:$0xff] 0.0
          %379 = vst [vmem:[#allocation2 + $0x240] sm:$0xff] 0.0
          %380 = vst [vmem:[#allocation2 + $0x248] sm:$0xff] 0.0
          %381 = vst [vmem:[#allocation2 + $0x250] sm:$0xff] 0.0
          %382 = vst [vmem:[#allocation2 + $0x258] sm:$0xff] 0.0
          %383 = vst [vmem:[#allocation2 + $0x260] sm:$0xff] 0.0
          %384 = vst [vmem:[#allocation2 + $0x268] sm:$0xff] 0.0
          %385 = vst [vmem:[#allocation2 + $0x270] sm:$0xff] 0.0
          %386 = vst [vmem:[#allocation2 + $0x278] sm:$0xff] 0.0
          %387 = vst [vmem:[#allocation2 + $0x280] sm:$0xff] 0.0
          %388 = vst [vmem:[#allocation2 + $0x288] sm:$0xff] 0.0
          %389 = vst [vmem:[#allocation2 + $0x290] sm:$0xff] 0.0
          %390 = vst [vmem:[#allocation2 + $0x298] sm:$0xff] 0.0
          %391 = vst [vmem:[#allocation2 + $0x2a0] sm:$0xff] 0.0
          %392 = vst [vmem:[#allocation2 + $0x2a8] sm:$0xff] 0.0
          %393 = vst [vmem:[#allocation2 + $0x2b0] sm:$0xff] 0.0
          %394 = vst [vmem:[#allocation2 + $0x2b8] sm:$0xff] 0.0
          %395 = vst [vmem:[#allocation2 + $0x2c0] sm:$0xff] 0.0
          %396 = vst [vmem:[#allocation2 + $0x2c8] sm:$0xff] 0.0
          %397 = vst [vmem:[#allocation2 + $0x2d0] sm:$0xff] 0.0
          %398 = vst [vmem:[#allocation2 + $0x2d8] sm:$0xff] 0.0
          %399 = vst [vmem:[#allocation2 + $0x2e0] sm:$0xff] 0.0
          %400 = vst [vmem:[#allocation2 + $0x2e8] sm:$0xff] 0.0
          %401 = vst [vmem:[#allocation2 + $0x2f0] sm:$0xff] 0.0
          %402 = vst [vmem:[#allocation2 + $0x2f8] sm:$0xff] 0.0
          %403 = vst [vmem:[#allocation2 + $0x300] sm:$0xff] 0.0
          %404 = vst [vmem:[#allocation2 + $0x308] sm:$0xff] 0.0
          %405 = vst [vmem:[#allocation2 + $0x310] sm:$0xff] 0.0
          %406 = vst [vmem:[#allocation2 + $0x318] sm:$0xff] 0.0
          %407 = vst [vmem:[#allocation2 + $0x320] sm:$0xff] 0.0
          %408 = vst [vmem:[#allocation2 + $0x328] sm:$0xff] 0.0
          %409 = vst [vmem:[#allocation2 + $0x330] sm:$0xff] 0.0
          %410 = vst [vmem:[#allocation2 + $0x338] sm:$0xff] 0.0
          %411 = vst [vmem:[#allocation2 + $0x340] sm:$0xff] 0.0
          %412 = vst [vmem:[#allocation2 + $0x348] sm:$0xff] 0.0
          %413 = vst [vmem:[#allocation2 + $0x350] sm:$0xff] 0.0
          %414 = vst [vmem:[#allocation2 + $0x358] sm:$0xff] 0.0
          %415 = vst [vmem:[#allocation2 + $0x360] sm:$0xff] 0.0
          %416 = vst [vmem:[#allocation2 + $0x368] sm:$0xff] 0.0
          %417 = vst [vmem:[#allocation2 + $0x370] sm:$0xff] 0.0
          %418 = vst [vmem:[#allocation2 + $0x378] sm:$0xff] 0.0
          %419 = vst [vmem:[#allocation2 + $0x380] sm:$0xff] 0.0
          %420 = vst [vmem:[#allocation2 + $0x388] sm:$0xff] 0.0
          %421 = vst [vmem:[#allocation2 + $0x390] sm:$0xff] 0.0
          %422 = vst [vmem:[#allocation2 + $0x398] sm:$0xff] 0.0
          %423 = vst [vmem:[#allocation2 + $0x3a0] sm:$0xff] 0.0
          %424 = vst [vmem:[#allocation2 + $0x3a8] sm:$0xff] 0.0
          %425 = vst [vmem:[#allocation2 + $0x3b0] sm:$0xff] 0.0
          %426 = vst [vmem:[#allocation2 + $0x3b8] sm:$0xff] 0.0
          %427 = vst [vmem:[#allocation2 + $0x3c0] sm:$0xff] 0.0
          %428 = vst [vmem:[#allocation2 + $0x3c8] sm:$0xff] 0.0
          %429 = vst [vmem:[#allocation2 + $0x3d0] sm:$0xff] 0.0
          %430 = vst [vmem:[#allocation2 + $0x3d8] sm:$0xff] 0.0
          %431 = vst [vmem:[#allocation2 + $0x3e0] sm:$0xff] 0.0
          %432 = vst [vmem:[#allocation2 + $0x3e8] sm:$0xff] 0.0
          %433 = vst [vmem:[#allocation2 + $0x3f0] sm:$0xff] 0.0
          %434 = vst [vmem:[#allocation2 + $0x3f8] sm:$0xff] 0.0
        $region56: #{classification_model_forward.1} parent=39 // pred_fallthru
          _
        %v435 = vld [vmem:[%s296] sm:$0x7]
        %v436 = vld [vmem:[#allocation5] sm:$0xff]
        %v437 = vld [vmem:[#allocation5 + $0x8] sm:$0xff]
        %v438 = vld [vmem:[#allocation5 + $0x10] sm:$0xff]
        %v439 = vld [vmem:[#allocation5 + $0x18] sm:$0xff]
        %v440 = vld [vmem:[#allocation5 + $0x20] sm:$0xff]
        %v441 = vld [vmem:[#allocation5 + $0x28] sm:$0xff]
        %v442 = vld [vmem:[#allocation5 + $0x30] sm:$0xff]
        %v443 = vld [vmem:[#allocation5 + $0x38] sm:$0xff]
        %v444 = vld [vmem:[#allocation5 + $0x40] sm:$0xff]
        %v445 = vld [vmem:[#allocation5 + $0x48] sm:$0xff]
        %v446 = vld [vmem:[#allocation5 + $0x50] sm:$0xff]
        %v447 = vld [vmem:[#allocation5 + $0x58] sm:$0xff]
        %v448 = vld [vmem:[#allocation5 + $0x60] sm:$0xff]
        %v449 = vld [vmem:[#allocation5 + $0x68] sm:$0xff]
        %v450 = vld [vmem:[#allocation5 + $0x70] sm:$0xff]
        %v451 = vld [vmem:[#allocation5 + $0x78] sm:$0xff]
        %v452 = vld [vmem:[#allocation5 + $0x80] sm:$0xff]
        %v453 = vld [vmem:[#allocation5 + $0x88] sm:$0xff]
        %v454 = vld [vmem:[#allocation5 + $0x90] sm:$0xff]
        %v455 = vld [vmem:[#allocation5 + $0x98] sm:$0xff]
        %v456 = vld [vmem:[#allocation5 + $0xa0] sm:$0xff]
        %v457 = vld [vmem:[#allocation5 + $0xa8] sm:$0xff]
        %v458 = vld [vmem:[#allocation5 + $0xb0] sm:$0xff]
        %v459 = vld [vmem:[#allocation5 + $0xb8] sm:$0xff]
        %v460 = vld [vmem:[#allocation5 + $0xc0] sm:$0xff]
        %v461 = vld [vmem:[#allocation5 + $0xc8] sm:$0xff]
        %v462 = vld [vmem:[#allocation5 + $0xd0] sm:$0xff]
        %v463 = vld [vmem:[#allocation5 + $0xd8] sm:$0xff]
        %v464 = vld [vmem:[#allocation5 + $0xe0] sm:$0xff]
        %v465 = vld [vmem:[#allocation5 + $0xe8] sm:$0xff]
        %v466 = vld [vmem:[#allocation5 + $0xf0] sm:$0xff]
        %v467 = vld [vmem:[#allocation5 + $0xf8] sm:$0xff]
        %v468 = vld [vmem:[#allocation5 + $0x100] sm:$0xff]
        %v469 = vld [vmem:[#allocation5 + $0x108] sm:$0xff]
        %v470 = vld [vmem:[#allocation5 + $0x110] sm:$0xff]
        %v471 = vld [vmem:[#allocation5 + $0x118] sm:$0xff]
        %v472 = vld [vmem:[#allocation5 + $0x120] sm:$0xff]
        %v473 = vld [vmem:[#allocation5 + $0x128] sm:$0xff]
        %v474 = vld [vmem:[#allocation5 + $0x130] sm:$0xff]
        %v475 = vld [vmem:[#allocation5 + $0x138] sm:$0xff]
        %v476 = vld [vmem:[#allocation5 + $0x140] sm:$0xff]
        %v477 = vld [vmem:[#allocation5 + $0x148] sm:$0xff]
        %v478 = vld [vmem:[#allocation5 + $0x150] sm:$0xff]
        %v479 = vld [vmem:[#allocation5 + $0x158] sm:$0xff]
        %v480 = vld [vmem:[#allocation5 + $0x160] sm:$0xff]
        %v481 = vld [vmem:[#allocation5 + $0x168] sm:$0xff]
        %v482 = vld [vmem:[#allocation5 + $0x170] sm:$0xff]
        %v483 = vld [vmem:[#allocation5 + $0x178] sm:$0xff]
        %v484 = vld [vmem:[#allocation5 + $0x180] sm:$0xff]
        %v485 = vld [vmem:[#allocation5 + $0x188] sm:$0xff]
        %v486 = vld [vmem:[#allocation5 + $0x190] sm:$0xff]
        %v487 = vld [vmem:[#allocation5 + $0x198] sm:$0xff]
        %v488 = vld [vmem:[#allocation5 + $0x1a0] sm:$0xff]
        %v489 = vld [vmem:[#allocation5 + $0x1a8] sm:$0xff]
        %v490 = vld [vmem:[#allocation5 + $0x1b0] sm:$0xff]
        %v491 = vld [vmem:[#allocation5 + $0x1b8] sm:$0xff]
        %v492 = vld [vmem:[#allocation5 + $0x1c0] sm:$0xff]
        %v493 = vld [vmem:[#allocation5 + $0x1c8] sm:$0xff]
        %v494 = vld [vmem:[#allocation5 + $0x1d0] sm:$0xff]
        %v495 = vld [vmem:[#allocation5 + $0x1d8] sm:$0xff]
        %v496 = vld [vmem:[#allocation5 + $0x1e0] sm:$0xff]
        %v497 = vld [vmem:[#allocation5 + $0x1e8] sm:$0xff]
        %v498 = vld [vmem:[#allocation5 + $0x1f0] sm:$0xff]
        %v499 = vld [vmem:[#allocation5 + $0x1f8] sm:$0xff]
        %v500 = vld [vmem:[#allocation5 + $0x200] sm:$0xff]
        %v501 = vld [vmem:[#allocation5 + $0x208] sm:$0xff]
        %v502 = vld [vmem:[#allocation5 + $0x210] sm:$0xff]
        %v503 = vld [vmem:[#allocation5 + $0x218] sm:$0xff]
        %v504 = vld [vmem:[#allocation5 + $0x220] sm:$0xff]
        %v505 = vld [vmem:[#allocation5 + $0x228] sm:$0xff]
        %v506 = vld [vmem:[#allocation5 + $0x230] sm:$0xff]
        %v507 = vld [vmem:[#allocation5 + $0x238] sm:$0xff]
        %v508 = vld [vmem:[#allocation5 + $0x240] sm:$0xff]
        %v509 = vld [vmem:[#allocation5 + $0x248] sm:$0xff]
        %v510 = vld [vmem:[#allocation5 + $0x250] sm:$0xff]
        %v511 = vld [vmem:[#allocation5 + $0x258] sm:$0xff]
        %v512 = vld [vmem:[#allocation5 + $0x260] sm:$0xff]
        %v513 = vld [vmem:[#allocation5 + $0x268] sm:$0xff]
        %v514 = vld [vmem:[#allocation5 + $0x270] sm:$0xff]
        %v515 = vld [vmem:[#allocation5 + $0x278] sm:$0xff]
        %v516 = vld [vmem:[#allocation5 + $0x280] sm:$0xff]
        %v517 = vld [vmem:[#allocation5 + $0x288] sm:$0xff]
        %v518 = vld [vmem:[#allocation5 + $0x290] sm:$0xff]
        %v519 = vld [vmem:[#allocation5 + $0x298] sm:$0xff]
        %v520 = vld [vmem:[#allocation5 + $0x2a0] sm:$0xff]
        %v521 = vld [vmem:[#allocation5 + $0x2a8] sm:$0xff]
        %v522 = vld [vmem:[#allocation5 + $0x2b0] sm:$0xff]
        %v523 = vld [vmem:[#allocation5 + $0x2b8] sm:$0xff]
        %v524 = vld [vmem:[#allocation5 + $0x2c0] sm:$0xff]
        %v525 = vld [vmem:[#allocation5 + $0x2c8] sm:$0xff]
        %v526 = vld [vmem:[#allocation5 + $0x2d0] sm:$0xff]
        %v527 = vld [vmem:[#allocation5 + $0x2d8] sm:$0xff]
        %v528 = vld [vmem:[#allocation5 + $0x2e0] sm:$0xff]
        %v529 = vld [vmem:[#allocation5 + $0x2e8] sm:$0xff]
        %v530 = vld [vmem:[#allocation5 + $0x2f0] sm:$0xff]
        %v531 = vld [vmem:[#allocation5 + $0x2f8] sm:$0xff]
        %v532 = vld [vmem:[#allocation5 + $0x300] sm:$0xff]
        %v533 = vld [vmem:[#allocation5 + $0x308] sm:$0xff]
        %v534 = vld [vmem:[#allocation5 + $0x310] sm:$0xff]
        %v535 = vld [vmem:[#allocation5 + $0x318] sm:$0xff]
        %v536 = vld [vmem:[#allocation5 + $0x320] sm:$0xff]
        %v537 = vld [vmem:[#allocation5 + $0x328] sm:$0xff]
        %v538 = vld [vmem:[#allocation5 + $0x330] sm:$0xff]
        %v539 = vld [vmem:[#allocation5 + $0x338] sm:$0xff]
        %v540 = vld [vmem:[#allocation5 + $0x340] sm:$0xff]
        %v541 = vld [vmem:[#allocation5 + $0x348] sm:$0xff]
        %v542 = vld [vmem:[#allocation5 + $0x350] sm:$0xff]
        %v543 = vld [vmem:[#allocation5 + $0x358] sm:$0xff]
        %v544 = vld [vmem:[#allocation5 + $0x360] sm:$0xff]
        %v545 = vld [vmem:[#allocation5 + $0x368] sm:$0xff]
        %v546 = vld [vmem:[#allocation5 + $0x370] sm:$0xff]
        %v547 = vld [vmem:[#allocation5 + $0x378] sm:$0xff]
        %v548 = vld [vmem:[#allocation5 + $0x380] sm:$0xff]
        %v549 = vld [vmem:[#allocation5 + $0x388] sm:$0xff]
        %v550 = vld [vmem:[#allocation5 + $0x390] sm:$0xff]
        %v551 = vld [vmem:[#allocation5 + $0x398] sm:$0xff]
        %v552 = vld [vmem:[#allocation5 + $0x3a0] sm:$0xff]
        %v553 = vld [vmem:[#allocation5 + $0x3a8] sm:$0xff]
        %v554 = vld [vmem:[#allocation5 + $0x3b0] sm:$0xff]
        %v555 = vld [vmem:[#allocation5 + $0x3b8] sm:$0xff]
        %v556 = vld [vmem:[#allocation5 + $0x3c0] sm:$0xff]
        %v557 = vld [vmem:[#allocation5 + $0x3c8] sm:$0xff]
        %v558 = vld [vmem:[#allocation5 + $0x3d0] sm:$0xff]
        %v559 = vld [vmem:[#allocation5 + $0x3d8] sm:$0xff]
        %v560 = vld [vmem:[#allocation5 + $0x3e0] sm:$0xff]
        %v561 = vld [vmem:[#allocation5 + $0x3e8] sm:$0xff]
        %v562 = vld [vmem:[#allocation5 + $0x3f0] sm:$0xff]
        %v563 = vld [vmem:[#allocation5 + $0x3f8] sm:$0xff]
        %v564 = vld [vmem:[#allocation3] sm:$0xff]
        %v565 = vld [vmem:[#allocation3 + $0x8] sm:$0xff]
        %v566 = vld [vmem:[#allocation3 + $0x10] sm:$0xff]
        %v567 = vld [vmem:[#allocation3 + $0x18] sm:$0xff]
        %v568 = vld [vmem:[#allocation3 + $0x20] sm:$0xff]
        %v569 = vld [vmem:[#allocation3 + $0x28] sm:$0xff]
        %v570 = vld [vmem:[#allocation3 + $0x30] sm:$0xff]
        %v571 = vld [vmem:[#allocation3 + $0x38] sm:$0xff]
        %v572 = vld [vmem:[#allocation3 + $0x40] sm:$0xff]
        %v573 = vld [vmem:[#allocation3 + $0x48] sm:$0xff]
        %v574 = vld [vmem:[#allocation3 + $0x50] sm:$0xff]
        %v575 = vld [vmem:[#allocation3 + $0x58] sm:$0xff]
        %v576 = vld [vmem:[#allocation3 + $0x60] sm:$0xff]
        %v577 = vld [vmem:[#allocation3 + $0x68] sm:$0xff]
        %v578 = vld [vmem:[#allocation3 + $0x70] sm:$0xff]
        %v579 = vld [vmem:[#allocation3 + $0x78] sm:$0xff]
        %v580 = vld [vmem:[#allocation3 + $0x80] sm:$0xff]
        %v581 = vld [vmem:[#allocation3 + $0x88] sm:$0xff]
        %v582 = vld [vmem:[#allocation3 + $0x90] sm:$0xff]
        %v583 = vld [vmem:[#allocation3 + $0x98] sm:$0xff]
        %v584 = vld [vmem:[#allocation3 + $0xa0] sm:$0xff]
        %v585 = vld [vmem:[#allocation3 + $0xa8] sm:$0xff]
        %v586 = vld [vmem:[#allocation3 + $0xb0] sm:$0xff]
        %v587 = vld [vmem:[#allocation3 + $0xb8] sm:$0xff]
        %v588 = vld [vmem:[#allocation3 + $0xc0] sm:$0xff]
        %v589 = vld [vmem:[#allocation3 + $0xc8] sm:$0xff]
        %v590 = vld [vmem:[#allocation3 + $0xd0] sm:$0xff]
        %v591 = vld [vmem:[#allocation3 + $0xd8] sm:$0xff]
        %v592 = vld [vmem:[#allocation3 + $0xe0] sm:$0xff]
        %v593 = vld [vmem:[#allocation3 + $0xe8] sm:$0xff]
        %v594 = vld [vmem:[#allocation3 + $0xf0] sm:$0xff]
        %v595 = vld [vmem:[#allocation3 + $0xf8] sm:$0xff]
        %v596 = vld [vmem:[#allocation3 + $0x100] sm:$0xff]
        %v597 = vld [vmem:[#allocation3 + $0x108] sm:$0xff]
        %v598 = vld [vmem:[#allocation3 + $0x110] sm:$0xff]
        %v599 = vld [vmem:[#allocation3 + $0x118] sm:$0xff]
        %v600 = vld [vmem:[#allocation3 + $0x120] sm:$0xff]
        %v601 = vld [vmem:[#allocation3 + $0x128] sm:$0xff]
        %v602 = vld [vmem:[#allocation3 + $0x130] sm:$0xff]
        %v603 = vld [vmem:[#allocation3 + $0x138] sm:$0xff]
        %v604 = vld [vmem:[#allocation3 + $0x140] sm:$0xff]
        %v605 = vld [vmem:[#allocation3 + $0x148] sm:$0xff]
        %v606 = vld [vmem:[#allocation3 + $0x150] sm:$0xff]
        %v607 = vld [vmem:[#allocation3 + $0x158] sm:$0xff]
        %v608 = vld [vmem:[#allocation3 + $0x160] sm:$0xff]
        %v609 = vld [vmem:[#allocation3 + $0x168] sm:$0xff]
        %v610 = vld [vmem:[#allocation3 + $0x170] sm:$0xff]
        %v611 = vld [vmem:[#allocation3 + $0x178] sm:$0xff]
        %v612 = vld [vmem:[#allocation3 + $0x180] sm:$0xff]
        %v613 = vld [vmem:[#allocation3 + $0x188] sm:$0xff]
        %v614 = vld [vmem:[#allocation3 + $0x190] sm:$0xff]
        %v615 = vld [vmem:[#allocation3 + $0x198] sm:$0xff]
        %v616 = vld [vmem:[#allocation3 + $0x1a0] sm:$0xff]
        %v617 = vld [vmem:[#allocation3 + $0x1a8] sm:$0xff]
        %v618 = vld [vmem:[#allocation3 + $0x1b0] sm:$0xff]
        %v619 = vld [vmem:[#allocation3 + $0x1b8] sm:$0xff]
        %v620 = vld [vmem:[#allocation3 + $0x1c0] sm:$0xff]
        %v621 = vld [vmem:[#allocation3 + $0x1c8] sm:$0xff]
        %v622 = vld [vmem:[#allocation3 + $0x1d0] sm:$0xff]
        %v623 = vld [vmem:[#allocation3 + $0x1d8] sm:$0xff]
        %v624 = vld [vmem:[#allocation3 + $0x1e0] sm:$0xff]
        %v625 = vld [vmem:[#allocation3 + $0x1e8] sm:$0xff]
        %v626 = vld [vmem:[#allocation3 + $0x1f0] sm:$0xff]
        %v627 = vld [vmem:[#allocation3 + $0x1f8] sm:$0xff]
        %v628 = vld [vmem:[#allocation3 + $0x200] sm:$0xff]
        %v629 = vld [vmem:[#allocation3 + $0x208] sm:$0xff]
        %v630 = vld [vmem:[#allocation3 + $0x210] sm:$0xff]
        %v631 = vld [vmem:[#allocation3 + $0x218] sm:$0xff]
        %v632 = vld [vmem:[#allocation3 + $0x220] sm:$0xff]
        %v633 = vld [vmem:[#allocation3 + $0x228] sm:$0xff]
        %v634 = vld [vmem:[#allocation3 + $0x230] sm:$0xff]
        %v635 = vld [vmem:[#allocation3 + $0x238] sm:$0xff]
        %v636 = vld [vmem:[#allocation3 + $0x240] sm:$0xff]
        %v637 = vld [vmem:[#allocation3 + $0x248] sm:$0xff]
        %v638 = vld [vmem:[#allocation3 + $0x250] sm:$0xff]
        %v639 = vld [vmem:[#allocation3 + $0x258] sm:$0xff]
        %v640 = vld [vmem:[#allocation3 + $0x260] sm:$0xff]
        %v641 = vld [vmem:[#allocation3 + $0x268] sm:$0xff]
        %v642 = vld [vmem:[#allocation3 + $0x270] sm:$0xff]
        %v643 = vld [vmem:[#allocation3 + $0x278] sm:$0xff]
        %v644 = vld [vmem:[#allocation3 + $0x280] sm:$0xff]
        %v645 = vld [vmem:[#allocation3 + $0x288] sm:$0xff]
        %v646 = vld [vmem:[#allocation3 + $0x290] sm:$0xff]
        %v647 = vld [vmem:[#allocation3 + $0x298] sm:$0xff]
        %v648 = vld [vmem:[#allocation3 + $0x2a0] sm:$0xff]
        %v649 = vld [vmem:[#allocation3 + $0x2a8] sm:$0xff]
        %v650 = vld [vmem:[#allocation3 + $0x2b0] sm:$0xff]
        %v651 = vld [vmem:[#allocation3 + $0x2b8] sm:$0xff]
        %v652 = vld [vmem:[#allocation3 + $0x2c0] sm:$0xff]
        %v653 = vld [vmem:[#allocation3 + $0x2c8] sm:$0xff]
        %v654 = vld [vmem:[#allocation3 + $0x2d0] sm:$0xff]
        %v655 = vld [vmem:[#allocation3 + $0x2d8] sm:$0xff]
        %v656 = vld [vmem:[#allocation3 + $0x2e0] sm:$0xff]
        %v657 = vld [vmem:[#allocation3 + $0x2e8] sm:$0xff]
        %v658 = vld [vmem:[#allocation3 + $0x2f0] sm:$0xff]
        %v659 = vld [vmem:[#allocation3 + $0x2f8] sm:$0xff]
        %v660 = vld [vmem:[#allocation3 + $0x300] sm:$0xff]
        %v661 = vld [vmem:[#allocation3 + $0x308] sm:$0xff]
        %v662 = vld [vmem:[#allocation3 + $0x310] sm:$0xff]
        %v663 = vld [vmem:[#allocation3 + $0x318] sm:$0xff]
        %v664 = vld [vmem:[#allocation3 + $0x320] sm:$0xff]
        %v665 = vld [vmem:[#allocation3 + $0x328] sm:$0xff]
        %v666 = vld [vmem:[#allocation3 + $0x330] sm:$0xff]
        %v667 = vld [vmem:[#allocation3 + $0x338] sm:$0xff]
        %v668 = vld [vmem:[#allocation3 + $0x340] sm:$0xff]
        %v669 = vld [vmem:[#allocation3 + $0x348] sm:$0xff]
        %v670 = vld [vmem:[#allocation3 + $0x350] sm:$0xff]
        %v671 = vld [vmem:[#allocation3 + $0x358] sm:$0xff]
        %v672 = vld [vmem:[#allocation3 + $0x360] sm:$0xff]
        %v673 = vld [vmem:[#allocation3 + $0x368] sm:$0xff]
        %v674 = vld [vmem:[#allocation3 + $0x370] sm:$0xff]
        %v675 = vld [vmem:[#allocation3 + $0x378] sm:$0xff]
        %v676 = vld [vmem:[#allocation3 + $0x380] sm:$0xff]
        %v677 = vld [vmem:[#allocation3 + $0x388] sm:$0xff]
        %v678 = vld [vmem:[#allocation3 + $0x390] sm:$0xff]
        %v679 = vld [vmem:[#allocation3 + $0x398] sm:$0xff]
        %v680 = vld [vmem:[#allocation3 + $0x3a0] sm:$0xff]
        %v681 = vld [vmem:[#allocation3 + $0x3a8] sm:$0xff]
        %v682 = vld [vmem:[#allocation3 + $0x3b0] sm:$0xff]
        %v683 = vld [vmem:[#allocation3 + $0x3b8] sm:$0xff]
        %v684 = vld [vmem:[#allocation3 + $0x3c0] sm:$0xff]
        %v685 = vld [vmem:[#allocation3 + $0x3c8] sm:$0xff]
        %v686 = vld [vmem:[#allocation3 + $0x3d0] sm:$0xff]
        %v687 = vld [vmem:[#allocation3 + $0x3d8] sm:$0xff]
        %v688 = vld [vmem:[#allocation3 + $0x3e0] sm:$0xff]
        %v689 = vld [vmem:[#allocation3 + $0x3e8] sm:$0xff]
        %v690 = vld [vmem:[#allocation3 + $0x3f0] sm:$0xff]
        %v691 = vld [vmem:[#allocation3 + $0x3f8] sm:$0xff]
        %v692 = vperm.slane %v435, 0
        %v693 = vmul.f32 %v564, %v692
        %v694 = vmul.f32 %v565, %v692
        %v695 = vmul.f32 %v566, %v692
        %v696 = vmul.f32 %v567, %v692
        %v697 = vmul.f32 %v568, %v692
        %v698 = vmul.f32 %v569, %v692
        %v699 = vmul.f32 %v570, %v692
        %v700 = vmul.f32 %v571, %v692
        %v701 = vmul.f32 %v572, %v692
        %v702 = vmul.f32 %v573, %v692
        %v703 = vmul.f32 %v574, %v692
        %v704 = vmul.f32 %v575, %v692
        %v705 = vmul.f32 %v576, %v692
        %v706 = vmul.f32 %v577, %v692
        %v707 = vmul.f32 %v578, %v692
        %v708 = vmul.f32 %v579, %v692
        %v709 = vmul.f32 %v580, %v692
        %v710 = vmul.f32 %v581, %v692
        %v711 = vmul.f32 %v582, %v692
        %v712 = vmul.f32 %v583, %v692
        %v713 = vmul.f32 %v584, %v692
        %v714 = vmul.f32 %v585, %v692
        %v715 = vmul.f32 %v586, %v692
        %v716 = vmul.f32 %v587, %v692
        %v717 = vmul.f32 %v588, %v692
        %v718 = vmul.f32 %v589, %v692
        %v719 = vmul.f32 %v590, %v692
        %v720 = vmul.f32 %v591, %v692
        %v721 = vmul.f32 %v592, %v692
        %v722 = vmul.f32 %v593, %v692
        %v723 = vmul.f32 %v594, %v692
        %v724 = vmul.f32 %v595, %v692
        %v725 = vmul.f32 %v596, %v692
        %v726 = vmul.f32 %v597, %v692
        %v727 = vmul.f32 %v598, %v692
        %v728 = vmul.f32 %v599, %v692
        %v729 = vmul.f32 %v600, %v692
        %v730 = vmul.f32 %v601, %v692
        %v731 = vmul.f32 %v602, %v692
        %v732 = vmul.f32 %v603, %v692
        %v733 = vmul.f32 %v604, %v692
        %v734 = vmul.f32 %v605, %v692
        %v735 = vmul.f32 %v606, %v692
        %v736 = vmul.f32 %v607, %v692
        %v737 = vmul.f32 %v608, %v692
        %v738 = vmul.f32 %v609, %v692
        %v739 = vmul.f32 %v610, %v692
        %v740 = vmul.f32 %v611, %v692
        %v741 = vmul.f32 %v612, %v692
        %v742 = vmul.f32 %v613, %v692
        %v743 = vmul.f32 %v614, %v692
        %v744 = vmul.f32 %v615, %v692
        %v745 = vmul.f32 %v616, %v692
        %v746 = vmul.f32 %v617, %v692
        %v747 = vmul.f32 %v618, %v692
        %v748 = vmul.f32 %v619, %v692
        %v749 = vmul.f32 %v620, %v692
        %v750 = vmul.f32 %v621, %v692
        %v751 = vmul.f32 %v622, %v692
        %v752 = vmul.f32 %v623, %v692
        %v753 = vmul.f32 %v624, %v692
        %v754 = vmul.f32 %v625, %v692
        %v755 = vmul.f32 %v626, %v692
        %v756 = vmul.f32 %v627, %v692
        %v757 = vmul.f32 %v628, %v692
        %v758 = vmul.f32 %v629, %v692
        %v759 = vmul.f32 %v630, %v692
        %v760 = vmul.f32 %v631, %v692
        %v761 = vmul.f32 %v632, %v692
        %v762 = vmul.f32 %v633, %v692
        %v763 = vmul.f32 %v634, %v692
        %v764 = vmul.f32 %v635, %v692
        %v765 = vmul.f32 %v636, %v692
        %v766 = vmul.f32 %v637, %v692
        %v767 = vmul.f32 %v638, %v692
        %v768 = vmul.f32 %v639, %v692
        %v769 = vmul.f32 %v640, %v692
        %v770 = vmul.f32 %v641, %v692
        %v771 = vmul.f32 %v642, %v692
        %v772 = vmul.f32 %v643, %v692
        %v773 = vmul.f32 %v644, %v692
        %v774 = vmul.f32 %v645, %v692
        %v775 = vmul.f32 %v646, %v692
        %v776 = vmul.f32 %v647, %v692
        %v777 = vmul.f32 %v648, %v692
        %v778 = vmul.f32 %v649, %v692
        %v779 = vmul.f32 %v650, %v692
        %v780 = vmul.f32 %v651, %v692
        %v781 = vmul.f32 %v652, %v692
        %v782 = vmul.f32 %v653, %v692
        %v783 = vmul.f32 %v654, %v692
        %v784 = vmul.f32 %v655, %v692
        %v785 = vmul.f32 %v656, %v692
        %v786 = vmul.f32 %v657, %v692
        %v787 = vmul.f32 %v658, %v692
        %v788 = vmul.f32 %v659, %v692
        %v789 = vmul.f32 %v660, %v692
        %v790 = vmul.f32 %v661, %v692
        %v791 = vmul.f32 %v662, %v692
        %v792 = vmul.f32 %v663, %v692
        %v793 = vmul.f32 %v664, %v692
        %v794 = vmul.f32 %v665, %v692
        %v795 = vmul.f32 %v666, %v692
        %v796 = vmul.f32 %v667, %v692
        %v797 = vmul.f32 %v668, %v692
        %v798 = vmul.f32 %v669, %v692
        %v799 = vmul.f32 %v670, %v692
        %v800 = vmul.f32 %v671, %v692
        %v801 = vmul.f32 %v672, %v692
        %v802 = vmul.f32 %v673, %v692
        %v803 = vmul.f32 %v674, %v692
        %v804 = vmul.f32 %v675, %v692
        %v805 = vmul.f32 %v676, %v692
        %v806 = vmul.f32 %v677, %v692
        %v807 = vmul.f32 %v678, %v692
        %v808 = vmul.f32 %v679, %v692
        %v809 = vmul.f32 %v680, %v692
        %v810 = vmul.f32 %v681, %v692
        %v811 = vmul.f32 %v682, %v692
        %v812 = vmul.f32 %v683, %v692
        %v813 = vmul.f32 %v684, %v692
        %v814 = vmul.f32 %v685, %v692
        %v815 = vmul.f32 %v686, %v692
        %v816 = vmul.f32 %v687, %v692
        %v817 = vmul.f32 %v688, %v692
        %v818 = vmul.f32 %v689, %v692
        %v819 = vmul.f32 %v690, %v692
        %v820 = vmul.f32 %v691, %v692
        %v821 = vadd.f32 %v436, %v693
        %v822 = vadd.f32 %v437, %v694
        %v823 = vadd.f32 %v438, %v695
        %v824 = vadd.f32 %v439, %v696
        %v825 = vadd.f32 %v440, %v697
        %v826 = vadd.f32 %v441, %v698
        %v827 = vadd.f32 %v442, %v699
        %v828 = vadd.f32 %v443, %v700
        %v829 = vadd.f32 %v444, %v701
        %v830 = vadd.f32 %v445, %v702
        %v831 = vadd.f32 %v446, %v703
        %v832 = vadd.f32 %v447, %v704
        %v833 = vadd.f32 %v448, %v705
        %v834 = vadd.f32 %v449, %v706
        %v835 = vadd.f32 %v450, %v707
        %v836 = vadd.f32 %v451, %v708
        %v837 = vadd.f32 %v452, %v709
        %v838 = vadd.f32 %v453, %v710
        %v839 = vadd.f32 %v454, %v711
        %v840 = vadd.f32 %v455, %v712
        %v841 = vadd.f32 %v456, %v713
        %v842 = vadd.f32 %v457, %v714
        %v843 = vadd.f32 %v458, %v715
        %v844 = vadd.f32 %v459, %v716
        %v845 = vadd.f32 %v460, %v717
        %v846 = vadd.f32 %v461, %v718
        %v847 = vadd.f32 %v462, %v719
        %v848 = vadd.f32 %v463, %v720
        %v849 = vadd.f32 %v464, %v721
        %v850 = vadd.f32 %v465, %v722
        %v851 = vadd.f32 %v466, %v723
        %v852 = vadd.f32 %v467, %v724
        %v853 = vadd.f32 %v468, %v725
        %v854 = vadd.f32 %v469, %v726
        %v855 = vadd.f32 %v470, %v727
        %v856 = vadd.f32 %v471, %v728
        %v857 = vadd.f32 %v472, %v729
        %v858 = vadd.f32 %v473, %v730
        %v859 = vadd.f32 %v474, %v731
        %v860 = vadd.f32 %v475, %v732
        %v861 = vadd.f32 %v476, %v733
        %v862 = vadd.f32 %v477, %v734
        %v863 = vadd.f32 %v478, %v735
        %v864 = vadd.f32 %v479, %v736
        %v865 = vadd.f32 %v480, %v737
        %v866 = vadd.f32 %v481, %v738
        %v867 = vadd.f32 %v482, %v739
        %v868 = vadd.f32 %v483, %v740
        %v869 = vadd.f32 %v484, %v741
        %v870 = vadd.f32 %v485, %v742
        %v871 = vadd.f32 %v486, %v743
        %v872 = vadd.f32 %v487, %v744
        %v873 = vadd.f32 %v488, %v745
        %v874 = vadd.f32 %v489, %v746
        %v875 = vadd.f32 %v490, %v747
        %v876 = vadd.f32 %v491, %v748
        %v877 = vadd.f32 %v492, %v749
        %v878 = vadd.f32 %v493, %v750
        %v879 = vadd.f32 %v494, %v751
        %v880 = vadd.f32 %v495, %v752
        %v881 = vadd.f32 %v496, %v753
        %v882 = vadd.f32 %v497, %v754
        %v883 = vadd.f32 %v498, %v755
        %v884 = vadd.f32 %v499, %v756
        %v885 = vadd.f32 %v500, %v757
        %v886 = vadd.f32 %v501, %v758
        %v887 = vadd.f32 %v502, %v759
        %v888 = vadd.f32 %v503, %v760
        %v889 = vadd.f32 %v504, %v761
        %v890 = vadd.f32 %v505, %v762
        %v891 = vadd.f32 %v506, %v763
        %v892 = vadd.f32 %v507, %v764
        %v893 = vadd.f32 %v508, %v765
        %v894 = vadd.f32 %v509, %v766
        %v895 = vadd.f32 %v510, %v767
        %v896 = vadd.f32 %v511, %v768
        %v897 = vadd.f32 %v512, %v769
        %v898 = vadd.f32 %v513, %v770
        %v899 = vadd.f32 %v514, %v771
        %v900 = vadd.f32 %v515, %v772
        %v901 = vadd.f32 %v516, %v773
        %v902 = vadd.f32 %v517, %v774
        %v903 = vadd.f32 %v518, %v775
        %v904 = vadd.f32 %v519, %v776
        %v905 = vadd.f32 %v520, %v777
        %v906 = vadd.f32 %v521, %v778
        %v907 = vadd.f32 %v522, %v779
        %v908 = vadd.f32 %v523, %v780
        %v909 = vadd.f32 %v524, %v781
        %v910 = vadd.f32 %v525, %v782
        %v911 = vadd.f32 %v526, %v783
        %v912 = vadd.f32 %v527, %v784
        %v913 = vadd.f32 %v528, %v785
        %v914 = vadd.f32 %v529, %v786
        %v915 = vadd.f32 %v530, %v787
        %v916 = vadd.f32 %v531, %v788
        %v917 = vadd.f32 %v532, %v789
        %v918 = vadd.f32 %v533, %v790
        %v919 = vadd.f32 %v534, %v791
        %v920 = vadd.f32 %v535, %v792
        %v921 = vadd.f32 %v536, %v793
        %v922 = vadd.f32 %v537, %v794
        %v923 = vadd.f32 %v538, %v795
        %v924 = vadd.f32 %v539, %v796
        %v925 = vadd.f32 %v540, %v797
        %v926 = vadd.f32 %v541, %v798
        %v927 = vadd.f32 %v542, %v799
        %v928 = vadd.f32 %v543, %v800
        %v929 = vadd.f32 %v544, %v801
        %v930 = vadd.f32 %v545, %v802
        %v931 = vadd.f32 %v546, %v803
        %v932 = vadd.f32 %v547, %v804
        %v933 = vadd.f32 %v548, %v805
        %v934 = vadd.f32 %v549, %v806
        %v935 = vadd.f32 %v550, %v807
        %v936 = vadd.f32 %v551, %v808
        %v937 = vadd.f32 %v552, %v809
        %v938 = vadd.f32 %v553, %v810
        %v939 = vadd.f32 %v554, %v811
        %v940 = vadd.f32 %v555, %v812
        %v941 = vadd.f32 %v556, %v813
        %v942 = vadd.f32 %v557, %v814
        %v943 = vadd.f32 %v558, %v815
        %v944 = vadd.f32 %v559, %v816
        %v945 = vadd.f32 %v560, %v817
        %v946 = vadd.f32 %v561, %v818
        %v947 = vadd.f32 %v562, %v819
        %v948 = vadd.f32 %v563, %v820
        %s949 = scalar_lea.vmem [#allocation3], 1024
        %v950 = vld [vmem:[%s949] sm:$0xff]
        %v951 = vld [vmem:[%s949 + $0x8] sm:$0xff]
        %v952 = vld [vmem:[%s949 + $0x10] sm:$0xff]
        %v953 = vld [vmem:[%s949 + $0x18] sm:$0xff]
        %v954 = vld [vmem:[%s949 + $0x20] sm:$0xff]
        %v955 = vld [vmem:[%s949 + $0x28] sm:$0xff]
        %v956 = vld [vmem:[%s949 + $0x30] sm:$0xff]
        %v957 = vld [vmem:[%s949 + $0x38] sm:$0xff]
        %v958 = vld [vmem:[%s949 + $0x40] sm:$0xff]
        %v959 = vld [vmem:[%s949 + $0x48] sm:$0xff]
        %v960 = vld [vmem:[%s949 + $0x50] sm:$0xff]
        %v961 = vld [vmem:[%s949 + $0x58] sm:$0xff]
        %v962 = vld [vmem:[%s949 + $0x60] sm:$0xff]
        %v963 = vld [vmem:[%s949 + $0x68] sm:$0xff]
        %v964 = vld [vmem:[%s949 + $0x70] sm:$0xff]
        %v965 = vld [vmem:[%s949 + $0x78] sm:$0xff]
        %v966 = vld [vmem:[%s949 + $0x80] sm:$0xff]
        %v967 = vld [vmem:[%s949 + $0x88] sm:$0xff]
        %v968 = vld [vmem:[%s949 + $0x90] sm:$0xff]
        %v969 = vld [vmem:[%s949 + $0x98] sm:$0xff]
        %v970 = vld [vmem:[%s949 + $0xa0] sm:$0xff]
        %v971 = vld [vmem:[%s949 + $0xa8] sm:$0xff]
        %v972 = vld [vmem:[%s949 + $0xb0] sm:$0xff]
        %v973 = vld [vmem:[%s949 + $0xb8] sm:$0xff]
        %v974 = vld [vmem:[%s949 + $0xc0] sm:$0xff]
        %v975 = vld [vmem:[%s949 + $0xc8] sm:$0xff]
        %v976 = vld [vmem:[%s949 + $0xd0] sm:$0xff]
        %v977 = vld [vmem:[%s949 + $0xd8] sm:$0xff]
        %v978 = vld [vmem:[%s949 + $0xe0] sm:$0xff]
        %v979 = vld [vmem:[%s949 + $0xe8] sm:$0xff]
        %v980 = vld [vmem:[%s949 + $0xf0] sm:$0xff]
        %v981 = vld [vmem:[%s949 + $0xf8] sm:$0xff]
        %v982 = vld [vmem:[%s949 + $0x100] sm:$0xff]
        %v983 = vld [vmem:[%s949 + $0x108] sm:$0xff]
        %v984 = vld [vmem:[%s949 + $0x110] sm:$0xff]
        %v985 = vld [vmem:[%s949 + $0x118] sm:$0xff]
        %v986 = vld [vmem:[%s949 + $0x120] sm:$0xff]
        %v987 = vld [vmem:[%s949 + $0x128] sm:$0xff]
        %v988 = vld [vmem:[%s949 + $0x130] sm:$0xff]
        %v989 = vld [vmem:[%s949 + $0x138] sm:$0xff]
        %v990 = vld [vmem:[%s949 + $0x140] sm:$0xff]
        %v991 = vld [vmem:[%s949 + $0x148] sm:$0xff]
        %v992 = vld [vmem:[%s949 + $0x150] sm:$0xff]
        %v993 = vld [vmem:[%s949 + $0x158] sm:$0xff]
        %v994 = vld [vmem:[%s949 + $0x160] sm:$0xff]
        %v995 = vld [vmem:[%s949 + $0x168] sm:$0xff]
        %v996 = vld [vmem:[%s949 + $0x170] sm:$0xff]
        %v997 = vld [vmem:[%s949 + $0x178] sm:$0xff]
        %v998 = vld [vmem:[%s949 + $0x180] sm:$0xff]
        %v999 = vld [vmem:[%s949 + $0x188] sm:$0xff]
        %v1000 = vld [vmem:[%s949 + $0x190] sm:$0xff]
        %v1001 = vld [vmem:[%s949 + $0x198] sm:$0xff]
        %v1002 = vld [vmem:[%s949 + $0x1a0] sm:$0xff]
        %v1003 = vld [vmem:[%s949 + $0x1a8] sm:$0xff]
        %v1004 = vld [vmem:[%s949 + $0x1b0] sm:$0xff]
        %v1005 = vld [vmem:[%s949 + $0x1b8] sm:$0xff]
        %v1006 = vld [vmem:[%s949 + $0x1c0] sm:$0xff]
        %v1007 = vld [vmem:[%s949 + $0x1c8] sm:$0xff]
        %v1008 = vld [vmem:[%s949 + $0x1d0] sm:$0xff]
        %v1009 = vld [vmem:[%s949 + $0x1d8] sm:$0xff]
        %v1010 = vld [vmem:[%s949 + $0x1e0] sm:$0xff]
        %v1011 = vld [vmem:[%s949 + $0x1e8] sm:$0xff]
        %v1012 = vld [vmem:[%s949 + $0x1f0] sm:$0xff]
        %v1013 = vld [vmem:[%s949 + $0x1f8] sm:$0xff]
        %v1014 = vld [vmem:[%s949 + $0x200] sm:$0xff]
        %v1015 = vld [vmem:[%s949 + $0x208] sm:$0xff]
        %v1016 = vld [vmem:[%s949 + $0x210] sm:$0xff]
        %v1017 = vld [vmem:[%s949 + $0x218] sm:$0xff]
        %v1018 = vld [vmem:[%s949 + $0x220] sm:$0xff]
        %v1019 = vld [vmem:[%s949 + $0x228] sm:$0xff]
        %v1020 = vld [vmem:[%s949 + $0x230] sm:$0xff]
        %v1021 = vld [vmem:[%s949 + $0x238] sm:$0xff]
        %v1022 = vld [vmem:[%s949 + $0x240] sm:$0xff]
        %v1023 = vld [vmem:[%s949 + $0x248] sm:$0xff]
        %v1024 = vld [vmem:[%s949 + $0x250] sm:$0xff]
        %v1025 = vld [vmem:[%s949 + $0x258] sm:$0xff]
        %v1026 = vld [vmem:[%s949 + $0x260] sm:$0xff]
        %v1027 = vld [vmem:[%s949 + $0x268] sm:$0xff]
        %v1028 = vld [vmem:[%s949 + $0x270] sm:$0xff]
        %v1029 = vld [vmem:[%s949 + $0x278] sm:$0xff]
        %v1030 = vld [vmem:[%s949 + $0x280] sm:$0xff]
        %v1031 = vld [vmem:[%s949 + $0x288] sm:$0xff]
        %v1032 = vld [vmem:[%s949 + $0x290] sm:$0xff]
        %v1033 = vld [vmem:[%s949 + $0x298] sm:$0xff]
        %v1034 = vld [vmem:[%s949 + $0x2a0] sm:$0xff]
        %v1035 = vld [vmem:[%s949 + $0x2a8] sm:$0xff]
        %v1036 = vld [vmem:[%s949 + $0x2b0] sm:$0xff]
        %v1037 = vld [vmem:[%s949 + $0x2b8] sm:$0xff]
        %v1038 = vld [vmem:[%s949 + $0x2c0] sm:$0xff]
        %v1039 = vld [vmem:[%s949 + $0x2c8] sm:$0xff]
        %v1040 = vld [vmem:[%s949 + $0x2d0] sm:$0xff]
        %v1041 = vld [vmem:[%s949 + $0x2d8] sm:$0xff]
        %v1042 = vld [vmem:[%s949 + $0x2e0] sm:$0xff]
        %v1043 = vld [vmem:[%s949 + $0x2e8] sm:$0xff]
        %v1044 = vld [vmem:[%s949 + $0x2f0] sm:$0xff]
        %v1045 = vld [vmem:[%s949 + $0x2f8] sm:$0xff]
        %v1046 = vld [vmem:[%s949 + $0x300] sm:$0xff]
        %v1047 = vld [vmem:[%s949 + $0x308] sm:$0xff]
        %v1048 = vld [vmem:[%s949 + $0x310] sm:$0xff]
        %v1049 = vld [vmem:[%s949 + $0x318] sm:$0xff]
        %v1050 = vld [vmem:[%s949 + $0x320] sm:$0xff]
        %v1051 = vld [vmem:[%s949 + $0x328] sm:$0xff]
        %v1052 = vld [vmem:[%s949 + $0x330] sm:$0xff]
        %v1053 = vld [vmem:[%s949 + $0x338] sm:$0xff]
        %v1054 = vld [vmem:[%s949 + $0x340] sm:$0xff]
        %v1055 = vld [vmem:[%s949 + $0x348] sm:$0xff]
        %v1056 = vld [vmem:[%s949 + $0x350] sm:$0xff]
        %v1057 = vld [vmem:[%s949 + $0x358] sm:$0xff]
        %v1058 = vld [vmem:[%s949 + $0x360] sm:$0xff]
        %v1059 = vld [vmem:[%s949 + $0x368] sm:$0xff]
        %v1060 = vld [vmem:[%s949 + $0x370] sm:$0xff]
        %v1061 = vld [vmem:[%s949 + $0x378] sm:$0xff]
        %v1062 = vld [vmem:[%s949 + $0x380] sm:$0xff]
        %v1063 = vld [vmem:[%s949 + $0x388] sm:$0xff]
        %v1064 = vld [vmem:[%s949 + $0x390] sm:$0xff]
        %v1065 = vld [vmem:[%s949 + $0x398] sm:$0xff]
        %v1066 = vld [vmem:[%s949 + $0x3a0] sm:$0xff]
        %v1067 = vld [vmem:[%s949 + $0x3a8] sm:$0xff]
        %v1068 = vld [vmem:[%s949 + $0x3b0] sm:$0xff]
        %v1069 = vld [vmem:[%s949 + $0x3b8] sm:$0xff]
        %v1070 = vld [vmem:[%s949 + $0x3c0] sm:$0xff]
        %v1071 = vld [vmem:[%s949 + $0x3c8] sm:$0xff]
        %v1072 = vld [vmem:[%s949 + $0x3d0] sm:$0xff]
        %v1073 = vld [vmem:[%s949 + $0x3d8] sm:$0xff]
        %v1074 = vld [vmem:[%s949 + $0x3e0] sm:$0xff]
        %v1075 = vld [vmem:[%s949 + $0x3e8] sm:$0xff]
        %v1076 = vld [vmem:[%s949 + $0x3f0] sm:$0xff]
        %v1077 = vld [vmem:[%s949 + $0x3f8] sm:$0xff]
        %v1078 = vperm.slane %v435, 1
        %v1079 = vmul.f32 %v950, %v1078
        %v1080 = vmul.f32 %v951, %v1078
        %v1081 = vmul.f32 %v952, %v1078
        %v1082 = vmul.f32 %v953, %v1078
        %v1083 = vmul.f32 %v954, %v1078
        %v1084 = vmul.f32 %v955, %v1078
        %v1085 = vmul.f32 %v956, %v1078
        %v1086 = vmul.f32 %v957, %v1078
        %v1087 = vmul.f32 %v958, %v1078
        %v1088 = vmul.f32 %v959, %v1078
        %v1089 = vmul.f32 %v960, %v1078
        %v1090 = vmul.f32 %v961, %v1078
        %v1091 = vmul.f32 %v962, %v1078
        %v1092 = vmul.f32 %v963, %v1078
        %v1093 = vmul.f32 %v964, %v1078
        %v1094 = vmul.f32 %v965, %v1078
        %v1095 = vmul.f32 %v966, %v1078
        %v1096 = vmul.f32 %v967, %v1078
        %v1097 = vmul.f32 %v968, %v1078
        %v1098 = vmul.f32 %v969, %v1078
        %v1099 = vmul.f32 %v970, %v1078
        %v1100 = vmul.f32 %v971, %v1078
        %v1101 = vmul.f32 %v972, %v1078
        %v1102 = vmul.f32 %v973, %v1078
        %v1103 = vmul.f32 %v974, %v1078
        %v1104 = vmul.f32 %v975, %v1078
        %v1105 = vmul.f32 %v976, %v1078
        %v1106 = vmul.f32 %v977, %v1078
        %v1107 = vmul.f32 %v978, %v1078
        %v1108 = vmul.f32 %v979, %v1078
        %v1109 = vmul.f32 %v980, %v1078
        %v1110 = vmul.f32 %v981, %v1078
        %v1111 = vmul.f32 %v982, %v1078
        %v1112 = vmul.f32 %v983, %v1078
        %v1113 = vmul.f32 %v984, %v1078
        %v1114 = vmul.f32 %v985, %v1078
        %v1115 = vmul.f32 %v986, %v1078
        %v1116 = vmul.f32 %v987, %v1078
        %v1117 = vmul.f32 %v988, %v1078
        %v1118 = vmul.f32 %v989, %v1078
        %v1119 = vmul.f32 %v990, %v1078
        %v1120 = vmul.f32 %v991, %v1078
        %v1121 = vmul.f32 %v992, %v1078
        %v1122 = vmul.f32 %v993, %v1078
        %v1123 = vmul.f32 %v994, %v1078
        %v1124 = vmul.f32 %v995, %v1078
        %v1125 = vmul.f32 %v996, %v1078
        %v1126 = vmul.f32 %v997, %v1078
        %v1127 = vmul.f32 %v998, %v1078
        %v1128 = vmul.f32 %v999, %v1078
        %v1129 = vmul.f32 %v1000, %v1078
        %v1130 = vmul.f32 %v1001, %v1078
        %v1131 = vmul.f32 %v1002, %v1078
        %v1132 = vmul.f32 %v1003, %v1078
        %v1133 = vmul.f32 %v1004, %v1078
        %v1134 = vmul.f32 %v1005, %v1078
        %v1135 = vmul.f32 %v1006, %v1078
        %v1136 = vmul.f32 %v1007, %v1078
        %v1137 = vmul.f32 %v1008, %v1078
        %v1138 = vmul.f32 %v1009, %v1078
        %v1139 = vmul.f32 %v1010, %v1078
        %v1140 = vmul.f32 %v1011, %v1078
        %v1141 = vmul.f32 %v1012, %v1078
        %v1142 = vmul.f32 %v1013, %v1078
        %v1143 = vmul.f32 %v1014, %v1078
        %v1144 = vmul.f32 %v1015, %v1078
        %v1145 = vmul.f32 %v1016, %v1078
        %v1146 = vmul.f32 %v1017, %v1078
        %v1147 = vmul.f32 %v1018, %v1078
        %v1148 = vmul.f32 %v1019, %v1078
        %v1149 = vmul.f32 %v1020, %v1078
        %v1150 = vmul.f32 %v1021, %v1078
        %v1151 = vmul.f32 %v1022, %v1078
        %v1152 = vmul.f32 %v1023, %v1078
        %v1153 = vmul.f32 %v1024, %v1078
        %v1154 = vmul.f32 %v1025, %v1078
        %v1155 = vmul.f32 %v1026, %v1078
        %v1156 = vmul.f32 %v1027, %v1078
        %v1157 = vmul.f32 %v1028, %v1078
        %v1158 = vmul.f32 %v1029, %v1078
        %v1159 = vmul.f32 %v1030, %v1078
        %v1160 = vmul.f32 %v1031, %v1078
        %v1161 = vmul.f32 %v1032, %v1078
        %v1162 = vmul.f32 %v1033, %v1078
        %v1163 = vmul.f32 %v1034, %v1078
        %v1164 = vmul.f32 %v1035, %v1078
        %v1165 = vmul.f32 %v1036, %v1078
        %v1166 = vmul.f32 %v1037, %v1078
        %v1167 = vmul.f32 %v1038, %v1078
        %v1168 = vmul.f32 %v1039, %v1078
        %v1169 = vmul.f32 %v1040, %v1078
        %v1170 = vmul.f32 %v1041, %v1078
        %v1171 = vmul.f32 %v1042, %v1078
        %v1172 = vmul.f32 %v1043, %v1078
        %v1173 = vmul.f32 %v1044, %v1078
        %v1174 = vmul.f32 %v1045, %v1078
        %v1175 = vmul.f32 %v1046, %v1078
        %v1176 = vmul.f32 %v1047, %v1078
        %v1177 = vmul.f32 %v1048, %v1078
        %v1178 = vmul.f32 %v1049, %v1078
        %v1179 = vmul.f32 %v1050, %v1078
        %v1180 = vmul.f32 %v1051, %v1078
        %v1181 = vmul.f32 %v1052, %v1078
        %v1182 = vmul.f32 %v1053, %v1078
        %v1183 = vmul.f32 %v1054, %v1078
        %v1184 = vmul.f32 %v1055, %v1078
        %v1185 = vmul.f32 %v1056, %v1078
        %v1186 = vmul.f32 %v1057, %v1078
        %v1187 = vmul.f32 %v1058, %v1078
        %v1188 = vmul.f32 %v1059, %v1078
        %v1189 = vmul.f32 %v1060, %v1078
        %v1190 = vmul.f32 %v1061, %v1078
        %v1191 = vmul.f32 %v1062, %v1078
        %v1192 = vmul.f32 %v1063, %v1078
        %v1193 = vmul.f32 %v1064, %v1078
        %v1194 = vmul.f32 %v1065, %v1078
        %v1195 = vmul.f32 %v1066, %v1078
        %v1196 = vmul.f32 %v1067, %v1078
        %v1197 = vmul.f32 %v1068, %v1078
        %v1198 = vmul.f32 %v1069, %v1078
        %v1199 = vmul.f32 %v1070, %v1078
        %v1200 = vmul.f32 %v1071, %v1078
        %v1201 = vmul.f32 %v1072, %v1078
        %v1202 = vmul.f32 %v1073, %v1078
        %v1203 = vmul.f32 %v1074, %v1078
        %v1204 = vmul.f32 %v1075, %v1078
        %v1205 = vmul.f32 %v1076, %v1078
        %v1206 = vmul.f32 %v1077, %v1078
        %v1207 = vadd.f32 %v821, %v1079
        %v1208 = vadd.f32 %v822, %v1080
        %v1209 = vadd.f32 %v823, %v1081
        %v1210 = vadd.f32 %v824, %v1082
        %v1211 = vadd.f32 %v825, %v1083
        %v1212 = vadd.f32 %v826, %v1084
        %v1213 = vadd.f32 %v827, %v1085
        %v1214 = vadd.f32 %v828, %v1086
        %v1215 = vadd.f32 %v829, %v1087
        %v1216 = vadd.f32 %v830, %v1088
        %v1217 = vadd.f32 %v831, %v1089
        %v1218 = vadd.f32 %v832, %v1090
        %v1219 = vadd.f32 %v833, %v1091
        %v1220 = vadd.f32 %v834, %v1092
        %v1221 = vadd.f32 %v835, %v1093
        %v1222 = vadd.f32 %v836, %v1094
        %v1223 = vadd.f32 %v837, %v1095
        %v1224 = vadd.f32 %v838, %v1096
        %v1225 = vadd.f32 %v839, %v1097
        %v1226 = vadd.f32 %v840, %v1098
        %v1227 = vadd.f32 %v841, %v1099
        %v1228 = vadd.f32 %v842, %v1100
        %v1229 = vadd.f32 %v843, %v1101
        %v1230 = vadd.f32 %v844, %v1102
        %v1231 = vadd.f32 %v845, %v1103
        %v1232 = vadd.f32 %v846, %v1104
        %v1233 = vadd.f32 %v847, %v1105
        %v1234 = vadd.f32 %v848, %v1106
        %v1235 = vadd.f32 %v849, %v1107
        %v1236 = vadd.f32 %v850, %v1108
        %v1237 = vadd.f32 %v851, %v1109
        %v1238 = vadd.f32 %v852, %v1110
        %v1239 = vadd.f32 %v853, %v1111
        %v1240 = vadd.f32 %v854, %v1112
        %v1241 = vadd.f32 %v855, %v1113
        %v1242 = vadd.f32 %v856, %v1114
        %v1243 = vadd.f32 %v857, %v1115
        %v1244 = vadd.f32 %v858, %v1116
        %v1245 = vadd.f32 %v859, %v1117
        %v1246 = vadd.f32 %v860, %v1118
        %v1247 = vadd.f32 %v861, %v1119
        %v1248 = vadd.f32 %v862, %v1120
        %v1249 = vadd.f32 %v863, %v1121
        %v1250 = vadd.f32 %v864, %v1122
        %v1251 = vadd.f32 %v865, %v1123
        %v1252 = vadd.f32 %v866, %v1124
        %v1253 = vadd.f32 %v867, %v1125
        %v1254 = vadd.f32 %v868, %v1126
        %v1255 = vadd.f32 %v869, %v1127
        %v1256 = vadd.f32 %v870, %v1128
        %v1257 = vadd.f32 %v871, %v1129
        %v1258 = vadd.f32 %v872, %v1130
        %v1259 = vadd.f32 %v873, %v1131
        %v1260 = vadd.f32 %v874, %v1132
        %v1261 = vadd.f32 %v875, %v1133
        %v1262 = vadd.f32 %v876, %v1134
        %v1263 = vadd.f32 %v877, %v1135
        %v1264 = vadd.f32 %v878, %v1136
        %v1265 = vadd.f32 %v879, %v1137
        %v1266 = vadd.f32 %v880, %v1138
        %v1267 = vadd.f32 %v881, %v1139
        %v1268 = vadd.f32 %v882, %v1140
        %v1269 = vadd.f32 %v883, %v1141
        %v1270 = vadd.f32 %v884, %v1142
        %v1271 = vadd.f32 %v885, %v1143
        %v1272 = vadd.f32 %v886, %v1144
        %v1273 = vadd.f32 %v887, %v1145
        %v1274 = vadd.f32 %v888, %v1146
        %v1275 = vadd.f32 %v889, %v1147
        %v1276 = vadd.f32 %v890, %v1148
        %v1277 = vadd.f32 %v891, %v1149
        %v1278 = vadd.f32 %v892, %v1150
        %v1279 = vadd.f32 %v893, %v1151
        %v1280 = vadd.f32 %v894, %v1152
        %v1281 = vadd.f32 %v895, %v1153
        %v1282 = vadd.f32 %v896, %v1154
        %v1283 = vadd.f32 %v897, %v1155
        %v1284 = vadd.f32 %v898, %v1156
        %v1285 = vadd.f32 %v899, %v1157
        %v1286 = vadd.f32 %v900, %v1158
        %v1287 = vadd.f32 %v901, %v1159
        %v1288 = vadd.f32 %v902, %v1160
        %v1289 = vadd.f32 %v903, %v1161
        %v1290 = vadd.f32 %v904, %v1162
        %v1291 = vadd.f32 %v905, %v1163
        %v1292 = vadd.f32 %v906, %v1164
        %v1293 = vadd.f32 %v907, %v1165
        %v1294 = vadd.f32 %v908, %v1166
        %v1295 = vadd.f32 %v909, %v1167
        %v1296 = vadd.f32 %v910, %v1168
        %v1297 = vadd.f32 %v911, %v1169
        %v1298 = vadd.f32 %v912, %v1170
        %v1299 = vadd.f32 %v913, %v1171
        %v1300 = vadd.f32 %v914, %v1172
        %v1301 = vadd.f32 %v915, %v1173
        %v1302 = vadd.f32 %v916, %v1174
        %v1303 = vadd.f32 %v917, %v1175
        %v1304 = vadd.f32 %v918, %v1176
        %v1305 = vadd.f32 %v919, %v1177
        %v1306 = vadd.f32 %v920, %v1178
        %v1307 = vadd.f32 %v921, %v1179
        %v1308 = vadd.f32 %v922, %v1180
        %v1309 = vadd.f32 %v923, %v1181
        %v1310 = vadd.f32 %v924, %v1182
        %v1311 = vadd.f32 %v925, %v1183
        %v1312 = vadd.f32 %v926, %v1184
        %v1313 = vadd.f32 %v927, %v1185
        %v1314 = vadd.f32 %v928, %v1186
        %v1315 = vadd.f32 %v929, %v1187
        %v1316 = vadd.f32 %v930, %v1188
        %v1317 = vadd.f32 %v931, %v1189
        %v1318 = vadd.f32 %v932, %v1190
        %v1319 = vadd.f32 %v933, %v1191
        %v1320 = vadd.f32 %v934, %v1192
        %v1321 = vadd.f32 %v935, %v1193
        %v1322 = vadd.f32 %v936, %v1194
        %v1323 = vadd.f32 %v937, %v1195
        %v1324 = vadd.f32 %v938, %v1196
        %v1325 = vadd.f32 %v939, %v1197
        %v1326 = vadd.f32 %v940, %v1198
        %v1327 = vadd.f32 %v941, %v1199
        %v1328 = vadd.f32 %v942, %v1200
        %v1329 = vadd.f32 %v943, %v1201
        %v1330 = vadd.f32 %v944, %v1202
        %v1331 = vadd.f32 %v945, %v1203
        %v1332 = vadd.f32 %v946, %v1204
        %v1333 = vadd.f32 %v947, %v1205
        %v1334 = vadd.f32 %v948, %v1206
        %s1335 = scalar_lea.vmem [#allocation3], 2048
        %v1336 = vld [vmem:[%s1335] sm:$0xff]
        %v1337 = vld [vmem:[%s1335 + $0x8] sm:$0xff]
        %v1338 = vld [vmem:[%s1335 + $0x10] sm:$0xff]
        %v1339 = vld [vmem:[%s1335 + $0x18] sm:$0xff]
        %v1340 = vld [vmem:[%s1335 + $0x20] sm:$0xff]
        %v1341 = vld [vmem:[%s1335 + $0x28] sm:$0xff]
        %v1342 = vld [vmem:[%s1335 + $0x30] sm:$0xff]
        %v1343 = vld [vmem:[%s1335 + $0x38] sm:$0xff]
        %v1344 = vld [vmem:[%s1335 + $0x40] sm:$0xff]
        %v1345 = vld [vmem:[%s1335 + $0x48] sm:$0xff]
        %v1346 = vld [vmem:[%s1335 + $0x50] sm:$0xff]
        %v1347 = vld [vmem:[%s1335 + $0x58] sm:$0xff]
        %v1348 = vld [vmem:[%s1335 + $0x60] sm:$0xff]
        %v1349 = vld [vmem:[%s1335 + $0x68] sm:$0xff]
        %v1350 = vld [vmem:[%s1335 + $0x70] sm:$0xff]
        %v1351 = vld [vmem:[%s1335 + $0x78] sm:$0xff]
        %v1352 = vld [vmem:[%s1335 + $0x80] sm:$0xff]
        %v1353 = vld [vmem:[%s1335 + $0x88] sm:$0xff]
        %v1354 = vld [vmem:[%s1335 + $0x90] sm:$0xff]
        %v1355 = vld [vmem:[%s1335 + $0x98] sm:$0xff]
        %v1356 = vld [vmem:[%s1335 + $0xa0] sm:$0xff]
        %v1357 = vld [vmem:[%s1335 + $0xa8] sm:$0xff]
        %v1358 = vld [vmem:[%s1335 + $0xb0] sm:$0xff]
        %v1359 = vld [vmem:[%s1335 + $0xb8] sm:$0xff]
        %v1360 = vld [vmem:[%s1335 + $0xc0] sm:$0xff]
        %v1361 = vld [vmem:[%s1335 + $0xc8] sm:$0xff]
        %v1362 = vld [vmem:[%s1335 + $0xd0] sm:$0xff]
        %v1363 = vld [vmem:[%s1335 + $0xd8] sm:$0xff]
        %v1364 = vld [vmem:[%s1335 + $0xe0] sm:$0xff]
        %v1365 = vld [vmem:[%s1335 + $0xe8] sm:$0xff]
        %v1366 = vld [vmem:[%s1335 + $0xf0] sm:$0xff]
        %v1367 = vld [vmem:[%s1335 + $0xf8] sm:$0xff]
        %v1368 = vld [vmem:[%s1335 + $0x100] sm:$0xff]
        %v1369 = vld [vmem:[%s1335 + $0x108] sm:$0xff]
        %v1370 = vld [vmem:[%s1335 + $0x110] sm:$0xff]
        %v1371 = vld [vmem:[%s1335 + $0x118] sm:$0xff]
        %v1372 = vld [vmem:[%s1335 + $0x120] sm:$0xff]
        %v1373 = vld [vmem:[%s1335 + $0x128] sm:$0xff]
        %v1374 = vld [vmem:[%s1335 + $0x130] sm:$0xff]
        %v1375 = vld [vmem:[%s1335 + $0x138] sm:$0xff]
        %v1376 = vld [vmem:[%s1335 + $0x140] sm:$0xff]
        %v1377 = vld [vmem:[%s1335 + $0x148] sm:$0xff]
        %v1378 = vld [vmem:[%s1335 + $0x150] sm:$0xff]
        %v1379 = vld [vmem:[%s1335 + $0x158] sm:$0xff]
        %v1380 = vld [vmem:[%s1335 + $0x160] sm:$0xff]
        %v1381 = vld [vmem:[%s1335 + $0x168] sm:$0xff]
        %v1382 = vld [vmem:[%s1335 + $0x170] sm:$0xff]
        %v1383 = vld [vmem:[%s1335 + $0x178] sm:$0xff]
        %v1384 = vld [vmem:[%s1335 + $0x180] sm:$0xff]
        %v1385 = vld [vmem:[%s1335 + $0x188] sm:$0xff]
        %v1386 = vld [vmem:[%s1335 + $0x190] sm:$0xff]
        %v1387 = vld [vmem:[%s1335 + $0x198] sm:$0xff]
        %v1388 = vld [vmem:[%s1335 + $0x1a0] sm:$0xff]
        %v1389 = vld [vmem:[%s1335 + $0x1a8] sm:$0xff]
        %v1390 = vld [vmem:[%s1335 + $0x1b0] sm:$0xff]
        %v1391 = vld [vmem:[%s1335 + $0x1b8] sm:$0xff]
        %v1392 = vld [vmem:[%s1335 + $0x1c0] sm:$0xff]
        %v1393 = vld [vmem:[%s1335 + $0x1c8] sm:$0xff]
        %v1394 = vld [vmem:[%s1335 + $0x1d0] sm:$0xff]
        %v1395 = vld [vmem:[%s1335 + $0x1d8] sm:$0xff]
        %v1396 = vld [vmem:[%s1335 + $0x1e0] sm:$0xff]
        %v1397 = vld [vmem:[%s1335 + $0x1e8] sm:$0xff]
        %v1398 = vld [vmem:[%s1335 + $0x1f0] sm:$0xff]
        %v1399 = vld [vmem:[%s1335 + $0x1f8] sm:$0xff]
        %v1400 = vld [vmem:[%s1335 + $0x200] sm:$0xff]
        %v1401 = vld [vmem:[%s1335 + $0x208] sm:$0xff]
        %v1402 = vld [vmem:[%s1335 + $0x210] sm:$0xff]
        %v1403 = vld [vmem:[%s1335 + $0x218] sm:$0xff]
        %v1404 = vld [vmem:[%s1335 + $0x220] sm:$0xff]
        %v1405 = vld [vmem:[%s1335 + $0x228] sm:$0xff]
        %v1406 = vld [vmem:[%s1335 + $0x230] sm:$0xff]
        %v1407 = vld [vmem:[%s1335 + $0x238] sm:$0xff]
        %v1408 = vld [vmem:[%s1335 + $0x240] sm:$0xff]
        %v1409 = vld [vmem:[%s1335 + $0x248] sm:$0xff]
        %v1410 = vld [vmem:[%s1335 + $0x250] sm:$0xff]
        %v1411 = vld [vmem:[%s1335 + $0x258] sm:$0xff]
        %v1412 = vld [vmem:[%s1335 + $0x260] sm:$0xff]
        %v1413 = vld [vmem:[%s1335 + $0x268] sm:$0xff]
        %v1414 = vld [vmem:[%s1335 + $0x270] sm:$0xff]
        %v1415 = vld [vmem:[%s1335 + $0x278] sm:$0xff]
        %v1416 = vld [vmem:[%s1335 + $0x280] sm:$0xff]
        %v1417 = vld [vmem:[%s1335 + $0x288] sm:$0xff]
        %v1418 = vld [vmem:[%s1335 + $0x290] sm:$0xff]
        %v1419 = vld [vmem:[%s1335 + $0x298] sm:$0xff]
        %v1420 = vld [vmem:[%s1335 + $0x2a0] sm:$0xff]
        %v1421 = vld [vmem:[%s1335 + $0x2a8] sm:$0xff]
        %v1422 = vld [vmem:[%s1335 + $0x2b0] sm:$0xff]
        %v1423 = vld [vmem:[%s1335 + $0x2b8] sm:$0xff]
        %v1424 = vld [vmem:[%s1335 + $0x2c0] sm:$0xff]
        %v1425 = vld [vmem:[%s1335 + $0x2c8] sm:$0xff]
        %v1426 = vld [vmem:[%s1335 + $0x2d0] sm:$0xff]
        %v1427 = vld [vmem:[%s1335 + $0x2d8] sm:$0xff]
        %v1428 = vld [vmem:[%s1335 + $0x2e0] sm:$0xff]
        %v1429 = vld [vmem:[%s1335 + $0x2e8] sm:$0xff]
        %v1430 = vld [vmem:[%s1335 + $0x2f0] sm:$0xff]
        %v1431 = vld [vmem:[%s1335 + $0x2f8] sm:$0xff]
        %v1432 = vld [vmem:[%s1335 + $0x300] sm:$0xff]
        %v1433 = vld [vmem:[%s1335 + $0x308] sm:$0xff]
        %v1434 = vld [vmem:[%s1335 + $0x310] sm:$0xff]
        %v1435 = vld [vmem:[%s1335 + $0x318] sm:$0xff]
        %v1436 = vld [vmem:[%s1335 + $0x320] sm:$0xff]
        %v1437 = vld [vmem:[%s1335 + $0x328] sm:$0xff]
        %v1438 = vld [vmem:[%s1335 + $0x330] sm:$0xff]
        %v1439 = vld [vmem:[%s1335 + $0x338] sm:$0xff]
        %v1440 = vld [vmem:[%s1335 + $0x340] sm:$0xff]
        %v1441 = vld [vmem:[%s1335 + $0x348] sm:$0xff]
        %v1442 = vld [vmem:[%s1335 + $0x350] sm:$0xff]
        %v1443 = vld [vmem:[%s1335 + $0x358] sm:$0xff]
        %v1444 = vld [vmem:[%s1335 + $0x360] sm:$0xff]
        %v1445 = vld [vmem:[%s1335 + $0x368] sm:$0xff]
        %v1446 = vld [vmem:[%s1335 + $0x370] sm:$0xff]
        %v1447 = vld [vmem:[%s1335 + $0x378] sm:$0xff]
        %v1448 = vld [vmem:[%s1335 + $0x380] sm:$0xff]
        %v1449 = vld [vmem:[%s1335 + $0x388] sm:$0xff]
        %v1450 = vld [vmem:[%s1335 + $0x390] sm:$0xff]
        %v1451 = vld [vmem:[%s1335 + $0x398] sm:$0xff]
        %v1452 = vld [vmem:[%s1335 + $0x3a0] sm:$0xff]
        %v1453 = vld [vmem:[%s1335 + $0x3a8] sm:$0xff]
        %v1454 = vld [vmem:[%s1335 + $0x3b0] sm:$0xff]
        %v1455 = vld [vmem:[%s1335 + $0x3b8] sm:$0xff]
        %v1456 = vld [vmem:[%s1335 + $0x3c0] sm:$0xff]
        %v1457 = vld [vmem:[%s1335 + $0x3c8] sm:$0xff]
        %v1458 = vld [vmem:[%s1335 + $0x3d0] sm:$0xff]
        %v1459 = vld [vmem:[%s1335 + $0x3d8] sm:$0xff]
        %v1460 = vld [vmem:[%s1335 + $0x3e0] sm:$0xff]
        %v1461 = vld [vmem:[%s1335 + $0x3e8] sm:$0xff]
        %v1462 = vld [vmem:[%s1335 + $0x3f0] sm:$0xff]
        %v1463 = vld [vmem:[%s1335 + $0x3f8] sm:$0xff]
        %v1464 = vperm.slane %v435, 2
        %v1465 = vmul.f32 %v1336, %v1464
        %v1466 = vmul.f32 %v1337, %v1464
        %v1467 = vmul.f32 %v1338, %v1464
        %v1468 = vmul.f32 %v1339, %v1464
        %v1469 = vmul.f32 %v1340, %v1464
        %v1470 = vmul.f32 %v1341, %v1464
        %v1471 = vmul.f32 %v1342, %v1464
        %v1472 = vmul.f32 %v1343, %v1464
        %v1473 = vmul.f32 %v1344, %v1464
        %v1474 = vmul.f32 %v1345, %v1464
        %v1475 = vmul.f32 %v1346, %v1464
        %v1476 = vmul.f32 %v1347, %v1464
        %v1477 = vmul.f32 %v1348, %v1464
        %v1478 = vmul.f32 %v1349, %v1464
        %v1479 = vmul.f32 %v1350, %v1464
        %v1480 = vmul.f32 %v1351, %v1464
        %v1481 = vmul.f32 %v1352, %v1464
        %v1482 = vmul.f32 %v1353, %v1464
        %v1483 = vmul.f32 %v1354, %v1464
        %v1484 = vmul.f32 %v1355, %v1464
        %v1485 = vmul.f32 %v1356, %v1464
        %v1486 = vmul.f32 %v1357, %v1464
        %v1487 = vmul.f32 %v1358, %v1464
        %v1488 = vmul.f32 %v1359, %v1464
        %v1489 = vmul.f32 %v1360, %v1464
        %v1490 = vmul.f32 %v1361, %v1464
        %v1491 = vmul.f32 %v1362, %v1464
        %v1492 = vmul.f32 %v1363, %v1464
        %v1493 = vmul.f32 %v1364, %v1464
        %v1494 = vmul.f32 %v1365, %v1464
        %v1495 = vmul.f32 %v1366, %v1464
        %v1496 = vmul.f32 %v1367, %v1464
        %v1497 = vmul.f32 %v1368, %v1464
        %v1498 = vmul.f32 %v1369, %v1464
        %v1499 = vmul.f32 %v1370, %v1464
        %v1500 = vmul.f32 %v1371, %v1464
        %v1501 = vmul.f32 %v1372, %v1464
        %v1502 = vmul.f32 %v1373, %v1464
        %v1503 = vmul.f32 %v1374, %v1464
        %v1504 = vmul.f32 %v1375, %v1464
        %v1505 = vmul.f32 %v1376, %v1464
        %v1506 = vmul.f32 %v1377, %v1464
        %v1507 = vmul.f32 %v1378, %v1464
        %v1508 = vmul.f32 %v1379, %v1464
        %v1509 = vmul.f32 %v1380, %v1464
        %v1510 = vmul.f32 %v1381, %v1464
        %v1511 = vmul.f32 %v1382, %v1464
        %v1512 = vmul.f32 %v1383, %v1464
        %v1513 = vmul.f32 %v1384, %v1464
        %v1514 = vmul.f32 %v1385, %v1464
        %v1515 = vmul.f32 %v1386, %v1464
        %v1516 = vmul.f32 %v1387, %v1464
        %v1517 = vmul.f32 %v1388, %v1464
        %v1518 = vmul.f32 %v1389, %v1464
        %v1519 = vmul.f32 %v1390, %v1464
        %v1520 = vmul.f32 %v1391, %v1464
        %v1521 = vmul.f32 %v1392, %v1464
        %v1522 = vmul.f32 %v1393, %v1464
        %v1523 = vmul.f32 %v1394, %v1464
        %v1524 = vmul.f32 %v1395, %v1464
        %v1525 = vmul.f32 %v1396, %v1464
        %v1526 = vmul.f32 %v1397, %v1464
        %v1527 = vmul.f32 %v1398, %v1464
        %v1528 = vmul.f32 %v1399, %v1464
        %v1529 = vmul.f32 %v1400, %v1464
        %v1530 = vmul.f32 %v1401, %v1464
        %v1531 = vmul.f32 %v1402, %v1464
        %v1532 = vmul.f32 %v1403, %v1464
        %v1533 = vmul.f32 %v1404, %v1464
        %v1534 = vmul.f32 %v1405, %v1464
        %v1535 = vmul.f32 %v1406, %v1464
        %v1536 = vmul.f32 %v1407, %v1464
        %v1537 = vmul.f32 %v1408, %v1464
        %v1538 = vmul.f32 %v1409, %v1464
        %v1539 = vmul.f32 %v1410, %v1464
        %v1540 = vmul.f32 %v1411, %v1464
        %v1541 = vmul.f32 %v1412, %v1464
        %v1542 = vmul.f32 %v1413, %v1464
        %v1543 = vmul.f32 %v1414, %v1464
        %v1544 = vmul.f32 %v1415, %v1464
        %v1545 = vmul.f32 %v1416, %v1464
        %v1546 = vmul.f32 %v1417, %v1464
        %v1547 = vmul.f32 %v1418, %v1464
        %v1548 = vmul.f32 %v1419, %v1464
        %v1549 = vmul.f32 %v1420, %v1464
        %v1550 = vmul.f32 %v1421, %v1464
        %v1551 = vmul.f32 %v1422, %v1464
        %v1552 = vmul.f32 %v1423, %v1464
        %v1553 = vmul.f32 %v1424, %v1464
        %v1554 = vmul.f32 %v1425, %v1464
        %v1555 = vmul.f32 %v1426, %v1464
        %v1556 = vmul.f32 %v1427, %v1464
        %v1557 = vmul.f32 %v1428, %v1464
        %v1558 = vmul.f32 %v1429, %v1464
        %v1559 = vmul.f32 %v1430, %v1464
        %v1560 = vmul.f32 %v1431, %v1464
        %v1561 = vmul.f32 %v1432, %v1464
        %v1562 = vmul.f32 %v1433, %v1464
        %v1563 = vmul.f32 %v1434, %v1464
        %v1564 = vmul.f32 %v1435, %v1464
        %v1565 = vmul.f32 %v1436, %v1464
        %v1566 = vmul.f32 %v1437, %v1464
        %v1567 = vmul.f32 %v1438, %v1464
        %v1568 = vmul.f32 %v1439, %v1464
        %v1569 = vmul.f32 %v1440, %v1464
        %v1570 = vmul.f32 %v1441, %v1464
        %v1571 = vmul.f32 %v1442, %v1464
        %v1572 = vmul.f32 %v1443, %v1464
        %v1573 = vmul.f32 %v1444, %v1464
        %v1574 = vmul.f32 %v1445, %v1464
        %v1575 = vmul.f32 %v1446, %v1464
        %v1576 = vmul.f32 %v1447, %v1464
        %v1577 = vmul.f32 %v1448, %v1464
        %v1578 = vmul.f32 %v1449, %v1464
        %v1579 = vmul.f32 %v1450, %v1464
        %v1580 = vmul.f32 %v1451, %v1464
        %v1581 = vmul.f32 %v1452, %v1464
        %v1582 = vmul.f32 %v1453, %v1464
        %v1583 = vmul.f32 %v1454, %v1464
        %v1584 = vmul.f32 %v1455, %v1464
        %v1585 = vmul.f32 %v1456, %v1464
        %v1586 = vmul.f32 %v1457, %v1464
        %v1587 = vmul.f32 %v1458, %v1464
        %v1588 = vmul.f32 %v1459, %v1464
        %v1589 = vmul.f32 %v1460, %v1464
        %v1590 = vmul.f32 %v1461, %v1464
        %v1591 = vmul.f32 %v1462, %v1464
        %v1592 = vmul.f32 %v1463, %v1464
        %v1593 = vadd.f32 %v1207, %v1465
        %v1594 = vadd.f32 %v1208, %v1466
        %v1595 = vadd.f32 %v1209, %v1467
        %v1596 = vadd.f32 %v1210, %v1468
        %v1597 = vadd.f32 %v1211, %v1469
        %v1598 = vadd.f32 %v1212, %v1470
        %v1599 = vadd.f32 %v1213, %v1471
        %v1600 = vadd.f32 %v1214, %v1472
        %v1601 = vadd.f32 %v1215, %v1473
        %v1602 = vadd.f32 %v1216, %v1474
        %v1603 = vadd.f32 %v1217, %v1475
        %v1604 = vadd.f32 %v1218, %v1476
        %v1605 = vadd.f32 %v1219, %v1477
        %v1606 = vadd.f32 %v1220, %v1478
        %v1607 = vadd.f32 %v1221, %v1479
        %v1608 = vadd.f32 %v1222, %v1480
        %v1609 = vadd.f32 %v1223, %v1481
        %v1610 = vadd.f32 %v1224, %v1482
        %v1611 = vadd.f32 %v1225, %v1483
        %v1612 = vadd.f32 %v1226, %v1484
        %v1613 = vadd.f32 %v1227, %v1485
        %v1614 = vadd.f32 %v1228, %v1486
        %v1615 = vadd.f32 %v1229, %v1487
        %v1616 = vadd.f32 %v1230, %v1488
        %v1617 = vadd.f32 %v1231, %v1489
        %v1618 = vadd.f32 %v1232, %v1490
        %v1619 = vadd.f32 %v1233, %v1491
        %v1620 = vadd.f32 %v1234, %v1492
        %v1621 = vadd.f32 %v1235, %v1493
        %v1622 = vadd.f32 %v1236, %v1494
        %v1623 = vadd.f32 %v1237, %v1495
        %v1624 = vadd.f32 %v1238, %v1496
        %v1625 = vadd.f32 %v1239, %v1497
        %v1626 = vadd.f32 %v1240, %v1498
        %v1627 = vadd.f32 %v1241, %v1499
        %v1628 = vadd.f32 %v1242, %v1500
        %v1629 = vadd.f32 %v1243, %v1501
        %v1630 = vadd.f32 %v1244, %v1502
        %v1631 = vadd.f32 %v1245, %v1503
        %v1632 = vadd.f32 %v1246, %v1504
        %v1633 = vadd.f32 %v1247, %v1505
        %v1634 = vadd.f32 %v1248, %v1506
        %v1635 = vadd.f32 %v1249, %v1507
        %v1636 = vadd.f32 %v1250, %v1508
        %v1637 = vadd.f32 %v1251, %v1509
        %v1638 = vadd.f32 %v1252, %v1510
        %v1639 = vadd.f32 %v1253, %v1511
        %v1640 = vadd.f32 %v1254, %v1512
        %v1641 = vadd.f32 %v1255, %v1513
        %v1642 = vadd.f32 %v1256, %v1514
        %v1643 = vadd.f32 %v1257, %v1515
        %v1644 = vadd.f32 %v1258, %v1516
        %v1645 = vadd.f32 %v1259, %v1517
        %v1646 = vadd.f32 %v1260, %v1518
        %v1647 = vadd.f32 %v1261, %v1519
        %v1648 = vadd.f32 %v1262, %v1520
        %v1649 = vadd.f32 %v1263, %v1521
        %v1650 = vadd.f32 %v1264, %v1522
        %v1651 = vadd.f32 %v1265, %v1523
        %v1652 = vadd.f32 %v1266, %v1524
        %v1653 = vadd.f32 %v1267, %v1525
        %v1654 = vadd.f32 %v1268, %v1526
        %v1655 = vadd.f32 %v1269, %v1527
        %v1656 = vadd.f32 %v1270, %v1528
        %v1657 = vadd.f32 %v1271, %v1529
        %v1658 = vadd.f32 %v1272, %v1530
        %v1659 = vadd.f32 %v1273, %v1531
        %v1660 = vadd.f32 %v1274, %v1532
        %v1661 = vadd.f32 %v1275, %v1533
        %v1662 = vadd.f32 %v1276, %v1534
        %v1663 = vadd.f32 %v1277, %v1535
        %v1664 = vadd.f32 %v1278, %v1536
        %v1665 = vadd.f32 %v1279, %v1537
        %v1666 = vadd.f32 %v1280, %v1538
        %v1667 = vadd.f32 %v1281, %v1539
        %v1668 = vadd.f32 %v1282, %v1540
        %v1669 = vadd.f32 %v1283, %v1541
        %v1670 = vadd.f32 %v1284, %v1542
        %v1671 = vadd.f32 %v1285, %v1543
        %v1672 = vadd.f32 %v1286, %v1544
        %v1673 = vadd.f32 %v1287, %v1545
        %v1674 = vadd.f32 %v1288, %v1546
        %v1675 = vadd.f32 %v1289, %v1547
        %v1676 = vadd.f32 %v1290, %v1548
        %v1677 = vadd.f32 %v1291, %v1549
        %v1678 = vadd.f32 %v1292, %v1550
        %v1679 = vadd.f32 %v1293, %v1551
        %v1680 = vadd.f32 %v1294, %v1552
        %v1681 = vadd.f32 %v1295, %v1553
        %v1682 = vadd.f32 %v1296, %v1554
        %v1683 = vadd.f32 %v1297, %v1555
        %v1684 = vadd.f32 %v1298, %v1556
        %v1685 = vadd.f32 %v1299, %v1557
        %v1686 = vadd.f32 %v1300, %v1558
        %v1687 = vadd.f32 %v1301, %v1559
        %v1688 = vadd.f32 %v1302, %v1560
        %v1689 = vadd.f32 %v1303, %v1561
        %v1690 = vadd.f32 %v1304, %v1562
        %v1691 = vadd.f32 %v1305, %v1563
        %v1692 = vadd.f32 %v1306, %v1564
        %v1693 = vadd.f32 %v1307, %v1565
        %v1694 = vadd.f32 %v1308, %v1566
        %v1695 = vadd.f32 %v1309, %v1567
        %v1696 = vadd.f32 %v1310, %v1568
        %v1697 = vadd.f32 %v1311, %v1569
        %v1698 = vadd.f32 %v1312, %v1570
        %v1699 = vadd.f32 %v1313, %v1571
        %v1700 = vadd.f32 %v1314, %v1572
        %v1701 = vadd.f32 %v1315, %v1573
        %v1702 = vadd.f32 %v1316, %v1574
        %v1703 = vadd.f32 %v1317, %v1575
        %v1704 = vadd.f32 %v1318, %v1576
        %v1705 = vadd.f32 %v1319, %v1577
        %v1706 = vadd.f32 %v1320, %v1578
        %v1707 = vadd.f32 %v1321, %v1579
        %v1708 = vadd.f32 %v1322, %v1580
        %v1709 = vadd.f32 %v1323, %v1581
        %v1710 = vadd.f32 %v1324, %v1582
        %v1711 = vadd.f32 %v1325, %v1583
        %v1712 = vadd.f32 %v1326, %v1584
        %v1713 = vadd.f32 %v1327, %v1585
        %v1714 = vadd.f32 %v1328, %v1586
        %v1715 = vadd.f32 %v1329, %v1587
        %v1716 = vadd.f32 %v1330, %v1588
        %v1717 = vadd.f32 %v1331, %v1589
        %v1718 = vadd.f32 %v1332, %v1590
        %v1719 = vadd.f32 %v1333, %v1591
        %v1720 = vadd.f32 %v1334, %v1592
        %v1721 = vmax.f32 %v1593, 0.0
        %v1722 = vmax.f32 %v1594, 0.0
        %v1723 = vmax.f32 %v1595, 0.0
        %v1724 = vmax.f32 %v1596, 0.0
        %v1725 = vmax.f32 %v1597, 0.0
        %v1726 = vmax.f32 %v1598, 0.0
        %v1727 = vmax.f32 %v1599, 0.0
        %v1728 = vmax.f32 %v1600, 0.0
        %v1729 = vmax.f32 %v1601, 0.0
        %v1730 = vmax.f32 %v1602, 0.0
        %v1731 = vmax.f32 %v1603, 0.0
        %v1732 = vmax.f32 %v1604, 0.0
        %v1733 = vmax.f32 %v1605, 0.0
        %v1734 = vmax.f32 %v1606, 0.0
        %v1735 = vmax.f32 %v1607, 0.0
        %v1736 = vmax.f32 %v1608, 0.0
        %v1737 = vmax.f32 %v1609, 0.0
        %v1738 = vmax.f32 %v1610, 0.0
        %v1739 = vmax.f32 %v1611, 0.0
        %v1740 = vmax.f32 %v1612, 0.0
        %v1741 = vmax.f32 %v1613, 0.0
        %v1742 = vmax.f32 %v1614, 0.0
        %v1743 = vmax.f32 %v1615, 0.0
        %v1744 = vmax.f32 %v1616, 0.0
        %v1745 = vmax.f32 %v1617, 0.0
        %v1746 = vmax.f32 %v1618, 0.0
        %v1747 = vmax.f32 %v1619, 0.0
        %v1748 = vmax.f32 %v1620, 0.0
        %v1749 = vmax.f32 %v1621, 0.0
        %v1750 = vmax.f32 %v1622, 0.0
        %v1751 = vmax.f32 %v1623, 0.0
        %v1752 = vmax.f32 %v1624, 0.0
        %v1753 = vmax.f32 %v1625, 0.0
        %v1754 = vmax.f32 %v1626, 0.0
        %v1755 = vmax.f32 %v1627, 0.0
        %v1756 = vmax.f32 %v1628, 0.0
        %v1757 = vmax.f32 %v1629, 0.0
        %v1758 = vmax.f32 %v1630, 0.0
        %v1759 = vmax.f32 %v1631, 0.0
        %v1760 = vmax.f32 %v1632, 0.0
        %v1761 = vmax.f32 %v1633, 0.0
        %v1762 = vmax.f32 %v1634, 0.0
        %v1763 = vmax.f32 %v1635, 0.0
        %v1764 = vmax.f32 %v1636, 0.0
        %v1765 = vmax.f32 %v1637, 0.0
        %v1766 = vmax.f32 %v1638, 0.0
        %v1767 = vmax.f32 %v1639, 0.0
        %v1768 = vmax.f32 %v1640, 0.0
        %v1769 = vmax.f32 %v1641, 0.0
        %v1770 = vmax.f32 %v1642, 0.0
        %v1771 = vmax.f32 %v1643, 0.0
        %v1772 = vmax.f32 %v1644, 0.0
        %v1773 = vmax.f32 %v1645, 0.0
        %v1774 = vmax.f32 %v1646, 0.0
        %v1775 = vmax.f32 %v1647, 0.0
        %v1776 = vmax.f32 %v1648, 0.0
        %v1777 = vmax.f32 %v1649, 0.0
        %v1778 = vmax.f32 %v1650, 0.0
        %v1779 = vmax.f32 %v1651, 0.0
        %v1780 = vmax.f32 %v1652, 0.0
        %v1781 = vmax.f32 %v1653, 0.0
        %v1782 = vmax.f32 %v1654, 0.0
        %v1783 = vmax.f32 %v1655, 0.0
        %v1784 = vmax.f32 %v1656, 0.0
        %v1785 = vmax.f32 %v1657, 0.0
        %v1786 = vmax.f32 %v1658, 0.0
        %v1787 = vmax.f32 %v1659, 0.0
        %v1788 = vmax.f32 %v1660, 0.0
        %v1789 = vmax.f32 %v1661, 0.0
        %v1790 = vmax.f32 %v1662, 0.0
        %v1791 = vmax.f32 %v1663, 0.0
        %v1792 = vmax.f32 %v1664, 0.0
        %v1793 = vmax.f32 %v1665, 0.0
        %v1794 = vmax.f32 %v1666, 0.0
        %v1795 = vmax.f32 %v1667, 0.0
        %v1796 = vmax.f32 %v1668, 0.0
        %v1797 = vmax.f32 %v1669, 0.0
        %v1798 = vmax.f32 %v1670, 0.0
        %v1799 = vmax.f32 %v1671, 0.0
        %v1800 = vmax.f32 %v1672, 0.0
        %v1801 = vmax.f32 %v1673, 0.0
        %v1802 = vmax.f32 %v1674, 0.0
        %v1803 = vmax.f32 %v1675, 0.0
        %v1804 = vmax.f32 %v1676, 0.0
        %v1805 = vmax.f32 %v1677, 0.0
        %v1806 = vmax.f32 %v1678, 0.0
        %v1807 = vmax.f32 %v1679, 0.0
        %v1808 = vmax.f32 %v1680, 0.0
        %v1809 = vmax.f32 %v1681, 0.0
        %v1810 = vmax.f32 %v1682, 0.0
        %v1811 = vmax.f32 %v1683, 0.0
        %v1812 = vmax.f32 %v1684, 0.0
        %v1813 = vmax.f32 %v1685, 0.0
        %v1814 = vmax.f32 %v1686, 0.0
        %v1815 = vmax.f32 %v1687, 0.0
        %v1816 = vmax.f32 %v1688, 0.0
        %v1817 = vmax.f32 %v1689, 0.0
        %v1818 = vmax.f32 %v1690, 0.0
        %v1819 = vmax.f32 %v1691, 0.0
        %v1820 = vmax.f32 %v1692, 0.0
        %v1821 = vmax.f32 %v1693, 0.0
        %v1822 = vmax.f32 %v1694, 0.0
        %v1823 = vmax.f32 %v1695, 0.0
        %v1824 = vmax.f32 %v1696, 0.0
        %v1825 = vmax.f32 %v1697, 0.0
        %v1826 = vmax.f32 %v1698, 0.0
        %v1827 = vmax.f32 %v1699, 0.0
        %v1828 = vmax.f32 %v1700, 0.0
        %v1829 = vmax.f32 %v1701, 0.0
        %v1830 = vmax.f32 %v1702, 0.0
        %v1831 = vmax.f32 %v1703, 0.0
        %v1832 = vmax.f32 %v1704, 0.0
        %v1833 = vmax.f32 %v1705, 0.0
        %v1834 = vmax.f32 %v1706, 0.0
        %v1835 = vmax.f32 %v1707, 0.0
        %v1836 = vmax.f32 %v1708, 0.0
        %v1837 = vmax.f32 %v1709, 0.0
        %v1838 = vmax.f32 %v1710, 0.0
        %v1839 = vmax.f32 %v1711, 0.0
        %v1840 = vmax.f32 %v1712, 0.0
        %v1841 = vmax.f32 %v1713, 0.0
        %v1842 = vmax.f32 %v1714, 0.0
        %v1843 = vmax.f32 %v1715, 0.0
        %v1844 = vmax.f32 %v1716, 0.0
        %v1845 = vmax.f32 %v1717, 0.0
        %v1846 = vmax.f32 %v1718, 0.0
        %v1847 = vmax.f32 %v1719, 0.0
        %v1848 = vmax.f32 %v1720, 0.0
        %v1849 = vld [vmem:[#allocation2] sm:$0xff]
        %v1850 = vld [vmem:[#allocation2 + $0x8] sm:$0xff]
        %v1851 = vld [vmem:[#allocation2 + $0x10] sm:$0xff]
        %v1852 = vld [vmem:[#allocation2 + $0x18] sm:$0xff]
        %v1853 = vld [vmem:[#allocation2 + $0x20] sm:$0xff]
        %v1854 = vld [vmem:[#allocation2 + $0x28] sm:$0xff]
        %v1855 = vld [vmem:[#allocation2 + $0x30] sm:$0xff]
        %v1856 = vld [vmem:[#allocation2 + $0x38] sm:$0xff]
        %v1857 = vld [vmem:[#allocation2 + $0x40] sm:$0xff]
        %v1858 = vld [vmem:[#allocation2 + $0x48] sm:$0xff]
        %v1859 = vld [vmem:[#allocation2 + $0x50] sm:$0xff]
        %v1860 = vld [vmem:[#allocation2 + $0x58] sm:$0xff]
        %v1861 = vld [vmem:[#allocation2 + $0x60] sm:$0xff]
        %v1862 = vld [vmem:[#allocation2 + $0x68] sm:$0xff]
        %v1863 = vld [vmem:[#allocation2 + $0x70] sm:$0xff]
        %v1864 = vld [vmem:[#allocation2 + $0x78] sm:$0xff]
        %v1865 = vld [vmem:[#allocation2 + $0x80] sm:$0xff]
        %v1866 = vld [vmem:[#allocation2 + $0x88] sm:$0xff]
        %v1867 = vld [vmem:[#allocation2 + $0x90] sm:$0xff]
        %v1868 = vld [vmem:[#allocation2 + $0x98] sm:$0xff]
        %v1869 = vld [vmem:[#allocation2 + $0xa0] sm:$0xff]
        %v1870 = vld [vmem:[#allocation2 + $0xa8] sm:$0xff]
        %v1871 = vld [vmem:[#allocation2 + $0xb0] sm:$0xff]
        %v1872 = vld [vmem:[#allocation2 + $0xb8] sm:$0xff]
        %v1873 = vld [vmem:[#allocation2 + $0xc0] sm:$0xff]
        %v1874 = vld [vmem:[#allocation2 + $0xc8] sm:$0xff]
        %v1875 = vld [vmem:[#allocation2 + $0xd0] sm:$0xff]
        %v1876 = vld [vmem:[#allocation2 + $0xd8] sm:$0xff]
        %v1877 = vld [vmem:[#allocation2 + $0xe0] sm:$0xff]
        %v1878 = vld [vmem:[#allocation2 + $0xe8] sm:$0xff]
        %v1879 = vld [vmem:[#allocation2 + $0xf0] sm:$0xff]
        %v1880 = vld [vmem:[#allocation2 + $0xf8] sm:$0xff]
        %v1881 = vld [vmem:[#allocation2 + $0x100] sm:$0xff]
        %v1882 = vld [vmem:[#allocation2 + $0x108] sm:$0xff]
        %v1883 = vld [vmem:[#allocation2 + $0x110] sm:$0xff]
        %v1884 = vld [vmem:[#allocation2 + $0x118] sm:$0xff]
        %v1885 = vld [vmem:[#allocation2 + $0x120] sm:$0xff]
        %v1886 = vld [vmem:[#allocation2 + $0x128] sm:$0xff]
        %v1887 = vld [vmem:[#allocation2 + $0x130] sm:$0xff]
        %v1888 = vld [vmem:[#allocation2 + $0x138] sm:$0xff]
        %v1889 = vld [vmem:[#allocation2 + $0x140] sm:$0xff]
        %v1890 = vld [vmem:[#allocation2 + $0x148] sm:$0xff]
        %v1891 = vld [vmem:[#allocation2 + $0x150] sm:$0xff]
        %v1892 = vld [vmem:[#allocation2 + $0x158] sm:$0xff]
        %v1893 = vld [vmem:[#allocation2 + $0x160] sm:$0xff]
        %v1894 = vld [vmem:[#allocation2 + $0x168] sm:$0xff]
        %v1895 = vld [vmem:[#allocation2 + $0x170] sm:$0xff]
        %v1896 = vld [vmem:[#allocation2 + $0x178] sm:$0xff]
        %v1897 = vld [vmem:[#allocation2 + $0x180] sm:$0xff]
        %v1898 = vld [vmem:[#allocation2 + $0x188] sm:$0xff]
        %v1899 = vld [vmem:[#allocation2 + $0x190] sm:$0xff]
        %v1900 = vld [vmem:[#allocation2 + $0x198] sm:$0xff]
        %v1901 = vld [vmem:[#allocation2 + $0x1a0] sm:$0xff]
        %v1902 = vld [vmem:[#allocation2 + $0x1a8] sm:$0xff]
        %v1903 = vld [vmem:[#allocation2 + $0x1b0] sm:$0xff]
        %v1904 = vld [vmem:[#allocation2 + $0x1b8] sm:$0xff]
        %v1905 = vld [vmem:[#allocation2 + $0x1c0] sm:$0xff]
        %v1906 = vld [vmem:[#allocation2 + $0x1c8] sm:$0xff]
        %v1907 = vld [vmem:[#allocation2 + $0x1d0] sm:$0xff]
        %v1908 = vld [vmem:[#allocation2 + $0x1d8] sm:$0xff]
        %v1909 = vld [vmem:[#allocation2 + $0x1e0] sm:$0xff]
        %v1910 = vld [vmem:[#allocation2 + $0x1e8] sm:$0xff]
        %v1911 = vld [vmem:[#allocation2 + $0x1f0] sm:$0xff]
        %v1912 = vld [vmem:[#allocation2 + $0x1f8] sm:$0xff]
        %v1913 = vld [vmem:[#allocation2 + $0x200] sm:$0xff]
        %v1914 = vld [vmem:[#allocation2 + $0x208] sm:$0xff]
        %v1915 = vld [vmem:[#allocation2 + $0x210] sm:$0xff]
        %v1916 = vld [vmem:[#allocation2 + $0x218] sm:$0xff]
        %v1917 = vld [vmem:[#allocation2 + $0x220] sm:$0xff]
        %v1918 = vld [vmem:[#allocation2 + $0x228] sm:$0xff]
        %v1919 = vld [vmem:[#allocation2 + $0x230] sm:$0xff]
        %v1920 = vld [vmem:[#allocation2 + $0x238] sm:$0xff]
        %v1921 = vld [vmem:[#allocation2 + $0x240] sm:$0xff]
        %v1922 = vld [vmem:[#allocation2 + $0x248] sm:$0xff]
        %v1923 = vld [vmem:[#allocation2 + $0x250] sm:$0xff]
        %v1924 = vld [vmem:[#allocation2 + $0x258] sm:$0xff]
        %v1925 = vld [vmem:[#allocation2 + $0x260] sm:$0xff]
        %v1926 = vld [vmem:[#allocation2 + $0x268] sm:$0xff]
        %v1927 = vld [vmem:[#allocation2 + $0x270] sm:$0xff]
        %v1928 = vld [vmem:[#allocation2 + $0x278] sm:$0xff]
        %v1929 = vld [vmem:[#allocation2 + $0x280] sm:$0xff]
        %v1930 = vld [vmem:[#allocation2 + $0x288] sm:$0xff]
        %v1931 = vld [vmem:[#allocation2 + $0x290] sm:$0xff]
        %v1932 = vld [vmem:[#allocation2 + $0x298] sm:$0xff]
        %v1933 = vld [vmem:[#allocation2 + $0x2a0] sm:$0xff]
        %v1934 = vld [vmem:[#allocation2 + $0x2a8] sm:$0xff]
        %v1935 = vld [vmem:[#allocation2 + $0x2b0] sm:$0xff]
        %v1936 = vld [vmem:[#allocation2 + $0x2b8] sm:$0xff]
        %v1937 = vld [vmem:[#allocation2 + $0x2c0] sm:$0xff]
        %v1938 = vld [vmem:[#allocation2 + $0x2c8] sm:$0xff]
        %v1939 = vld [vmem:[#allocation2 + $0x2d0] sm:$0xff]
        %v1940 = vld [vmem:[#allocation2 + $0x2d8] sm:$0xff]
        %v1941 = vld [vmem:[#allocation2 + $0x2e0] sm:$0xff]
        %v1942 = vld [vmem:[#allocation2 + $0x2e8] sm:$0xff]
        %v1943 = vld [vmem:[#allocation2 + $0x2f0] sm:$0xff]
        %v1944 = vld [vmem:[#allocation2 + $0x2f8] sm:$0xff]
        %v1945 = vld [vmem:[#allocation2 + $0x300] sm:$0xff]
        %v1946 = vld [vmem:[#allocation2 + $0x308] sm:$0xff]
        %v1947 = vld [vmem:[#allocation2 + $0x310] sm:$0xff]
        %v1948 = vld [vmem:[#allocation2 + $0x318] sm:$0xff]
        %v1949 = vld [vmem:[#allocation2 + $0x320] sm:$0xff]
        %v1950 = vld [vmem:[#allocation2 + $0x328] sm:$0xff]
        %v1951 = vld [vmem:[#allocation2 + $0x330] sm:$0xff]
        %v1952 = vld [vmem:[#allocation2 + $0x338] sm:$0xff]
        %v1953 = vld [vmem:[#allocation2 + $0x340] sm:$0xff]
        %v1954 = vld [vmem:[#allocation2 + $0x348] sm:$0xff]
        %v1955 = vld [vmem:[#allocation2 + $0x350] sm:$0xff]
        %v1956 = vld [vmem:[#allocation2 + $0x358] sm:$0xff]
        %v1957 = vld [vmem:[#allocation2 + $0x360] sm:$0xff]
        %v1958 = vld [vmem:[#allocation2 + $0x368] sm:$0xff]
        %v1959 = vld [vmem:[#allocation2 + $0x370] sm:$0xff]
        %v1960 = vld [vmem:[#allocation2 + $0x378] sm:$0xff]
        %v1961 = vld [vmem:[#allocation2 + $0x380] sm:$0xff]
        %v1962 = vld [vmem:[#allocation2 + $0x388] sm:$0xff]
        %v1963 = vld [vmem:[#allocation2 + $0x390] sm:$0xff]
        %v1964 = vld [vmem:[#allocation2 + $0x398] sm:$0xff]
        %v1965 = vld [vmem:[#allocation2 + $0x3a0] sm:$0xff]
        %v1966 = vld [vmem:[#allocation2 + $0x3a8] sm:$0xff]
        %v1967 = vld [vmem:[#allocation2 + $0x3b0] sm:$0xff]
        %v1968 = vld [vmem:[#allocation2 + $0x3b8] sm:$0xff]
        %v1969 = vld [vmem:[#allocation2 + $0x3c0] sm:$0xff]
        %v1970 = vld [vmem:[#allocation2 + $0x3c8] sm:$0xff]
        %v1971 = vld [vmem:[#allocation2 + $0x3d0] sm:$0xff]
        %v1972 = vld [vmem:[#allocation2 + $0x3d8] sm:$0xff]
        %v1973 = vld [vmem:[#allocation2 + $0x3e0] sm:$0xff]
        %v1974 = vld [vmem:[#allocation2 + $0x3e8] sm:$0xff]
        %v1975 = vld [vmem:[#allocation2 + $0x3f0] sm:$0xff]
        %v1976 = vld [vmem:[#allocation2 + $0x3f8] sm:$0xff]
        %v1977 = vadd.f32 %v1849, %v1721
        %v1978 = vadd.f32 %v1850, %v1722
        %v1979 = vadd.f32 %v1851, %v1723
        %v1980 = vadd.f32 %v1852, %v1724
        %v1981 = vadd.f32 %v1853, %v1725
        %v1982 = vadd.f32 %v1854, %v1726
        %v1983 = vadd.f32 %v1855, %v1727
        %v1984 = vadd.f32 %v1856, %v1728
        %v1985 = vadd.f32 %v1857, %v1729
        %v1986 = vadd.f32 %v1858, %v1730
        %v1987 = vadd.f32 %v1859, %v1731
        %v1988 = vadd.f32 %v1860, %v1732
        %v1989 = vadd.f32 %v1861, %v1733
        %v1990 = vadd.f32 %v1862, %v1734
        %v1991 = vadd.f32 %v1863, %v1735
        %v1992 = vadd.f32 %v1864, %v1736
        %v1993 = vadd.f32 %v1865, %v1737
        %v1994 = vadd.f32 %v1866, %v1738
        %v1995 = vadd.f32 %v1867, %v1739
        %v1996 = vadd.f32 %v1868, %v1740
        %v1997 = vadd.f32 %v1869, %v1741
        %v1998 = vadd.f32 %v1870, %v1742
        %v1999 = vadd.f32 %v1871, %v1743
        %v2000 = vadd.f32 %v1872, %v1744
        %v2001 = vadd.f32 %v1873, %v1745
        %v2002 = vadd.f32 %v1874, %v1746
        %v2003 = vadd.f32 %v1875, %v1747
        %v2004 = vadd.f32 %v1876, %v1748
        %v2005 = vadd.f32 %v1877, %v1749
        %v2006 = vadd.f32 %v1878, %v1750
        %v2007 = vadd.f32 %v1879, %v1751
        %v2008 = vadd.f32 %v1880, %v1752
        %v2009 = vadd.f32 %v1881, %v1753
        %v2010 = vadd.f32 %v1882, %v1754
        %v2011 = vadd.f32 %v1883, %v1755
        %v2012 = vadd.f32 %v1884, %v1756
        %v2013 = vadd.f32 %v1885, %v1757
        %v2014 = vadd.f32 %v1886, %v1758
        %v2015 = vadd.f32 %v1887, %v1759
        %v2016 = vadd.f32 %v1888, %v1760
        %v2017 = vadd.f32 %v1889, %v1761
        %v2018 = vadd.f32 %v1890, %v1762
        %v2019 = vadd.f32 %v1891, %v1763
        %v2020 = vadd.f32 %v1892, %v1764
        %v2021 = vadd.f32 %v1893, %v1765
        %v2022 = vadd.f32 %v1894, %v1766
        %v2023 = vadd.f32 %v1895, %v1767
        %v2024 = vadd.f32 %v1896, %v1768
        %v2025 = vadd.f32 %v1897, %v1769
        %v2026 = vadd.f32 %v1898, %v1770
        %v2027 = vadd.f32 %v1899, %v1771
        %v2028 = vadd.f32 %v1900, %v1772
        %v2029 = vadd.f32 %v1901, %v1773
        %v2030 = vadd.f32 %v1902, %v1774
        %v2031 = vadd.f32 %v1903, %v1775
        %v2032 = vadd.f32 %v1904, %v1776
        %v2033 = vadd.f32 %v1905, %v1777
        %v2034 = vadd.f32 %v1906, %v1778
        %v2035 = vadd.f32 %v1907, %v1779
        %v2036 = vadd.f32 %v1908, %v1780
        %v2037 = vadd.f32 %v1909, %v1781
        %v2038 = vadd.f32 %v1910, %v1782
        %v2039 = vadd.f32 %v1911, %v1783
        %v2040 = vadd.f32 %v1912, %v1784
        %v2041 = vadd.f32 %v1913, %v1785
        %v2042 = vadd.f32 %v1914, %v1786
        %v2043 = vadd.f32 %v1915, %v1787
        %v2044 = vadd.f32 %v1916, %v1788
        %v2045 = vadd.f32 %v1917, %v1789
        %v2046 = vadd.f32 %v1918, %v1790
        %v2047 = vadd.f32 %v1919, %v1791
        %v2048 = vadd.f32 %v1920, %v1792
        %v2049 = vadd.f32 %v1921, %v1793
        %v2050 = vadd.f32 %v1922, %v1794
        %v2051 = vadd.f32 %v1923, %v1795
        %v2052 = vadd.f32 %v1924, %v1796
        %v2053 = vadd.f32 %v1925, %v1797
        %v2054 = vadd.f32 %v1926, %v1798
        %v2055 = vadd.f32 %v1927, %v1799
        %v2056 = vadd.f32 %v1928, %v1800
        %v2057 = vadd.f32 %v1929, %v1801
        %v2058 = vadd.f32 %v1930, %v1802
        %v2059 = vadd.f32 %v1931, %v1803
        %v2060 = vadd.f32 %v1932, %v1804
        %v2061 = vadd.f32 %v1933, %v1805
        %v2062 = vadd.f32 %v1934, %v1806
        %v2063 = vadd.f32 %v1935, %v1807
        %v2064 = vadd.f32 %v1936, %v1808
        %v2065 = vadd.f32 %v1937, %v1809
        %v2066 = vadd.f32 %v1938, %v1810
        %v2067 = vadd.f32 %v1939, %v1811
        %v2068 = vadd.f32 %v1940, %v1812
        %v2069 = vadd.f32 %v1941, %v1813
        %v2070 = vadd.f32 %v1942, %v1814
        %v2071 = vadd.f32 %v1943, %v1815
        %v2072 = vadd.f32 %v1944, %v1816
        %v2073 = vadd.f32 %v1945, %v1817
        %v2074 = vadd.f32 %v1946, %v1818
        %v2075 = vadd.f32 %v1947, %v1819
        %v2076 = vadd.f32 %v1948, %v1820
        %v2077 = vadd.f32 %v1949, %v1821
        %v2078 = vadd.f32 %v1950, %v1822
        %v2079 = vadd.f32 %v1951, %v1823
        %v2080 = vadd.f32 %v1952, %v1824
        %v2081 = vadd.f32 %v1953, %v1825
        %v2082 = vadd.f32 %v1954, %v1826
        %v2083 = vadd.f32 %v1955, %v1827
        %v2084 = vadd.f32 %v1956, %v1828
        %v2085 = vadd.f32 %v1957, %v1829
        %v2086 = vadd.f32 %v1958, %v1830
        %v2087 = vadd.f32 %v1959, %v1831
        %v2088 = vadd.f32 %v1960, %v1832
        %v2089 = vadd.f32 %v1961, %v1833
        %v2090 = vadd.f32 %v1962, %v1834
        %v2091 = vadd.f32 %v1963, %v1835
        %v2092 = vadd.f32 %v1964, %v1836
        %v2093 = vadd.f32 %v1965, %v1837
        %v2094 = vadd.f32 %v1966, %v1838
        %v2095 = vadd.f32 %v1967, %v1839
        %v2096 = vadd.f32 %v1968, %v1840
        %v2097 = vadd.f32 %v1969, %v1841
        %v2098 = vadd.f32 %v1970, %v1842
        %v2099 = vadd.f32 %v1971, %v1843
        %v2100 = vadd.f32 %v1972, %v1844
        %v2101 = vadd.f32 %v1973, %v1845
        %v2102 = vadd.f32 %v1974, %v1846
        %v2103 = vadd.f32 %v1975, %v1847
        %v2104 = vadd.f32 %v1976, %v1848
        %2105 = vst [vmem:[#allocation2] sm:$0xff] %v1977
        %2106 = vst [vmem:[#allocation2 + $0x8] sm:$0xff] %v1978
        %2107 = vst [vmem:[#allocation2 + $0x10] sm:$0xff] %v1979
        %2108 = vst [vmem:[#allocation2 + $0x18] sm:$0xff] %v1980
        %2109 = vst [vmem:[#allocation2 + $0x20] sm:$0xff] %v1981
        %2110 = vst [vmem:[#allocation2 + $0x28] sm:$0xff] %v1982
        %2111 = vst [vmem:[#allocation2 + $0x30] sm:$0xff] %v1983
        %2112 = vst [vmem:[#allocation2 + $0x38] sm:$0xff] %v1984
        %2113 = vst [vmem:[#allocation2 + $0x40] sm:$0xff] %v1985
        %2114 = vst [vmem:[#allocation2 + $0x48] sm:$0xff] %v1986
        %2115 = vst [vmem:[#allocation2 + $0x50] sm:$0xff] %v1987
        %2116 = vst [vmem:[#allocation2 + $0x58] sm:$0xff] %v1988
        %2117 = vst [vmem:[#allocation2 + $0x60] sm:$0xff] %v1989
        %2118 = vst [vmem:[#allocation2 + $0x68] sm:$0xff] %v1990
        %2119 = vst [vmem:[#allocation2 + $0x70] sm:$0xff] %v1991
        %2120 = vst [vmem:[#allocation2 + $0x78] sm:$0xff] %v1992
        %2121 = vst [vmem:[#allocation2 + $0x80] sm:$0xff] %v1993
        %2122 = vst [vmem:[#allocation2 + $0x88] sm:$0xff] %v1994
        %2123 = vst [vmem:[#allocation2 + $0x90] sm:$0xff] %v1995
        %2124 = vst [vmem:[#allocation2 + $0x98] sm:$0xff] %v1996
        %2125 = vst [vmem:[#allocation2 + $0xa0] sm:$0xff] %v1997
        %2126 = vst [vmem:[#allocation2 + $0xa8] sm:$0xff] %v1998
        %2127 = vst [vmem:[#allocation2 + $0xb0] sm:$0xff] %v1999
        %2128 = vst [vmem:[#allocation2 + $0xb8] sm:$0xff] %v2000
        %2129 = vst [vmem:[#allocation2 + $0xc0] sm:$0xff] %v2001
        %2130 = vst [vmem:[#allocation2 + $0xc8] sm:$0xff] %v2002
        %2131 = vst [vmem:[#allocation2 + $0xd0] sm:$0xff] %v2003
        %2132 = vst [vmem:[#allocation2 + $0xd8] sm:$0xff] %v2004
        %2133 = vst [vmem:[#allocation2 + $0xe0] sm:$0xff] %v2005
        %2134 = vst [vmem:[#allocation2 + $0xe8] sm:$0xff] %v2006
        %2135 = vst [vmem:[#allocation2 + $0xf0] sm:$0xff] %v2007
        %2136 = vst [vmem:[#allocation2 + $0xf8] sm:$0xff] %v2008
        %2137 = vst [vmem:[#allocation2 + $0x100] sm:$0xff] %v2009
        %2138 = vst [vmem:[#allocation2 + $0x108] sm:$0xff] %v2010
        %2139 = vst [vmem:[#allocation2 + $0x110] sm:$0xff] %v2011
        %2140 = vst [vmem:[#allocation2 + $0x118] sm:$0xff] %v2012
        %2141 = vst [vmem:[#allocation2 + $0x120] sm:$0xff] %v2013
        %2142 = vst [vmem:[#allocation2 + $0x128] sm:$0xff] %v2014
        %2143 = vst [vmem:[#allocation2 + $0x130] sm:$0xff] %v2015
        %2144 = vst [vmem:[#allocation2 + $0x138] sm:$0xff] %v2016
        %2145 = vst [vmem:[#allocation2 + $0x140] sm:$0xff] %v2017
        %2146 = vst [vmem:[#allocation2 + $0x148] sm:$0xff] %v2018
        %2147 = vst [vmem:[#allocation2 + $0x150] sm:$0xff] %v2019
        %2148 = vst [vmem:[#allocation2 + $0x158] sm:$0xff] %v2020
        %2149 = vst [vmem:[#allocation2 + $0x160] sm:$0xff] %v2021
        %2150 = vst [vmem:[#allocation2 + $0x168] sm:$0xff] %v2022
        %2151 = vst [vmem:[#allocation2 + $0x170] sm:$0xff] %v2023
        %2152 = vst [vmem:[#allocation2 + $0x178] sm:$0xff] %v2024
        %2153 = vst [vmem:[#allocation2 + $0x180] sm:$0xff] %v2025
        %2154 = vst [vmem:[#allocation2 + $0x188] sm:$0xff] %v2026
        %2155 = vst [vmem:[#allocation2 + $0x190] sm:$0xff] %v2027
        %2156 = vst [vmem:[#allocation2 + $0x198] sm:$0xff] %v2028
        %2157 = vst [vmem:[#allocation2 + $0x1a0] sm:$0xff] %v2029
        %2158 = vst [vmem:[#allocation2 + $0x1a8] sm:$0xff] %v2030
        %2159 = vst [vmem:[#allocation2 + $0x1b0] sm:$0xff] %v2031
        %2160 = vst [vmem:[#allocation2 + $0x1b8] sm:$0xff] %v2032
        %2161 = vst [vmem:[#allocation2 + $0x1c0] sm:$0xff] %v2033
        %2162 = vst [vmem:[#allocation2 + $0x1c8] sm:$0xff] %v2034
        %2163 = vst [vmem:[#allocation2 + $0x1d0] sm:$0xff] %v2035
        %2164 = vst [vmem:[#allocation2 + $0x1d8] sm:$0xff] %v2036
        %2165 = vst [vmem:[#allocation2 + $0x1e0] sm:$0xff] %v2037
        %2166 = vst [vmem:[#allocation2 + $0x1e8] sm:$0xff] %v2038
        %2167 = vst [vmem:[#allocation2 + $0x1f0] sm:$0xff] %v2039
        %2168 = vst [vmem:[#allocation2 + $0x1f8] sm:$0xff] %v2040
        %2169 = vst [vmem:[#allocation2 + $0x200] sm:$0xff] %v2041
        %2170 = vst [vmem:[#allocation2 + $0x208] sm:$0xff] %v2042
        %2171 = vst [vmem:[#allocation2 + $0x210] sm:$0xff] %v2043
        %2172 = vst [vmem:[#allocation2 + $0x218] sm:$0xff] %v2044
        %2173 = vst [vmem:[#allocation2 + $0x220] sm:$0xff] %v2045
        %2174 = vst [vmem:[#allocation2 + $0x228] sm:$0xff] %v2046
        %2175 = vst [vmem:[#allocation2 + $0x230] sm:$0xff] %v2047
        %2176 = vst [vmem:[#allocation2 + $0x238] sm:$0xff] %v2048
        %2177 = vst [vmem:[#allocation2 + $0x240] sm:$0xff] %v2049
        %2178 = vst [vmem:[#allocation2 + $0x248] sm:$0xff] %v2050
        %2179 = vst [vmem:[#allocation2 + $0x250] sm:$0xff] %v2051
        %2180 = vst [vmem:[#allocation2 + $0x258] sm:$0xff] %v2052
        %2181 = vst [vmem:[#allocation2 + $0x260] sm:$0xff] %v2053
        %2182 = vst [vmem:[#allocation2 + $0x268] sm:$0xff] %v2054
        %2183 = vst [vmem:[#allocation2 + $0x270] sm:$0xff] %v2055
        %2184 = vst [vmem:[#allocation2 + $0x278] sm:$0xff] %v2056
        %2185 = vst [vmem:[#allocation2 + $0x280] sm:$0xff] %v2057
        %2186 = vst [vmem:[#allocation2 + $0x288] sm:$0xff] %v2058
        %2187 = vst [vmem:[#allocation2 + $0x290] sm:$0xff] %v2059
        %2188 = vst [vmem:[#allocation2 + $0x298] sm:$0xff] %v2060
        %2189 = vst [vmem:[#allocation2 + $0x2a0] sm:$0xff] %v2061
        %2190 = vst [vmem:[#allocation2 + $0x2a8] sm:$0xff] %v2062
        %2191 = vst [vmem:[#allocation2 + $0x2b0] sm:$0xff] %v2063
        %2192 = vst [vmem:[#allocation2 + $0x2b8] sm:$0xff] %v2064
        %2193 = vst [vmem:[#allocation2 + $0x2c0] sm:$0xff] %v2065
        %2194 = vst [vmem:[#allocation2 + $0x2c8] sm:$0xff] %v2066
        %2195 = vst [vmem:[#allocation2 + $0x2d0] sm:$0xff] %v2067
        %2196 = vst [vmem:[#allocation2 + $0x2d8] sm:$0xff] %v2068
        %2197 = vst [vmem:[#allocation2 + $0x2e0] sm:$0xff] %v2069
        %2198 = vst [vmem:[#allocation2 + $0x2e8] sm:$0xff] %v2070
        %2199 = vst [vmem:[#allocation2 + $0x2f0] sm:$0xff] %v2071
        %2200 = vst [vmem:[#allocation2 + $0x2f8] sm:$0xff] %v2072
        %2201 = vst [vmem:[#allocation2 + $0x300] sm:$0xff] %v2073
        %2202 = vst [vmem:[#allocation2 + $0x308] sm:$0xff] %v2074
        %2203 = vst [vmem:[#allocation2 + $0x310] sm:$0xff] %v2075
        %2204 = vst [vmem:[#allocation2 + $0x318] sm:$0xff] %v2076
        %2205 = vst [vmem:[#allocation2 + $0x320] sm:$0xff] %v2077
        %2206 = vst [vmem:[#allocation2 + $0x328] sm:$0xff] %v2078
        %2207 = vst [vmem:[#allocation2 + $0x330] sm:$0xff] %v2079
        %2208 = vst [vmem:[#allocation2 + $0x338] sm:$0xff] %v2080
        %2209 = vst [vmem:[#allocation2 + $0x340] sm:$0xff] %v2081
        %2210 = vst [vmem:[#allocation2 + $0x348] sm:$0xff] %v2082
        %2211 = vst [vmem:[#allocation2 + $0x350] sm:$0xff] %v2083
        %2212 = vst [vmem:[#allocation2 + $0x358] sm:$0xff] %v2084
        %2213 = vst [vmem:[#allocation2 + $0x360] sm:$0xff] %v2085
        %2214 = vst [vmem:[#allocation2 + $0x368] sm:$0xff] %v2086
        %2215 = vst [vmem:[#allocation2 + $0x370] sm:$0xff] %v2087
        %2216 = vst [vmem:[#allocation2 + $0x378] sm:$0xff] %v2088
        %2217 = vst [vmem:[#allocation2 + $0x380] sm:$0xff] %v2089
        %2218 = vst [vmem:[#allocation2 + $0x388] sm:$0xff] %v2090
        %2219 = vst [vmem:[#allocation2 + $0x390] sm:$0xff] %v2091
        %2220 = vst [vmem:[#allocation2 + $0x398] sm:$0xff] %v2092
        %2221 = vst [vmem:[#allocation2 + $0x3a0] sm:$0xff] %v2093
        %2222 = vst [vmem:[#allocation2 + $0x3a8] sm:$0xff] %v2094
        %2223 = vst [vmem:[#allocation2 + $0x3b0] sm:$0xff] %v2095
        %2224 = vst [vmem:[#allocation2 + $0x3b8] sm:$0xff] %v2096
        %2225 = vst [vmem:[#allocation2 + $0x3c0] sm:$0xff] %v2097
        %2226 = vst [vmem:[#allocation2 + $0x3c8] sm:$0xff] %v2098
        %2227 = vst [vmem:[#allocation2 + $0x3d0] sm:$0xff] %v2099
        %2228 = vst [vmem:[#allocation2 + $0x3d8] sm:$0xff] %v2100
        %2229 = vst [vmem:[#allocation2 + $0x3e0] sm:$0xff] %v2101
        %2230 = vst [vmem:[#allocation2 + $0x3e8] sm:$0xff] %v2102
        %2231 = vst [vmem:[#allocation2 + $0x3f0] sm:$0xff] %v2103
        %2232 = vst [vmem:[#allocation2 + $0x3f8] sm:$0xff] %v2104
        %s2233 = scalar_lea.vmem %s296, 4
        %v2234 = vld [vmem:[%s2233] sm:$0x7]
        %v2235 = vld [vmem:[#allocation5] sm:$0xff]
        %v2236 = vld [vmem:[#allocation5 + $0x8] sm:$0xff]
        %v2237 = vld [vmem:[#allocation5 + $0x10] sm:$0xff]
        %v2238 = vld [vmem:[#allocation5 + $0x18] sm:$0xff]
        %v2239 = vld [vmem:[#allocation5 + $0x20] sm:$0xff]
        %v2240 = vld [vmem:[#allocation5 + $0x28] sm:$0xff]
        %v2241 = vld [vmem:[#allocation5 + $0x30] sm:$0xff]
        %v2242 = vld [vmem:[#allocation5 + $0x38] sm:$0xff]
        %v2243 = vld [vmem:[#allocation5 + $0x40] sm:$0xff]
        %v2244 = vld [vmem:[#allocation5 + $0x48] sm:$0xff]
        %v2245 = vld [vmem:[#allocation5 + $0x50] sm:$0xff]
        %v2246 = vld [vmem:[#allocation5 + $0x58] sm:$0xff]
        %v2247 = vld [vmem:[#allocation5 + $0x60] sm:$0xff]
        %v2248 = vld [vmem:[#allocation5 + $0x68] sm:$0xff]
        %v2249 = vld [vmem:[#allocation5 + $0x70] sm:$0xff]
        %v2250 = vld [vmem:[#allocation5 + $0x78] sm:$0xff]
        %v2251 = vld [vmem:[#allocation5 + $0x80] sm:$0xff]
        %v2252 = vld [vmem:[#allocation5 + $0x88] sm:$0xff]
        %v2253 = vld [vmem:[#allocation5 + $0x90] sm:$0xff]
        %v2254 = vld [vmem:[#allocation5 + $0x98] sm:$0xff]
        %v2255 = vld [vmem:[#allocation5 + $0xa0] sm:$0xff]
        %v2256 = vld [vmem:[#allocation5 + $0xa8] sm:$0xff]
        %v2257 = vld [vmem:[#allocation5 + $0xb0] sm:$0xff]
        %v2258 = vld [vmem:[#allocation5 + $0xb8] sm:$0xff]
        %v2259 = vld [vmem:[#allocation5 + $0xc0] sm:$0xff]
        %v2260 = vld [vmem:[#allocation5 + $0xc8] sm:$0xff]
        %v2261 = vld [vmem:[#allocation5 + $0xd0] sm:$0xff]
        %v2262 = vld [vmem:[#allocation5 + $0xd8] sm:$0xff]
        %v2263 = vld [vmem:[#allocation5 + $0xe0] sm:$0xff]
        %v2264 = vld [vmem:[#allocation5 + $0xe8] sm:$0xff]
        %v2265 = vld [vmem:[#allocation5 + $0xf0] sm:$0xff]
        %v2266 = vld [vmem:[#allocation5 + $0xf8] sm:$0xff]
        %v2267 = vld [vmem:[#allocation5 + $0x100] sm:$0xff]
        %v2268 = vld [vmem:[#allocation5 + $0x108] sm:$0xff]
        %v2269 = vld [vmem:[#allocation5 + $0x110] sm:$0xff]
        %v2270 = vld [vmem:[#allocation5 + $0x118] sm:$0xff]
        %v2271 = vld [vmem:[#allocation5 + $0x120] sm:$0xff]
        %v2272 = vld [vmem:[#allocation5 + $0x128] sm:$0xff]
        %v2273 = vld [vmem:[#allocation5 + $0x130] sm:$0xff]
        %v2274 = vld [vmem:[#allocation5 + $0x138] sm:$0xff]
        %v2275 = vld [vmem:[#allocation5 + $0x140] sm:$0xff]
        %v2276 = vld [vmem:[#allocation5 + $0x148] sm:$0xff]
        %v2277 = vld [vmem:[#allocation5 + $0x150] sm:$0xff]
        %v2278 = vld [vmem:[#allocation5 + $0x158] sm:$0xff]
        %v2279 = vld [vmem:[#allocation5 + $0x160] sm:$0xff]
        %v2280 = vld [vmem:[#allocation5 + $0x168] sm:$0xff]
        %v2281 = vld [vmem:[#allocation5 + $0x170] sm:$0xff]
        %v2282 = vld [vmem:[#allocation5 + $0x178] sm:$0xff]
        %v2283 = vld [vmem:[#allocation5 + $0x180] sm:$0xff]
        %v2284 = vld [vmem:[#allocation5 + $0x188] sm:$0xff]
        %v2285 = vld [vmem:[#allocation5 + $0x190] sm:$0xff]
        %v2286 = vld [vmem:[#allocation5 + $0x198] sm:$0xff]
        %v2287 = vld [vmem:[#allocation5 + $0x1a0] sm:$0xff]
        %v2288 = vld [vmem:[#allocation5 + $0x1a8] sm:$0xff]
        %v2289 = vld [vmem:[#allocation5 + $0x1b0] sm:$0xff]
        %v2290 = vld [vmem:[#allocation5 + $0x1b8] sm:$0xff]
        %v2291 = vld [vmem:[#allocation5 + $0x1c0] sm:$0xff]
        %v2292 = vld [vmem:[#allocation5 + $0x1c8] sm:$0xff]
        %v2293 = vld [vmem:[#allocation5 + $0x1d0] sm:$0xff]
        %v2294 = vld [vmem:[#allocation5 + $0x1d8] sm:$0xff]
        %v2295 = vld [vmem:[#allocation5 + $0x1e0] sm:$0xff]
        %v2296 = vld [vmem:[#allocation5 + $0x1e8] sm:$0xff]
        %v2297 = vld [vmem:[#allocation5 + $0x1f0] sm:$0xff]
        %v2298 = vld [vmem:[#allocation5 + $0x1f8] sm:$0xff]
        %v2299 = vld [vmem:[#allocation5 + $0x200] sm:$0xff]
        %v2300 = vld [vmem:[#allocation5 + $0x208] sm:$0xff]
        %v2301 = vld [vmem:[#allocation5 + $0x210] sm:$0xff]
        %v2302 = vld [vmem:[#allocation5 + $0x218] sm:$0xff]
        %v2303 = vld [vmem:[#allocation5 + $0x220] sm:$0xff]
        %v2304 = vld [vmem:[#allocation5 + $0x228] sm:$0xff]
        %v2305 = vld [vmem:[#allocation5 + $0x230] sm:$0xff]
        %v2306 = vld [vmem:[#allocation5 + $0x238] sm:$0xff]
        %v2307 = vld [vmem:[#allocation5 + $0x240] sm:$0xff]
        %v2308 = vld [vmem:[#allocation5 + $0x248] sm:$0xff]
        %v2309 = vld [vmem:[#allocation5 + $0x250] sm:$0xff]
        %v2310 = vld [vmem:[#allocation5 + $0x258] sm:$0xff]
        %v2311 = vld [vmem:[#allocation5 + $0x260] sm:$0xff]
        %v2312 = vld [vmem:[#allocation5 + $0x268] sm:$0xff]
        %v2313 = vld [vmem:[#allocation5 + $0x270] sm:$0xff]
        %v2314 = vld [vmem:[#allocation5 + $0x278] sm:$0xff]
        %v2315 = vld [vmem:[#allocation5 + $0x280] sm:$0xff]
        %v2316 = vld [vmem:[#allocation5 + $0x288] sm:$0xff]
        %v2317 = vld [vmem:[#allocation5 + $0x290] sm:$0xff]
        %v2318 = vld [vmem:[#allocation5 + $0x298] sm:$0xff]
        %v2319 = vld [vmem:[#allocation5 + $0x2a0] sm:$0xff]
        %v2320 = vld [vmem:[#allocation5 + $0x2a8] sm:$0xff]
        %v2321 = vld [vmem:[#allocation5 + $0x2b0] sm:$0xff]
        %v2322 = vld [vmem:[#allocation5 + $0x2b8] sm:$0xff]
        %v2323 = vld [vmem:[#allocation5 + $0x2c0] sm:$0xff]
        %v2324 = vld [vmem:[#allocation5 + $0x2c8] sm:$0xff]
        %v2325 = vld [vmem:[#allocation5 + $0x2d0] sm:$0xff]
        %v2326 = vld [vmem:[#allocation5 + $0x2d8] sm:$0xff]
        %v2327 = vld [vmem:[#allocation5 + $0x2e0] sm:$0xff]
        %v2328 = vld [vmem:[#allocation5 + $0x2e8] sm:$0xff]
        %v2329 = vld [vmem:[#allocation5 + $0x2f0] sm:$0xff]
        %v2330 = vld [vmem:[#allocation5 + $0x2f8] sm:$0xff]
        %v2331 = vld [vmem:[#allocation5 + $0x300] sm:$0xff]
        %v2332 = vld [vmem:[#allocation5 + $0x308] sm:$0xff]
        %v2333 = vld [vmem:[#allocation5 + $0x310] sm:$0xff]
        %v2334 = vld [vmem:[#allocation5 + $0x318] sm:$0xff]
        %v2335 = vld [vmem:[#allocation5 + $0x320] sm:$0xff]
        %v2336 = vld [vmem:[#allocation5 + $0x328] sm:$0xff]
        %v2337 = vld [vmem:[#allocation5 + $0x330] sm:$0xff]
        %v2338 = vld [vmem:[#allocation5 + $0x338] sm:$0xff]
        %v2339 = vld [vmem:[#allocation5 + $0x340] sm:$0xff]
        %v2340 = vld [vmem:[#allocation5 + $0x348] sm:$0xff]
        %v2341 = vld [vmem:[#allocation5 + $0x350] sm:$0xff]
        %v2342 = vld [vmem:[#allocation5 + $0x358] sm:$0xff]
        %v2343 = vld [vmem:[#allocation5 + $0x360] sm:$0xff]
        %v2344 = vld [vmem:[#allocation5 + $0x368] sm:$0xff]
        %v2345 = vld [vmem:[#allocation5 + $0x370] sm:$0xff]
        %v2346 = vld [vmem:[#allocation5 + $0x378] sm:$0xff]
        %v2347 = vld [vmem:[#allocation5 + $0x380] sm:$0xff]
        %v2348 = vld [vmem:[#allocation5 + $0x388] sm:$0xff]
        %v2349 = vld [vmem:[#allocation5 + $0x390] sm:$0xff]
        %v2350 = vld [vmem:[#allocation5 + $0x398] sm:$0xff]
        %v2351 = vld [vmem:[#allocation5 + $0x3a0] sm:$0xff]
        %v2352 = vld [vmem:[#allocation5 + $0x3a8] sm:$0xff]
        %v2353 = vld [vmem:[#allocation5 + $0x3b0] sm:$0xff]
        %v2354 = vld [vmem:[#allocation5 + $0x3b8] sm:$0xff]
        %v2355 = vld [vmem:[#allocation5 + $0x3c0] sm:$0xff]
        %v2356 = vld [vmem:[#allocation5 + $0x3c8] sm:$0xff]
        %v2357 = vld [vmem:[#allocation5 + $0x3d0] sm:$0xff]
        %v2358 = vld [vmem:[#allocation5 + $0x3d8] sm:$0xff]
        %v2359 = vld [vmem:[#allocation5 + $0x3e0] sm:$0xff]
        %v2360 = vld [vmem:[#allocation5 + $0x3e8] sm:$0xff]
        %v2361 = vld [vmem:[#allocation5 + $0x3f0] sm:$0xff]
        %v2362 = vld [vmem:[#allocation5 + $0x3f8] sm:$0xff]
        %v2363 = vld [vmem:[#allocation3] sm:$0xff]
        %v2364 = vld [vmem:[#allocation3 + $0x8] sm:$0xff]
        %v2365 = vld [vmem:[#allocation3 + $0x10] sm:$0xff]
        %v2366 = vld [vmem:[#allocation3 + $0x18] sm:$0xff]
        %v2367 = vld [vmem:[#allocation3 + $0x20] sm:$0xff]
        %v2368 = vld [vmem:[#allocation3 + $0x28] sm:$0xff]
        %v2369 = vld [vmem:[#allocation3 + $0x30] sm:$0xff]
        %v2370 = vld [vmem:[#allocation3 + $0x38] sm:$0xff]
        %v2371 = vld [vmem:[#allocation3 + $0x40] sm:$0xff]
        %v2372 = vld [vmem:[#allocation3 + $0x48] sm:$0xff]
        %v2373 = vld [vmem:[#allocation3 + $0x50] sm:$0xff]
        %v2374 = vld [vmem:[#allocation3 + $0x58] sm:$0xff]
        %v2375 = vld [vmem:[#allocation3 + $0x60] sm:$0xff]
        %v2376 = vld [vmem:[#allocation3 + $0x68] sm:$0xff]
        %v2377 = vld [vmem:[#allocation3 + $0x70] sm:$0xff]
        %v2378 = vld [vmem:[#allocation3 + $0x78] sm:$0xff]
        %v2379 = vld [vmem:[#allocation3 + $0x80] sm:$0xff]
        %v2380 = vld [vmem:[#allocation3 + $0x88] sm:$0xff]
        %v2381 = vld [vmem:[#allocation3 + $0x90] sm:$0xff]
        %v2382 = vld [vmem:[#allocation3 + $0x98] sm:$0xff]
        %v2383 = vld [vmem:[#allocation3 + $0xa0] sm:$0xff]
        %v2384 = vld [vmem:[#allocation3 + $0xa8] sm:$0xff]
        %v2385 = vld [vmem:[#allocation3 + $0xb0] sm:$0xff]
        %v2386 = vld [vmem:[#allocation3 + $0xb8] sm:$0xff]
        %v2387 = vld [vmem:[#allocation3 + $0xc0] sm:$0xff]
        %v2388 = vld [vmem:[#allocation3 + $0xc8] sm:$0xff]
        %v2389 = vld [vmem:[#allocation3 + $0xd0] sm:$0xff]
        %v2390 = vld [vmem:[#allocation3 + $0xd8] sm:$0xff]
        %v2391 = vld [vmem:[#allocation3 + $0xe0] sm:$0xff]
        %v2392 = vld [vmem:[#allocation3 + $0xe8] sm:$0xff]
        %v2393 = vld [vmem:[#allocation3 + $0xf0] sm:$0xff]
        %v2394 = vld [vmem:[#allocation3 + $0xf8] sm:$0xff]
        %v2395 = vld [vmem:[#allocation3 + $0x100] sm:$0xff]
        %v2396 = vld [vmem:[#allocation3 + $0x108] sm:$0xff]
        %v2397 = vld [vmem:[#allocation3 + $0x110] sm:$0xff]
        %v2398 = vld [vmem:[#allocation3 + $0x118] sm:$0xff]
        %v2399 = vld [vmem:[#allocation3 + $0x120] sm:$0xff]
        %v2400 = vld [vmem:[#allocation3 + $0x128] sm:$0xff]
        %v2401 = vld [vmem:[#allocation3 + $0x130] sm:$0xff]
        %v2402 = vld [vmem:[#allocation3 + $0x138] sm:$0xff]
        %v2403 = vld [vmem:[#allocation3 + $0x140] sm:$0xff]
        %v2404 = vld [vmem:[#allocation3 + $0x148] sm:$0xff]
        %v2405 = vld [vmem:[#allocation3 + $0x150] sm:$0xff]
        %v2406 = vld [vmem:[#allocation3 + $0x158] sm:$0xff]
        %v2407 = vld [vmem:[#allocation3 + $0x160] sm:$0xff]
        %v2408 = vld [vmem:[#allocation3 + $0x168] sm:$0xff]
        %v2409 = vld [vmem:[#allocation3 + $0x170] sm:$0xff]
        %v2410 = vld [vmem:[#allocation3 + $0x178] sm:$0xff]
        %v2411 = vld [vmem:[#allocation3 + $0x180] sm:$0xff]
        %v2412 = vld [vmem:[#allocation3 + $0x188] sm:$0xff]
        %v2413 = vld [vmem:[#allocation3 + $0x190] sm:$0xff]
        %v2414 = vld [vmem:[#allocation3 + $0x198] sm:$0xff]
        %v2415 = vld [vmem:[#allocation3 + $0x1a0] sm:$0xff]
        %v2416 = vld [vmem:[#allocation3 + $0x1a8] sm:$0xff]
        %v2417 = vld [vmem:[#allocation3 + $0x1b0] sm:$0xff]
        %v2418 = vld [vmem:[#allocation3 + $0x1b8] sm:$0xff]
        %v2419 = vld [vmem:[#allocation3 + $0x1c0] sm:$0xff]
        %v2420 = vld [vmem:[#allocation3 + $0x1c8] sm:$0xff]
        %v2421 = vld [vmem:[#allocation3 + $0x1d0] sm:$0xff]
        %v2422 = vld [vmem:[#allocation3 + $0x1d8] sm:$0xff]
        %v2423 = vld [vmem:[#allocation3 + $0x1e0] sm:$0xff]
        %v2424 = vld [vmem:[#allocation3 + $0x1e8] sm:$0xff]
        %v2425 = vld [vmem:[#allocation3 + $0x1f0] sm:$0xff]
        %v2426 = vld [vmem:[#allocation3 + $0x1f8] sm:$0xff]
        %v2427 = vld [vmem:[#allocation3 + $0x200] sm:$0xff]
        %v2428 = vld [vmem:[#allocation3 + $0x208] sm:$0xff]
        %v2429 = vld [vmem:[#allocation3 + $0x210] sm:$0xff]
        %v2430 = vld [vmem:[#allocation3 + $0x218] sm:$0xff]
        %v2431 = vld [vmem:[#allocation3 + $0x220] sm:$0xff]
        %v2432 = vld [vmem:[#allocation3 + $0x228] sm:$0xff]
        %v2433 = vld [vmem:[#allocation3 + $0x230] sm:$0xff]
        %v2434 = vld [vmem:[#allocation3 + $0x238] sm:$0xff]
        %v2435 = vld [vmem:[#allocation3 + $0x240] sm:$0xff]
        %v2436 = vld [vmem:[#allocation3 + $0x248] sm:$0xff]
        %v2437 = vld [vmem:[#allocation3 + $0x250] sm:$0xff]
        %v2438 = vld [vmem:[#allocation3 + $0x258] sm:$0xff]
        %v2439 = vld [vmem:[#allocation3 + $0x260] sm:$0xff]
        %v2440 = vld [vmem:[#allocation3 + $0x268] sm:$0xff]
        %v2441 = vld [vmem:[#allocation3 + $0x270] sm:$0xff]
        %v2442 = vld [vmem:[#allocation3 + $0x278] sm:$0xff]
        %v2443 = vld [vmem:[#allocation3 + $0x280] sm:$0xff]
        %v2444 = vld [vmem:[#allocation3 + $0x288] sm:$0xff]
        %v2445 = vld [vmem:[#allocation3 + $0x290] sm:$0xff]
        %v2446 = vld [vmem:[#allocation3 + $0x298] sm:$0xff]
        %v2447 = vld [vmem:[#allocation3 + $0x2a0] sm:$0xff]
        %v2448 = vld [vmem:[#allocation3 + $0x2a8] sm:$0xff]
        %v2449 = vld [vmem:[#allocation3 + $0x2b0] sm:$0xff]
        %v2450 = vld [vmem:[#allocation3 + $0x2b8] sm:$0xff]
        %v2451 = vld [vmem:[#allocation3 + $0x2c0] sm:$0xff]
        %v2452 = vld [vmem:[#allocation3 + $0x2c8] sm:$0xff]
        %v2453 = vld [vmem:[#allocation3 + $0x2d0] sm:$0xff]
        %v2454 = vld [vmem:[#allocation3 + $0x2d8] sm:$0xff]
        %v2455 = vld [vmem:[#allocation3 + $0x2e0] sm:$0xff]
        %v2456 = vld [vmem:[#allocation3 + $0x2e8] sm:$0xff]
        %v2457 = vld [vmem:[#allocation3 + $0x2f0] sm:$0xff]
        %v2458 = vld [vmem:[#allocation3 + $0x2f8] sm:$0xff]
        %v2459 = vld [vmem:[#allocation3 + $0x300] sm:$0xff]
        %v2460 = vld [vmem:[#allocation3 + $0x308] sm:$0xff]
        %v2461 = vld [vmem:[#allocation3 + $0x310] sm:$0xff]
        %v2462 = vld [vmem:[#allocation3 + $0x318] sm:$0xff]
        %v2463 = vld [vmem:[#allocation3 + $0x320] sm:$0xff]
        %v2464 = vld [vmem:[#allocation3 + $0x328] sm:$0xff]
        %v2465 = vld [vmem:[#allocation3 + $0x330] sm:$0xff]
        %v2466 = vld [vmem:[#allocation3 + $0x338] sm:$0xff]
        %v2467 = vld [vmem:[#allocation3 + $0x340] sm:$0xff]
        %v2468 = vld [vmem:[#allocation3 + $0x348] sm:$0xff]
        %v2469 = vld [vmem:[#allocation3 + $0x350] sm:$0xff]
        %v2470 = vld [vmem:[#allocation3 + $0x358] sm:$0xff]
        %v2471 = vld [vmem:[#allocation3 + $0x360] sm:$0xff]
        %v2472 = vld [vmem:[#allocation3 + $0x368] sm:$0xff]
        %v2473 = vld [vmem:[#allocation3 + $0x370] sm:$0xff]
        %v2474 = vld [vmem:[#allocation3 + $0x378] sm:$0xff]
        %v2475 = vld [vmem:[#allocation3 + $0x380] sm:$0xff]
        %v2476 = vld [vmem:[#allocation3 + $0x388] sm:$0xff]
        %v2477 = vld [vmem:[#allocation3 + $0x390] sm:$0xff]
        %v2478 = vld [vmem:[#allocation3 + $0x398] sm:$0xff]
        %v2479 = vld [vmem:[#allocation3 + $0x3a0] sm:$0xff]
        %v2480 = vld [vmem:[#allocation3 + $0x3a8] sm:$0xff]
        %v2481 = vld [vmem:[#allocation3 + $0x3b0] sm:$0xff]
        %v2482 = vld [vmem:[#allocation3 + $0x3b8] sm:$0xff]
        %v2483 = vld [vmem:[#allocation3 + $0x3c0] sm:$0xff]
        %v2484 = vld [vmem:[#allocation3 + $0x3c8] sm:$0xff]
        %v2485 = vld [vmem:[#allocation3 + $0x3d0] sm:$0xff]
        %v2486 = vld [vmem:[#allocation3 + $0x3d8] sm:$0xff]
        %v2487 = vld [vmem:[#allocation3 + $0x3e0] sm:$0xff]
        %v2488 = vld [vmem:[#allocation3 + $0x3e8] sm:$0xff]
        %v2489 = vld [vmem:[#allocation3 + $0x3f0] sm:$0xff]
        %v2490 = vld [vmem:[#allocation3 + $0x3f8] sm:$0xff]
        %v2491 = vperm.slane %v2234, 0
        %v2492 = vmul.f32 %v2363, %v2491
        %v2493 = vmul.f32 %v2364, %v2491
        %v2494 = vmul.f32 %v2365, %v2491
        %v2495 = vmul.f32 %v2366, %v2491
        %v2496 = vmul.f32 %v2367, %v2491
        %v2497 = vmul.f32 %v2368, %v2491
        %v2498 = vmul.f32 %v2369, %v2491
        %v2499 = vmul.f32 %v2370, %v2491
        %v2500 = vmul.f32 %v2371, %v2491
        %v2501 = vmul.f32 %v2372, %v2491
        %v2502 = vmul.f32 %v2373, %v2491
        %v2503 = vmul.f32 %v2374, %v2491
        %v2504 = vmul.f32 %v2375, %v2491
        %v2505 = vmul.f32 %v2376, %v2491
        %v2506 = vmul.f32 %v2377, %v2491
        %v2507 = vmul.f32 %v2378, %v2491
        %v2508 = vmul.f32 %v2379, %v2491
        %v2509 = vmul.f32 %v2380, %v2491
        %v2510 = vmul.f32 %v2381, %v2491
        %v2511 = vmul.f32 %v2382, %v2491
        %v2512 = vmul.f32 %v2383, %v2491
        %v2513 = vmul.f32 %v2384, %v2491
        %v2514 = vmul.f32 %v2385, %v2491
        %v2515 = vmul.f32 %v2386, %v2491
        %v2516 = vmul.f32 %v2387, %v2491
        %v2517 = vmul.f32 %v2388, %v2491
        %v2518 = vmul.f32 %v2389, %v2491
        %v2519 = vmul.f32 %v2390, %v2491
        %v2520 = vmul.f32 %v2391, %v2491
        %v2521 = vmul.f32 %v2392, %v2491
        %v2522 = vmul.f32 %v2393, %v2491
        %v2523 = vmul.f32 %v2394, %v2491
        %v2524 = vmul.f32 %v2395, %v2491
        %v2525 = vmul.f32 %v2396, %v2491
        %v2526 = vmul.f32 %v2397, %v2491
        %v2527 = vmul.f32 %v2398, %v2491
        %v2528 = vmul.f32 %v2399, %v2491
        %v2529 = vmul.f32 %v2400, %v2491
        %v2530 = vmul.f32 %v2401, %v2491
        %v2531 = vmul.f32 %v2402, %v2491
        %v2532 = vmul.f32 %v2403, %v2491
        %v2533 = vmul.f32 %v2404, %v2491
        %v2534 = vmul.f32 %v2405, %v2491
        %v2535 = vmul.f32 %v2406, %v2491
        %v2536 = vmul.f32 %v2407, %v2491
        %v2537 = vmul.f32 %v2408, %v2491
        %v2538 = vmul.f32 %v2409, %v2491
        %v2539 = vmul.f32 %v2410, %v2491
        %v2540 = vmul.f32 %v2411, %v2491
        %v2541 = vmul.f32 %v2412, %v2491
        %v2542 = vmul.f32 %v2413, %v2491
        %v2543 = vmul.f32 %v2414, %v2491
        %v2544 = vmul.f32 %v2415, %v2491
        %v2545 = vmul.f32 %v2416, %v2491
        %v2546 = vmul.f32 %v2417, %v2491
        %v2547 = vmul.f32 %v2418, %v2491
        %v2548 = vmul.f32 %v2419, %v2491
        %v2549 = vmul.f32 %v2420, %v2491
        %v2550 = vmul.f32 %v2421, %v2491
        %v2551 = vmul.f32 %v2422, %v2491
        %v2552 = vmul.f32 %v2423, %v2491
        %v2553 = vmul.f32 %v2424, %v2491
        %v2554 = vmul.f32 %v2425, %v2491
        %v2555 = vmul.f32 %v2426, %v2491
        %v2556 = vmul.f32 %v2427, %v2491
        %v2557 = vmul.f32 %v2428, %v2491
        %v2558 = vmul.f32 %v2429, %v2491
        %v2559 = vmul.f32 %v2430, %v2491
        %v2560 = vmul.f32 %v2431, %v2491
        %v2561 = vmul.f32 %v2432, %v2491
        %v2562 = vmul.f32 %v2433, %v2491
        %v2563 = vmul.f32 %v2434, %v2491
        %v2564 = vmul.f32 %v2435, %v2491
        %v2565 = vmul.f32 %v2436, %v2491
        %v2566 = vmul.f32 %v2437, %v2491
        %v2567 = vmul.f32 %v2438, %v2491
        %v2568 = vmul.f32 %v2439, %v2491
        %v2569 = vmul.f32 %v2440, %v2491
        %v2570 = vmul.f32 %v2441, %v2491
        %v2571 = vmul.f32 %v2442, %v2491
        %v2572 = vmul.f32 %v2443, %v2491
        %v2573 = vmul.f32 %v2444, %v2491
        %v2574 = vmul.f32 %v2445, %v2491
        %v2575 = vmul.f32 %v2446, %v2491
        %v2576 = vmul.f32 %v2447, %v2491
        %v2577 = vmul.f32 %v2448, %v2491
        %v2578 = vmul.f32 %v2449, %v2491
        %v2579 = vmul.f32 %v2450, %v2491
        %v2580 = vmul.f32 %v2451, %v2491
        %v2581 = vmul.f32 %v2452, %v2491
        %v2582 = vmul.f32 %v2453, %v2491
        %v2583 = vmul.f32 %v2454, %v2491
        %v2584 = vmul.f32 %v2455, %v2491
        %v2585 = vmul.f32 %v2456, %v2491
        %v2586 = vmul.f32 %v2457, %v2491
        %v2587 = vmul.f32 %v2458, %v2491
        %v2588 = vmul.f32 %v2459, %v2491
        %v2589 = vmul.f32 %v2460, %v2491
        %v2590 = vmul.f32 %v2461, %v2491
        %v2591 = vmul.f32 %v2462, %v2491
        %v2592 = vmul.f32 %v2463, %v2491
        %v2593 = vmul.f32 %v2464, %v2491
        %v2594 = vmul.f32 %v2465, %v2491
        %v2595 = vmul.f32 %v2466, %v2491
        %v2596 = vmul.f32 %v2467, %v2491
        %v2597 = vmul.f32 %v2468, %v2491
        %v2598 = vmul.f32 %v2469, %v2491
        %v2599 = vmul.f32 %v2470, %v2491
        %v2600 = vmul.f32 %v2471, %v2491
        %v2601 = vmul.f32 %v2472, %v2491
        %v2602 = vmul.f32 %v2473, %v2491
        %v2603 = vmul.f32 %v2474, %v2491
        %v2604 = vmul.f32 %v2475, %v2491
        %v2605 = vmul.f32 %v2476, %v2491
        %v2606 = vmul.f32 %v2477, %v2491
        %v2607 = vmul.f32 %v2478, %v2491
        %v2608 = vmul.f32 %v2479, %v2491
        %v2609 = vmul.f32 %v2480, %v2491
        %v2610 = vmul.f32 %v2481, %v2491
        %v2611 = vmul.f32 %v2482, %v2491
        %v2612 = vmul.f32 %v2483, %v2491
        %v2613 = vmul.f32 %v2484, %v2491
        %v2614 = vmul.f32 %v2485, %v2491
        %v2615 = vmul.f32 %v2486, %v2491
        %v2616 = vmul.f32 %v2487, %v2491
        %v2617 = vmul.f32 %v2488, %v2491
        %v2618 = vmul.f32 %v2489, %v2491
        %v2619 = vmul.f32 %v2490, %v2491
        %v2620 = vadd.f32 %v2235, %v2492
        %v2621 = vadd.f32 %v2236, %v2493
        %v2622 = vadd.f32 %v2237, %v2494
        %v2623 = vadd.f32 %v2238, %v2495
        %v2624 = vadd.f32 %v2239, %v2496
        %v2625 = vadd.f32 %v2240, %v2497
        %v2626 = vadd.f32 %v2241, %v2498
        %v2627 = vadd.f32 %v2242, %v2499
        %v2628 = vadd.f32 %v2243, %v2500
        %v2629 = vadd.f32 %v2244, %v2501
        %v2630 = vadd.f32 %v2245, %v2502
        %v2631 = vadd.f32 %v2246, %v2503
        %v2632 = vadd.f32 %v2247, %v2504
        %v2633 = vadd.f32 %v2248, %v2505
        %v2634 = vadd.f32 %v2249, %v2506
        %v2635 = vadd.f32 %v2250, %v2507
        %v2636 = vadd.f32 %v2251, %v2508
        %v2637 = vadd.f32 %v2252, %v2509
        %v2638 = vadd.f32 %v2253, %v2510
        %v2639 = vadd.f32 %v2254, %v2511
        %v2640 = vadd.f32 %v2255, %v2512
        %v2641 = vadd.f32 %v2256, %v2513
        %v2642 = vadd.f32 %v2257, %v2514
        %v2643 = vadd.f32 %v2258, %v2515
        %v2644 = vadd.f32 %v2259, %v2516
        %v2645 = vadd.f32 %v2260, %v2517
        %v2646 = vadd.f32 %v2261, %v2518
        %v2647 = vadd.f32 %v2262, %v2519
        %v2648 = vadd.f32 %v2263, %v2520
        %v2649 = vadd.f32 %v2264, %v2521
        %v2650 = vadd.f32 %v2265, %v2522
        %v2651 = vadd.f32 %v2266, %v2523
        %v2652 = vadd.f32 %v2267, %v2524
        %v2653 = vadd.f32 %v2268, %v2525
        %v2654 = vadd.f32 %v2269, %v2526
        %v2655 = vadd.f32 %v2270, %v2527
        %v2656 = vadd.f32 %v2271, %v2528
        %v2657 = vadd.f32 %v2272, %v2529
        %v2658 = vadd.f32 %v2273, %v2530
        %v2659 = vadd.f32 %v2274, %v2531
        %v2660 = vadd.f32 %v2275, %v2532
        %v2661 = vadd.f32 %v2276, %v2533
        %v2662 = vadd.f32 %v2277, %v2534
        %v2663 = vadd.f32 %v2278, %v2535
        %v2664 = vadd.f32 %v2279, %v2536
        %v2665 = vadd.f32 %v2280, %v2537
        %v2666 = vadd.f32 %v2281, %v2538
        %v2667 = vadd.f32 %v2282, %v2539
        %v2668 = vadd.f32 %v2283, %v2540
        %v2669 = vadd.f32 %v2284, %v2541
        %v2670 = vadd.f32 %v2285, %v2542
        %v2671 = vadd.f32 %v2286, %v2543
        %v2672 = vadd.f32 %v2287, %v2544
        %v2673 = vadd.f32 %v2288, %v2545
        %v2674 = vadd.f32 %v2289, %v2546
        %v2675 = vadd.f32 %v2290, %v2547
        %v2676 = vadd.f32 %v2291, %v2548
        %v2677 = vadd.f32 %v2292, %v2549
        %v2678 = vadd.f32 %v2293, %v2550
        %v2679 = vadd.f32 %v2294, %v2551
        %v2680 = vadd.f32 %v2295, %v2552
        %v2681 = vadd.f32 %v2296, %v2553
        %v2682 = vadd.f32 %v2297, %v2554
        %v2683 = vadd.f32 %v2298, %v2555
        %v2684 = vadd.f32 %v2299, %v2556
        %v2685 = vadd.f32 %v2300, %v2557
        %v2686 = vadd.f32 %v2301, %v2558
        %v2687 = vadd.f32 %v2302, %v2559
        %v2688 = vadd.f32 %v2303, %v2560
        %v2689 = vadd.f32 %v2304, %v2561
        %v2690 = vadd.f32 %v2305, %v2562
        %v2691 = vadd.f32 %v2306, %v2563
        %v2692 = vadd.f32 %v2307, %v2564
        %v2693 = vadd.f32 %v2308, %v2565
        %v2694 = vadd.f32 %v2309, %v2566
        %v2695 = vadd.f32 %v2310, %v2567
        %v2696 = vadd.f32 %v2311, %v2568
        %v2697 = vadd.f32 %v2312, %v2569
        %v2698 = vadd.f32 %v2313, %v2570
        %v2699 = vadd.f32 %v2314, %v2571
        %v2700 = vadd.f32 %v2315, %v2572
        %v2701 = vadd.f32 %v2316, %v2573
        %v2702 = vadd.f32 %v2317, %v2574
        %v2703 = vadd.f32 %v2318, %v2575
        %v2704 = vadd.f32 %v2319, %v2576
        %v2705 = vadd.f32 %v2320, %v2577
        %v2706 = vadd.f32 %v2321, %v2578
        %v2707 = vadd.f32 %v2322, %v2579
        %v2708 = vadd.f32 %v2323, %v2580
        %v2709 = vadd.f32 %v2324, %v2581
        %v2710 = vadd.f32 %v2325, %v2582
        %v2711 = vadd.f32 %v2326, %v2583
        %v2712 = vadd.f32 %v2327, %v2584
        %v2713 = vadd.f32 %v2328, %v2585
        %v2714 = vadd.f32 %v2329, %v2586
        %v2715 = vadd.f32 %v2330, %v2587
        %v2716 = vadd.f32 %v2331, %v2588
        %v2717 = vadd.f32 %v2332, %v2589
        %v2718 = vadd.f32 %v2333, %v2590
        %v2719 = vadd.f32 %v2334, %v2591
        %v2720 = vadd.f32 %v2335, %v2592
        %v2721 = vadd.f32 %v2336, %v2593
        %v2722 = vadd.f32 %v2337, %v2594
        %v2723 = vadd.f32 %v2338, %v2595
        %v2724 = vadd.f32 %v2339, %v2596
        %v2725 = vadd.f32 %v2340, %v2597
        %v2726 = vadd.f32 %v2341, %v2598
        %v2727 = vadd.f32 %v2342, %v2599
        %v2728 = vadd.f32 %v2343, %v2600
        %v2729 = vadd.f32 %v2344, %v2601
        %v2730 = vadd.f32 %v2345, %v2602
        %v2731 = vadd.f32 %v2346, %v2603
        %v2732 = vadd.f32 %v2347, %v2604
        %v2733 = vadd.f32 %v2348, %v2605
        %v2734 = vadd.f32 %v2349, %v2606
        %v2735 = vadd.f32 %v2350, %v2607
        %v2736 = vadd.f32 %v2351, %v2608
        %v2737 = vadd.f32 %v2352, %v2609
        %v2738 = vadd.f32 %v2353, %v2610
        %v2739 = vadd.f32 %v2354, %v2611
        %v2740 = vadd.f32 %v2355, %v2612
        %v2741 = vadd.f32 %v2356, %v2613
        %v2742 = vadd.f32 %v2357, %v2614
        %v2743 = vadd.f32 %v2358, %v2615
        %v2744 = vadd.f32 %v2359, %v2616
        %v2745 = vadd.f32 %v2360, %v2617
        %v2746 = vadd.f32 %v2361, %v2618
        %v2747 = vadd.f32 %v2362, %v2619
        %v2748 = vld [vmem:[%s949] sm:$0xff]
        %v2749 = vld [vmem:[%s949 + $0x8] sm:$0xff]
        %v2750 = vld [vmem:[%s949 + $0x10] sm:$0xff]
        %v2751 = vld [vmem:[%s949 + $0x18] sm:$0xff]
        %v2752 = vld [vmem:[%s949 + $0x20] sm:$0xff]
        %v2753 = vld [vmem:[%s949 + $0x28] sm:$0xff]
        %v2754 = vld [vmem:[%s949 + $0x30] sm:$0xff]
        %v2755 = vld [vmem:[%s949 + $0x38] sm:$0xff]
        %v2756 = vld [vmem:[%s949 + $0x40] sm:$0xff]
        %v2757 = vld [vmem:[%s949 + $0x48] sm:$0xff]
        %v2758 = vld [vmem:[%s949 + $0x50] sm:$0xff]
        %v2759 = vld [vmem:[%s949 + $0x58] sm:$0xff]
        %v2760 = vld [vmem:[%s949 + $0x60] sm:$0xff]
        %v2761 = vld [vmem:[%s949 + $0x68] sm:$0xff]
        %v2762 = vld [vmem:[%s949 + $0x70] sm:$0xff]
        %v2763 = vld [vmem:[%s949 + $0x78] sm:$0xff]
        %v2764 = vld [vmem:[%s949 + $0x80] sm:$0xff]
        %v2765 = vld [vmem:[%s949 + $0x88] sm:$0xff]
        %v2766 = vld [vmem:[%s949 + $0x90] sm:$0xff]
        %v2767 = vld [vmem:[%s949 + $0x98] sm:$0xff]
        %v2768 = vld [vmem:[%s949 + $0xa0] sm:$0xff]
        %v2769 = vld [vmem:[%s949 + $0xa8] sm:$0xff]
        %v2770 = vld [vmem:[%s949 + $0xb0] sm:$0xff]
        %v2771 = vld [vmem:[%s949 + $0xb8] sm:$0xff]
        %v2772 = vld [vmem:[%s949 + $0xc0] sm:$0xff]
        %v2773 = vld [vmem:[%s949 + $0xc8] sm:$0xff]
        %v2774 = vld [vmem:[%s949 + $0xd0] sm:$0xff]
        %v2775 = vld [vmem:[%s949 + $0xd8] sm:$0xff]
        %v2776 = vld [vmem:[%s949 + $0xe0] sm:$0xff]
        %v2777 = vld [vmem:[%s949 + $0xe8] sm:$0xff]
        %v2778 = vld [vmem:[%s949 + $0xf0] sm:$0xff]
        %v2779 = vld [vmem:[%s949 + $0xf8] sm:$0xff]
        %v2780 = vld [vmem:[%s949 + $0x100] sm:$0xff]
        %v2781 = vld [vmem:[%s949 + $0x108] sm:$0xff]
        %v2782 = vld [vmem:[%s949 + $0x110] sm:$0xff]
        %v2783 = vld [vmem:[%s949 + $0x118] sm:$0xff]
        %v2784 = vld [vmem:[%s949 + $0x120] sm:$0xff]
        %v2785 = vld [vmem:[%s949 + $0x128] sm:$0xff]
        %v2786 = vld [vmem:[%s949 + $0x130] sm:$0xff]
        %v2787 = vld [vmem:[%s949 + $0x138] sm:$0xff]
        %v2788 = vld [vmem:[%s949 + $0x140] sm:$0xff]
        %v2789 = vld [vmem:[%s949 + $0x148] sm:$0xff]
        %v2790 = vld [vmem:[%s949 + $0x150] sm:$0xff]
        %v2791 = vld [vmem:[%s949 + $0x158] sm:$0xff]
        %v2792 = vld [vmem:[%s949 + $0x160] sm:$0xff]
        %v2793 = vld [vmem:[%s949 + $0x168] sm:$0xff]
        %v2794 = vld [vmem:[%s949 + $0x170] sm:$0xff]
        %v2795 = vld [vmem:[%s949 + $0x178] sm:$0xff]
        %v2796 = vld [vmem:[%s949 + $0x180] sm:$0xff]
        %v2797 = vld [vmem:[%s949 + $0x188] sm:$0xff]
        %v2798 = vld [vmem:[%s949 + $0x190] sm:$0xff]
        %v2799 = vld [vmem:[%s949 + $0x198] sm:$0xff]
        %v2800 = vld [vmem:[%s949 + $0x1a0] sm:$0xff]
        %v2801 = vld [vmem:[%s949 + $0x1a8] sm:$0xff]
        %v2802 = vld [vmem:[%s949 + $0x1b0] sm:$0xff]
        %v2803 = vld [vmem:[%s949 + $0x1b8] sm:$0xff]
        %v2804 = vld [vmem:[%s949 + $0x1c0] sm:$0xff]
        %v2805 = vld [vmem:[%s949 + $0x1c8] sm:$0xff]
        %v2806 = vld [vmem:[%s949 + $0x1d0] sm:$0xff]
        %v2807 = vld [vmem:[%s949 + $0x1d8] sm:$0xff]
        %v2808 = vld [vmem:[%s949 + $0x1e0] sm:$0xff]
        %v2809 = vld [vmem:[%s949 + $0x1e8] sm:$0xff]
        %v2810 = vld [vmem:[%s949 + $0x1f0] sm:$0xff]
        %v2811 = vld [vmem:[%s949 + $0x1f8] sm:$0xff]
        %v2812 = vld [vmem:[%s949 + $0x200] sm:$0xff]
        %v2813 = vld [vmem:[%s949 + $0x208] sm:$0xff]
        %v2814 = vld [vmem:[%s949 + $0x210] sm:$0xff]
        %v2815 = vld [vmem:[%s949 + $0x218] sm:$0xff]
        %v2816 = vld [vmem:[%s949 + $0x220] sm:$0xff]
        %v2817 = vld [vmem:[%s949 + $0x228] sm:$0xff]
        %v2818 = vld [vmem:[%s949 + $0x230] sm:$0xff]
        %v2819 = vld [vmem:[%s949 + $0x238] sm:$0xff]
        %v2820 = vld [vmem:[%s949 + $0x240] sm:$0xff]
        %v2821 = vld [vmem:[%s949 + $0x248] sm:$0xff]
        %v2822 = vld [vmem:[%s949 + $0x250] sm:$0xff]
        %v2823 = vld [vmem:[%s949 + $0x258] sm:$0xff]
        %v2824 = vld [vmem:[%s949 + $0x260] sm:$0xff]
        %v2825 = vld [vmem:[%s949 + $0x268] sm:$0xff]
        %v2826 = vld [vmem:[%s949 + $0x270] sm:$0xff]
        %v2827 = vld [vmem:[%s949 + $0x278] sm:$0xff]
        %v2828 = vld [vmem:[%s949 + $0x280] sm:$0xff]
        %v2829 = vld [vmem:[%s949 + $0x288] sm:$0xff]
        %v2830 = vld [vmem:[%s949 + $0x290] sm:$0xff]
        %v2831 = vld [vmem:[%s949 + $0x298] sm:$0xff]
        %v2832 = vld [vmem:[%s949 + $0x2a0] sm:$0xff]
        %v2833 = vld [vmem:[%s949 + $0x2a8] sm:$0xff]
        %v2834 = vld [vmem:[%s949 + $0x2b0] sm:$0xff]
        %v2835 = vld [vmem:[%s949 + $0x2b8] sm:$0xff]
        %v2836 = vld [vmem:[%s949 + $0x2c0] sm:$0xff]
        %v2837 = vld [vmem:[%s949 + $0x2c8] sm:$0xff]
        %v2838 = vld [vmem:[%s949 + $0x2d0] sm:$0xff]
        %v2839 = vld [vmem:[%s949 + $0x2d8] sm:$0xff]
        %v2840 = vld [vmem:[%s949 + $0x2e0] sm:$0xff]
        %v2841 = vld [vmem:[%s949 + $0x2e8] sm:$0xff]
        %v2842 = vld [vmem:[%s949 + $0x2f0] sm:$0xff]
        %v2843 = vld [vmem:[%s949 + $0x2f8] sm:$0xff]
        %v2844 = vld [vmem:[%s949 + $0x300] sm:$0xff]
        %v2845 = vld [vmem:[%s949 + $0x308] sm:$0xff]
        %v2846 = vld [vmem:[%s949 + $0x310] sm:$0xff]
        %v2847 = vld [vmem:[%s949 + $0x318] sm:$0xff]
        %v2848 = vld [vmem:[%s949 + $0x320] sm:$0xff]
        %v2849 = vld [vmem:[%s949 + $0x328] sm:$0xff]
        %v2850 = vld [vmem:[%s949 + $0x330] sm:$0xff]
        %v2851 = vld [vmem:[%s949 + $0x338] sm:$0xff]
        %v2852 = vld [vmem:[%s949 + $0x340] sm:$0xff]
        %v2853 = vld [vmem:[%s949 + $0x348] sm:$0xff]
        %v2854 = vld [vmem:[%s949 + $0x350] sm:$0xff]
        %v2855 = vld [vmem:[%s949 + $0x358] sm:$0xff]
        %v2856 = vld [vmem:[%s949 + $0x360] sm:$0xff]
        %v2857 = vld [vmem:[%s949 + $0x368] sm:$0xff]
        %v2858 = vld [vmem:[%s949 + $0x370] sm:$0xff]
        %v2859 = vld [vmem:[%s949 + $0x378] sm:$0xff]
        %v2860 = vld [vmem:[%s949 + $0x380] sm:$0xff]
        %v2861 = vld [vmem:[%s949 + $0x388] sm:$0xff]
        %v2862 = vld [vmem:[%s949 + $0x390] sm:$0xff]
        %v2863 = vld [vmem:[%s949 + $0x398] sm:$0xff]
        %v2864 = vld [vmem:[%s949 + $0x3a0] sm:$0xff]
        %v2865 = vld [vmem:[%s949 + $0x3a8] sm:$0xff]
        %v2866 = vld [vmem:[%s949 + $0x3b0] sm:$0xff]
        %v2867 = vld [vmem:[%s949 + $0x3b8] sm:$0xff]
        %v2868 = vld [vmem:[%s949 + $0x3c0] sm:$0xff]
        %v2869 = vld [vmem:[%s949 + $0x3c8] sm:$0xff]
        %v2870 = vld [vmem:[%s949 + $0x3d0] sm:$0xff]
        %v2871 = vld [vmem:[%s949 + $0x3d8] sm:$0xff]
        %v2872 = vld [vmem:[%s949 + $0x3e0] sm:$0xff]
        %v2873 = vld [vmem:[%s949 + $0x3e8] sm:$0xff]
        %v2874 = vld [vmem:[%s949 + $0x3f0] sm:$0xff]
        %v2875 = vld [vmem:[%s949 + $0x3f8] sm:$0xff]
        %v2876 = vperm.slane %v2234, 1
        %v2877 = vmul.f32 %v2748, %v2876
        %v2878 = vmul.f32 %v2749, %v2876
        %v2879 = vmul.f32 %v2750, %v2876
        %v2880 = vmul.f32 %v2751, %v2876
        %v2881 = vmul.f32 %v2752, %v2876
        %v2882 = vmul.f32 %v2753, %v2876
        %v2883 = vmul.f32 %v2754, %v2876
        %v2884 = vmul.f32 %v2755, %v2876
        %v2885 = vmul.f32 %v2756, %v2876
        %v2886 = vmul.f32 %v2757, %v2876
        %v2887 = vmul.f32 %v2758, %v2876
        %v2888 = vmul.f32 %v2759, %v2876
        %v2889 = vmul.f32 %v2760, %v2876
        %v2890 = vmul.f32 %v2761, %v2876
        %v2891 = vmul.f32 %v2762, %v2876
        %v2892 = vmul.f32 %v2763, %v2876
        %v2893 = vmul.f32 %v2764, %v2876
        %v2894 = vmul.f32 %v2765, %v2876
        %v2895 = vmul.f32 %v2766, %v2876
        %v2896 = vmul.f32 %v2767, %v2876
        %v2897 = vmul.f32 %v2768, %v2876
        %v2898 = vmul.f32 %v2769, %v2876
        %v2899 = vmul.f32 %v2770, %v2876
        %v2900 = vmul.f32 %v2771, %v2876
        %v2901 = vmul.f32 %v2772, %v2876
        %v2902 = vmul.f32 %v2773, %v2876
        %v2903 = vmul.f32 %v2774, %v2876
        %v2904 = vmul.f32 %v2775, %v2876
        %v2905 = vmul.f32 %v2776, %v2876
        %v2906 = vmul.f32 %v2777, %v2876
        %v2907 = vmul.f32 %v2778, %v2876
        %v2908 = vmul.f32 %v2779, %v2876
        %v2909 = vmul.f32 %v2780, %v2876
        %v2910 = vmul.f32 %v2781, %v2876
        %v2911 = vmul.f32 %v2782, %v2876
        %v2912 = vmul.f32 %v2783, %v2876
        %v2913 = vmul.f32 %v2784, %v2876
        %v2914 = vmul.f32 %v2785, %v2876
        %v2915 = vmul.f32 %v2786, %v2876
        %v2916 = vmul.f32 %v2787, %v2876
        %v2917 = vmul.f32 %v2788, %v2876
        %v2918 = vmul.f32 %v2789, %v2876
        %v2919 = vmul.f32 %v2790, %v2876
        %v2920 = vmul.f32 %v2791, %v2876
        %v2921 = vmul.f32 %v2792, %v2876
        %v2922 = vmul.f32 %v2793, %v2876
        %v2923 = vmul.f32 %v2794, %v2876
        %v2924 = vmul.f32 %v2795, %v2876
        %v2925 = vmul.f32 %v2796, %v2876
        %v2926 = vmul.f32 %v2797, %v2876
        %v2927 = vmul.f32 %v2798, %v2876
        %v2928 = vmul.f32 %v2799, %v2876
        %v2929 = vmul.f32 %v2800, %v2876
        %v2930 = vmul.f32 %v2801, %v2876
        %v2931 = vmul.f32 %v2802, %v2876
        %v2932 = vmul.f32 %v2803, %v2876
        %v2933 = vmul.f32 %v2804, %v2876
        %v2934 = vmul.f32 %v2805, %v2876
        %v2935 = vmul.f32 %v2806, %v2876
        %v2936 = vmul.f32 %v2807, %v2876
        %v2937 = vmul.f32 %v2808, %v2876
        %v2938 = vmul.f32 %v2809, %v2876
        %v2939 = vmul.f32 %v2810, %v2876
        %v2940 = vmul.f32 %v2811, %v2876
        %v2941 = vmul.f32 %v2812, %v2876
        %v2942 = vmul.f32 %v2813, %v2876
        %v2943 = vmul.f32 %v2814, %v2876
        %v2944 = vmul.f32 %v2815, %v2876
        %v2945 = vmul.f32 %v2816, %v2876
        %v2946 = vmul.f32 %v2817, %v2876
        %v2947 = vmul.f32 %v2818, %v2876
        %v2948 = vmul.f32 %v2819, %v2876
        %v2949 = vmul.f32 %v2820, %v2876
        %v2950 = vmul.f32 %v2821, %v2876
        %v2951 = vmul.f32 %v2822, %v2876
        %v2952 = vmul.f32 %v2823, %v2876
        %v2953 = vmul.f32 %v2824, %v2876
        %v2954 = vmul.f32 %v2825, %v2876
        %v2955 = vmul.f32 %v2826, %v2876
        %v2956 = vmul.f32 %v2827, %v2876
        %v2957 = vmul.f32 %v2828, %v2876
        %v2958 = vmul.f32 %v2829, %v2876
        %v2959 = vmul.f32 %v2830, %v2876
        %v2960 = vmul.f32 %v2831, %v2876
        %v2961 = vmul.f32 %v2832, %v2876
        %v2962 = vmul.f32 %v2833, %v2876
        %v2963 = vmul.f32 %v2834, %v2876
        %v2964 = vmul.f32 %v2835, %v2876
        %v2965 = vmul.f32 %v2836, %v2876
        %v2966 = vmul.f32 %v2837, %v2876
        %v2967 = vmul.f32 %v2838, %v2876
        %v2968 = vmul.f32 %v2839, %v2876
        %v2969 = vmul.f32 %v2840, %v2876
        %v2970 = vmul.f32 %v2841, %v2876
        %v2971 = vmul.f32 %v2842, %v2876
        %v2972 = vmul.f32 %v2843, %v2876
        %v2973 = vmul.f32 %v2844, %v2876
        %v2974 = vmul.f32 %v2845, %v2876
        %v2975 = vmul.f32 %v2846, %v2876
        %v2976 = vmul.f32 %v2847, %v2876
        %v2977 = vmul.f32 %v2848, %v2876
        %v2978 = vmul.f32 %v2849, %v2876
        %v2979 = vmul.f32 %v2850, %v2876
        %v2980 = vmul.f32 %v2851, %v2876
        %v2981 = vmul.f32 %v2852, %v2876
        %v2982 = vmul.f32 %v2853, %v2876
        %v2983 = vmul.f32 %v2854, %v2876
        %v2984 = vmul.f32 %v2855, %v2876
        %v2985 = vmul.f32 %v2856, %v2876
        %v2986 = vmul.f32 %v2857, %v2876
        %v2987 = vmul.f32 %v2858, %v2876
        %v2988 = vmul.f32 %v2859, %v2876
        %v2989 = vmul.f32 %v2860, %v2876
        %v2990 = vmul.f32 %v2861, %v2876
        %v2991 = vmul.f32 %v2862, %v2876
        %v2992 = vmul.f32 %v2863, %v2876
        %v2993 = vmul.f32 %v2864, %v2876
        %v2994 = vmul.f32 %v2865, %v2876
        %v2995 = vmul.f32 %v2866, %v2876
        %v2996 = vmul.f32 %v2867, %v2876
        %v2997 = vmul.f32 %v2868, %v2876
        %v2998 = vmul.f32 %v2869, %v2876
        %v2999 = vmul.f32 %v2870, %v2876
        %v3000 = vmul.f32 %v2871, %v2876
        %v3001 = vmul.f32 %v2872, %v2876
        %v3002 = vmul.f32 %v2873, %v2876
        %v3003 = vmul.f32 %v2874, %v2876
        %v3004 = vmul.f32 %v2875, %v2876
        %v3005 = vadd.f32 %v2620, %v2877
        %v3006 = vadd.f32 %v2621, %v2878
        %v3007 = vadd.f32 %v2622, %v2879
        %v3008 = vadd.f32 %v2623, %v2880
        %v3009 = vadd.f32 %v2624, %v2881
        %v3010 = vadd.f32 %v2625, %v2882
        %v3011 = vadd.f32 %v2626, %v2883
        %v3012 = vadd.f32 %v2627, %v2884
        %v3013 = vadd.f32 %v2628, %v2885
        %v3014 = vadd.f32 %v2629, %v2886
        %v3015 = vadd.f32 %v2630, %v2887
        %v3016 = vadd.f32 %v2631, %v2888
        %v3017 = vadd.f32 %v2632, %v2889
        %v3018 = vadd.f32 %v2633, %v2890
        %v3019 = vadd.f32 %v2634, %v2891
        %v3020 = vadd.f32 %v2635, %v2892
        %v3021 = vadd.f32 %v2636, %v2893
        %v3022 = vadd.f32 %v2637, %v2894
        %v3023 = vadd.f32 %v2638, %v2895
        %v3024 = vadd.f32 %v2639, %v2896
        %v3025 = vadd.f32 %v2640, %v2897
        %v3026 = vadd.f32 %v2641, %v2898
        %v3027 = vadd.f32 %v2642, %v2899
        %v3028 = vadd.f32 %v2643, %v2900
        %v3029 = vadd.f32 %v2644, %v2901
        %v3030 = vadd.f32 %v2645, %v2902
        %v3031 = vadd.f32 %v2646, %v2903
        %v3032 = vadd.f32 %v2647, %v2904
        %v3033 = vadd.f32 %v2648, %v2905
        %v3034 = vadd.f32 %v2649, %v2906
        %v3035 = vadd.f32 %v2650, %v2907
        %v3036 = vadd.f32 %v2651, %v2908
        %v3037 = vadd.f32 %v2652, %v2909
        %v3038 = vadd.f32 %v2653, %v2910
        %v3039 = vadd.f32 %v2654, %v2911
        %v3040 = vadd.f32 %v2655, %v2912
        %v3041 = vadd.f32 %v2656, %v2913
        %v3042 = vadd.f32 %v2657, %v2914
        %v3043 = vadd.f32 %v2658, %v2915
        %v3044 = vadd.f32 %v2659, %v2916
        %v3045 = vadd.f32 %v2660, %v2917
        %v3046 = vadd.f32 %v2661, %v2918
        %v3047 = vadd.f32 %v2662, %v2919
        %v3048 = vadd.f32 %v2663, %v2920
        %v3049 = vadd.f32 %v2664, %v2921
        %v3050 = vadd.f32 %v2665, %v2922
        %v3051 = vadd.f32 %v2666, %v2923
        %v3052 = vadd.f32 %v2667, %v2924
        %v3053 = vadd.f32 %v2668, %v2925
        %v3054 = vadd.f32 %v2669, %v2926
        %v3055 = vadd.f32 %v2670, %v2927
        %v3056 = vadd.f32 %v2671, %v2928
        %v3057 = vadd.f32 %v2672, %v2929
        %v3058 = vadd.f32 %v2673, %v2930
        %v3059 = vadd.f32 %v2674, %v2931
        %v3060 = vadd.f32 %v2675, %v2932
        %v3061 = vadd.f32 %v2676, %v2933
        %v3062 = vadd.f32 %v2677, %v2934
        %v3063 = vadd.f32 %v2678, %v2935
        %v3064 = vadd.f32 %v2679, %v2936
        %v3065 = vadd.f32 %v2680, %v2937
        %v3066 = vadd.f32 %v2681, %v2938
        %v3067 = vadd.f32 %v2682, %v2939
        %v3068 = vadd.f32 %v2683, %v2940
        %v3069 = vadd.f32 %v2684, %v2941
        %v3070 = vadd.f32 %v2685, %v2942
        %v3071 = vadd.f32 %v2686, %v2943
        %v3072 = vadd.f32 %v2687, %v2944
        %v3073 = vadd.f32 %v2688, %v2945
        %v3074 = vadd.f32 %v2689, %v2946
        %v3075 = vadd.f32 %v2690, %v2947
        %v3076 = vadd.f32 %v2691, %v2948
        %v3077 = vadd.f32 %v2692, %v2949
        %v3078 = vadd.f32 %v2693, %v2950
        %v3079 = vadd.f32 %v2694, %v2951
        %v3080 = vadd.f32 %v2695, %v2952
        %v3081 = vadd.f32 %v2696, %v2953
        %v3082 = vadd.f32 %v2697, %v2954
        %v3083 = vadd.f32 %v2698, %v2955
        %v3084 = vadd.f32 %v2699, %v2956
        %v3085 = vadd.f32 %v2700, %v2957
        %v3086 = vadd.f32 %v2701, %v2958
        %v3087 = vadd.f32 %v2702, %v2959
        %v3088 = vadd.f32 %v2703, %v2960
        %v3089 = vadd.f32 %v2704, %v2961
        %v3090 = vadd.f32 %v2705, %v2962
        %v3091 = vadd.f32 %v2706, %v2963
        %v3092 = vadd.f32 %v2707, %v2964
        %v3093 = vadd.f32 %v2708, %v2965
        %v3094 = vadd.f32 %v2709, %v2966
        %v3095 = vadd.f32 %v2710, %v2967
        %v3096 = vadd.f32 %v2711, %v2968
        %v3097 = vadd.f32 %v2712, %v2969
        %v3098 = vadd.f32 %v2713, %v2970
        %v3099 = vadd.f32 %v2714, %v2971
        %v3100 = vadd.f32 %v2715, %v2972
        %v3101 = vadd.f32 %v2716, %v2973
        %v3102 = vadd.f32 %v2717, %v2974
        %v3103 = vadd.f32 %v2718, %v2975
        %v3104 = vadd.f32 %v2719, %v2976
        %v3105 = vadd.f32 %v2720, %v2977
        %v3106 = vadd.f32 %v2721, %v2978
        %v3107 = vadd.f32 %v2722, %v2979
        %v3108 = vadd.f32 %v2723, %v2980
        %v3109 = vadd.f32 %v2724, %v2981
        %v3110 = vadd.f32 %v2725, %v2982
        %v3111 = vadd.f32 %v2726, %v2983
        %v3112 = vadd.f32 %v2727, %v2984
        %v3113 = vadd.f32 %v2728, %v2985
        %v3114 = vadd.f32 %v2729, %v2986
        %v3115 = vadd.f32 %v2730, %v2987
        %v3116 = vadd.f32 %v2731, %v2988
        %v3117 = vadd.f32 %v2732, %v2989
        %v3118 = vadd.f32 %v2733, %v2990
        %v3119 = vadd.f32 %v2734, %v2991
        %v3120 = vadd.f32 %v2735, %v2992
        %v3121 = vadd.f32 %v2736, %v2993
        %v3122 = vadd.f32 %v2737, %v2994
        %v3123 = vadd.f32 %v2738, %v2995
        %v3124 = vadd.f32 %v2739, %v2996
        %v3125 = vadd.f32 %v2740, %v2997
        %v3126 = vadd.f32 %v2741, %v2998
        %v3127 = vadd.f32 %v2742, %v2999
        %v3128 = vadd.f32 %v2743, %v3000
        %v3129 = vadd.f32 %v2744, %v3001
        %v3130 = vadd.f32 %v2745, %v3002
        %v3131 = vadd.f32 %v2746, %v3003
        %v3132 = vadd.f32 %v2747, %v3004
        %v3133 = vld [vmem:[%s1335] sm:$0xff]
        %v3134 = vld [vmem:[%s1335 + $0x8] sm:$0xff]
        %v3135 = vld [vmem:[%s1335 + $0x10] sm:$0xff]
        %v3136 = vld [vmem:[%s1335 + $0x18] sm:$0xff]
        %v3137 = vld [vmem:[%s1335 + $0x20] sm:$0xff]
        %v3138 = vld [vmem:[%s1335 + $0x28] sm:$0xff]
        %v3139 = vld [vmem:[%s1335 + $0x30] sm:$0xff]
        %v3140 = vld [vmem:[%s1335 + $0x38] sm:$0xff]
        %v3141 = vld [vmem:[%s1335 + $0x40] sm:$0xff]
        %v3142 = vld [vmem:[%s1335 + $0x48] sm:$0xff]
        %v3143 = vld [vmem:[%s1335 + $0x50] sm:$0xff]
        %v3144 = vld [vmem:[%s1335 + $0x58] sm:$0xff]
        %v3145 = vld [vmem:[%s1335 + $0x60] sm:$0xff]
        %v3146 = vld [vmem:[%s1335 + $0x68] sm:$0xff]
        %v3147 = vld [vmem:[%s1335 + $0x70] sm:$0xff]
        %v3148 = vld [vmem:[%s1335 + $0x78] sm:$0xff]
        %v3149 = vld [vmem:[%s1335 + $0x80] sm:$0xff]
        %v3150 = vld [vmem:[%s1335 + $0x88] sm:$0xff]
        %v3151 = vld [vmem:[%s1335 + $0x90] sm:$0xff]
        %v3152 = vld [vmem:[%s1335 + $0x98] sm:$0xff]
        %v3153 = vld [vmem:[%s1335 + $0xa0] sm:$0xff]
        %v3154 = vld [vmem:[%s1335 + $0xa8] sm:$0xff]
        %v3155 = vld [vmem:[%s1335 + $0xb0] sm:$0xff]
        %v3156 = vld [vmem:[%s1335 + $0xb8] sm:$0xff]
        %v3157 = vld [vmem:[%s1335 + $0xc0] sm:$0xff]
        %v3158 = vld [vmem:[%s1335 + $0xc8] sm:$0xff]
        %v3159 = vld [vmem:[%s1335 + $0xd0] sm:$0xff]
        %v3160 = vld [vmem:[%s1335 + $0xd8] sm:$0xff]
        %v3161 = vld [vmem:[%s1335 + $0xe0] sm:$0xff]
        %v3162 = vld [vmem:[%s1335 + $0xe8] sm:$0xff]
        %v3163 = vld [vmem:[%s1335 + $0xf0] sm:$0xff]
        %v3164 = vld [vmem:[%s1335 + $0xf8] sm:$0xff]
        %v3165 = vld [vmem:[%s1335 + $0x100] sm:$0xff]
        %v3166 = vld [vmem:[%s1335 + $0x108] sm:$0xff]
        %v3167 = vld [vmem:[%s1335 + $0x110] sm:$0xff]
        %v3168 = vld [vmem:[%s1335 + $0x118] sm:$0xff]
        %v3169 = vld [vmem:[%s1335 + $0x120] sm:$0xff]
        %v3170 = vld [vmem:[%s1335 + $0x128] sm:$0xff]
        %v3171 = vld [vmem:[%s1335 + $0x130] sm:$0xff]
        %v3172 = vld [vmem:[%s1335 + $0x138] sm:$0xff]
        %v3173 = vld [vmem:[%s1335 + $0x140] sm:$0xff]
        %v3174 = vld [vmem:[%s1335 + $0x148] sm:$0xff]
        %v3175 = vld [vmem:[%s1335 + $0x150] sm:$0xff]
        %v3176 = vld [vmem:[%s1335 + $0x158] sm:$0xff]
        %v3177 = vld [vmem:[%s1335 + $0x160] sm:$0xff]
        %v3178 = vld [vmem:[%s1335 + $0x168] sm:$0xff]
        %v3179 = vld [vmem:[%s1335 + $0x170] sm:$0xff]
        %v3180 = vld [vmem:[%s1335 + $0x178] sm:$0xff]
        %v3181 = vld [vmem:[%s1335 + $0x180] sm:$0xff]
        %v3182 = vld [vmem:[%s1335 + $0x188] sm:$0xff]
        %v3183 = vld [vmem:[%s1335 + $0x190] sm:$0xff]
        %v3184 = vld [vmem:[%s1335 + $0x198] sm:$0xff]
        %v3185 = vld [vmem:[%s1335 + $0x1a0] sm:$0xff]
        %v3186 = vld [vmem:[%s1335 + $0x1a8] sm:$0xff]
        %v3187 = vld [vmem:[%s1335 + $0x1b0] sm:$0xff]
        %v3188 = vld [vmem:[%s1335 + $0x1b8] sm:$0xff]
        %v3189 = vld [vmem:[%s1335 + $0x1c0] sm:$0xff]
        %v3190 = vld [vmem:[%s1335 + $0x1c8] sm:$0xff]
        %v3191 = vld [vmem:[%s1335 + $0x1d0] sm:$0xff]
        %v3192 = vld [vmem:[%s1335 + $0x1d8] sm:$0xff]
        %v3193 = vld [vmem:[%s1335 + $0x1e0] sm:$0xff]
        %v3194 = vld [vmem:[%s1335 + $0x1e8] sm:$0xff]
        %v3195 = vld [vmem:[%s1335 + $0x1f0] sm:$0xff]
        %v3196 = vld [vmem:[%s1335 + $0x1f8] sm:$0xff]
        %v3197 = vld [vmem:[%s1335 + $0x200] sm:$0xff]
        %v3198 = vld [vmem:[%s1335 + $0x208] sm:$0xff]
        %v3199 = vld [vmem:[%s1335 + $0x210] sm:$0xff]
        %v3200 = vld [vmem:[%s1335 + $0x218] sm:$0xff]
        %v3201 = vld [vmem:[%s1335 + $0x220] sm:$0xff]
        %v3202 = vld [vmem:[%s1335 + $0x228] sm:$0xff]
        %v3203 = vld [vmem:[%s1335 + $0x230] sm:$0xff]
        %v3204 = vld [vmem:[%s1335 + $0x238] sm:$0xff]
        %v3205 = vld [vmem:[%s1335 + $0x240] sm:$0xff]
        %v3206 = vld [vmem:[%s1335 + $0x248] sm:$0xff]
        %v3207 = vld [vmem:[%s1335 + $0x250] sm:$0xff]
        %v3208 = vld [vmem:[%s1335 + $0x258] sm:$0xff]
        %v3209 = vld [vmem:[%s1335 + $0x260] sm:$0xff]
        %v3210 = vld [vmem:[%s1335 + $0x268] sm:$0xff]
        %v3211 = vld [vmem:[%s1335 + $0x270] sm:$0xff]
        %v3212 = vld [vmem:[%s1335 + $0x278] sm:$0xff]
        %v3213 = vld [vmem:[%s1335 + $0x280] sm:$0xff]
        %v3214 = vld [vmem:[%s1335 + $0x288] sm:$0xff]
        %v3215 = vld [vmem:[%s1335 + $0x290] sm:$0xff]
        %v3216 = vld [vmem:[%s1335 + $0x298] sm:$0xff]
        %v3217 = vld [vmem:[%s1335 + $0x2a0] sm:$0xff]
        %v3218 = vld [vmem:[%s1335 + $0x2a8] sm:$0xff]
        %v3219 = vld [vmem:[%s1335 + $0x2b0] sm:$0xff]
        %v3220 = vld [vmem:[%s1335 + $0x2b8] sm:$0xff]
        %v3221 = vld [vmem:[%s1335 + $0x2c0] sm:$0xff]
        %v3222 = vld [vmem:[%s1335 + $0x2c8] sm:$0xff]
        %v3223 = vld [vmem:[%s1335 + $0x2d0] sm:$0xff]
        %v3224 = vld [vmem:[%s1335 + $0x2d8] sm:$0xff]
        %v3225 = vld [vmem:[%s1335 + $0x2e0] sm:$0xff]
        %v3226 = vld [vmem:[%s1335 + $0x2e8] sm:$0xff]
        %v3227 = vld [vmem:[%s1335 + $0x2f0] sm:$0xff]
        %v3228 = vld [vmem:[%s1335 + $0x2f8] sm:$0xff]
        %v3229 = vld [vmem:[%s1335 + $0x300] sm:$0xff]
        %v3230 = vld [vmem:[%s1335 + $0x308] sm:$0xff]
        %v3231 = vld [vmem:[%s1335 + $0x310] sm:$0xff]
        %v3232 = vld [vmem:[%s1335 + $0x318] sm:$0xff]
        %v3233 = vld [vmem:[%s1335 + $0x320] sm:$0xff]
        %v3234 = vld [vmem:[%s1335 + $0x328] sm:$0xff]
        %v3235 = vld [vmem:[%s1335 + $0x330] sm:$0xff]
        %v3236 = vld [vmem:[%s1335 + $0x338] sm:$0xff]
        %v3237 = vld [vmem:[%s1335 + $0x340] sm:$0xff]
        %v3238 = vld [vmem:[%s1335 + $0x348] sm:$0xff]
        %v3239 = vld [vmem:[%s1335 + $0x350] sm:$0xff]
        %v3240 = vld [vmem:[%s1335 + $0x358] sm:$0xff]
        %v3241 = vld [vmem:[%s1335 + $0x360] sm:$0xff]
        %v3242 = vld [vmem:[%s1335 + $0x368] sm:$0xff]
        %v3243 = vld [vmem:[%s1335 + $0x370] sm:$0xff]
        %v3244 = vld [vmem:[%s1335 + $0x378] sm:$0xff]
        %v3245 = vld [vmem:[%s1335 + $0x380] sm:$0xff]
        %v3246 = vld [vmem:[%s1335 + $0x388] sm:$0xff]
        %v3247 = vld [vmem:[%s1335 + $0x390] sm:$0xff]
        %v3248 = vld [vmem:[%s1335 + $0x398] sm:$0xff]
        %v3249 = vld [vmem:[%s1335 + $0x3a0] sm:$0xff]
        %v3250 = vld [vmem:[%s1335 + $0x3a8] sm:$0xff]
        %v3251 = vld [vmem:[%s1335 + $0x3b0] sm:$0xff]
        %v3252 = vld [vmem:[%s1335 + $0x3b8] sm:$0xff]
        %v3253 = vld [vmem:[%s1335 + $0x3c0] sm:$0xff]
        %v3254 = vld [vmem:[%s1335 + $0x3c8] sm:$0xff]
        %v3255 = vld [vmem:[%s1335 + $0x3d0] sm:$0xff]
        %v3256 = vld [vmem:[%s1335 + $0x3d8] sm:$0xff]
        %v3257 = vld [vmem:[%s1335 + $0x3e0] sm:$0xff]
        %v3258 = vld [vmem:[%s1335 + $0x3e8] sm:$0xff]
        %v3259 = vld [vmem:[%s1335 + $0x3f0] sm:$0xff]
        %v3260 = vld [vmem:[%s1335 + $0x3f8] sm:$0xff]
        %v3261 = vperm.slane %v2234, 2
        %v3262 = vmul.f32 %v3133, %v3261
        %v3263 = vmul.f32 %v3134, %v3261
        %v3264 = vmul.f32 %v3135, %v3261
        %v3265 = vmul.f32 %v3136, %v3261
        %v3266 = vmul.f32 %v3137, %v3261
        %v3267 = vmul.f32 %v3138, %v3261
        %v3268 = vmul.f32 %v3139, %v3261
        %v3269 = vmul.f32 %v3140, %v3261
        %v3270 = vmul.f32 %v3141, %v3261
        %v3271 = vmul.f32 %v3142, %v3261
        %v3272 = vmul.f32 %v3143, %v3261
        %v3273 = vmul.f32 %v3144, %v3261
        %v3274 = vmul.f32 %v3145, %v3261
        %v3275 = vmul.f32 %v3146, %v3261
        %v3276 = vmul.f32 %v3147, %v3261
        %v3277 = vmul.f32 %v3148, %v3261
        %v3278 = vmul.f32 %v3149, %v3261
        %v3279 = vmul.f32 %v3150, %v3261
        %v3280 = vmul.f32 %v3151, %v3261
        %v3281 = vmul.f32 %v3152, %v3261
        %v3282 = vmul.f32 %v3153, %v3261
        %v3283 = vmul.f32 %v3154, %v3261
        %v3284 = vmul.f32 %v3155, %v3261
        %v3285 = vmul.f32 %v3156, %v3261
        %v3286 = vmul.f32 %v3157, %v3261
        %v3287 = vmul.f32 %v3158, %v3261
        %v3288 = vmul.f32 %v3159, %v3261
        %v3289 = vmul.f32 %v3160, %v3261
        %v3290 = vmul.f32 %v3161, %v3261
        %v3291 = vmul.f32 %v3162, %v3261
        %v3292 = vmul.f32 %v3163, %v3261
        %v3293 = vmul.f32 %v3164, %v3261
        %v3294 = vmul.f32 %v3165, %v3261
        %v3295 = vmul.f32 %v3166, %v3261
        %v3296 = vmul.f32 %v3167, %v3261
        %v3297 = vmul.f32 %v3168, %v3261
        %v3298 = vmul.f32 %v3169, %v3261
        %v3299 = vmul.f32 %v3170, %v3261
        %v3300 = vmul.f32 %v3171, %v3261
        %v3301 = vmul.f32 %v3172, %v3261
        %v3302 = vmul.f32 %v3173, %v3261
        %v3303 = vmul.f32 %v3174, %v3261
        %v3304 = vmul.f32 %v3175, %v3261
        %v3305 = vmul.f32 %v3176, %v3261
        %v3306 = vmul.f32 %v3177, %v3261
        %v3307 = vmul.f32 %v3178, %v3261
        %v3308 = vmul.f32 %v3179, %v3261
        %v3309 = vmul.f32 %v3180, %v3261
        %v3310 = vmul.f32 %v3181, %v3261
        %v3311 = vmul.f32 %v3182, %v3261
        %v3312 = vmul.f32 %v3183, %v3261
        %v3313 = vmul.f32 %v3184, %v3261
        %v3314 = vmul.f32 %v3185, %v3261
        %v3315 = vmul.f32 %v3186, %v3261
        %v3316 = vmul.f32 %v3187, %v3261
        %v3317 = vmul.f32 %v3188, %v3261
        %v3318 = vmul.f32 %v3189, %v3261
        %v3319 = vmul.f32 %v3190, %v3261
        %v3320 = vmul.f32 %v3191, %v3261
        %v3321 = vmul.f32 %v3192, %v3261
        %v3322 = vmul.f32 %v3193, %v3261
        %v3323 = vmul.f32 %v3194, %v3261
        %v3324 = vmul.f32 %v3195, %v3261
        %v3325 = vmul.f32 %v3196, %v3261
        %v3326 = vmul.f32 %v3197, %v3261
        %v3327 = vmul.f32 %v3198, %v3261
        %v3328 = vmul.f32 %v3199, %v3261
        %v3329 = vmul.f32 %v3200, %v3261
        %v3330 = vmul.f32 %v3201, %v3261
        %v3331 = vmul.f32 %v3202, %v3261
        %v3332 = vmul.f32 %v3203, %v3261
        %v3333 = vmul.f32 %v3204, %v3261
        %v3334 = vmul.f32 %v3205, %v3261
        %v3335 = vmul.f32 %v3206, %v3261
        %v3336 = vmul.f32 %v3207, %v3261
        %v3337 = vmul.f32 %v3208, %v3261
        %v3338 = vmul.f32 %v3209, %v3261
        %v3339 = vmul.f32 %v3210, %v3261
        %v3340 = vmul.f32 %v3211, %v3261
        %v3341 = vmul.f32 %v3212, %v3261
        %v3342 = vmul.f32 %v3213, %v3261
        %v3343 = vmul.f32 %v3214, %v3261
        %v3344 = vmul.f32 %v3215, %v3261
        %v3345 = vmul.f32 %v3216, %v3261
        %v3346 = vmul.f32 %v3217, %v3261
        %v3347 = vmul.f32 %v3218, %v3261
        %v3348 = vmul.f32 %v3219, %v3261
        %v3349 = vmul.f32 %v3220, %v3261
        %v3350 = vmul.f32 %v3221, %v3261
        %v3351 = vmul.f32 %v3222, %v3261
        %v3352 = vmul.f32 %v3223, %v3261
        %v3353 = vmul.f32 %v3224, %v3261
        %v3354 = vmul.f32 %v3225, %v3261
        %v3355 = vmul.f32 %v3226, %v3261
        %v3356 = vmul.f32 %v3227, %v3261
        %v3357 = vmul.f32 %v3228, %v3261
        %v3358 = vmul.f32 %v3229, %v3261
        %v3359 = vmul.f32 %v3230, %v3261
        %v3360 = vmul.f32 %v3231, %v3261
        %v3361 = vmul.f32 %v3232, %v3261
        %v3362 = vmul.f32 %v3233, %v3261
        %v3363 = vmul.f32 %v3234, %v3261
        %v3364 = vmul.f32 %v3235, %v3261
        %v3365 = vmul.f32 %v3236, %v3261
        %v3366 = vmul.f32 %v3237, %v3261
        %v3367 = vmul.f32 %v3238, %v3261
        %v3368 = vmul.f32 %v3239, %v3261
        %v3369 = vmul.f32 %v3240, %v3261
        %v3370 = vmul.f32 %v3241, %v3261
        %v3371 = vmul.f32 %v3242, %v3261
        %v3372 = vmul.f32 %v3243, %v3261
        %v3373 = vmul.f32 %v3244, %v3261
        %v3374 = vmul.f32 %v3245, %v3261
        %v3375 = vmul.f32 %v3246, %v3261
        %v3376 = vmul.f32 %v3247, %v3261
        %v3377 = vmul.f32 %v3248, %v3261
        %v3378 = vmul.f32 %v3249, %v3261
        %v3379 = vmul.f32 %v3250, %v3261
        %v3380 = vmul.f32 %v3251, %v3261
        %v3381 = vmul.f32 %v3252, %v3261
        %v3382 = vmul.f32 %v3253, %v3261
        %v3383 = vmul.f32 %v3254, %v3261
        %v3384 = vmul.f32 %v3255, %v3261
        %v3385 = vmul.f32 %v3256, %v3261
        %v3386 = vmul.f32 %v3257, %v3261
        %v3387 = vmul.f32 %v3258, %v3261
        %v3388 = vmul.f32 %v3259, %v3261
        %v3389 = vmul.f32 %v3260, %v3261
        %v3390 = vadd.f32 %v3005, %v3262
        %v3391 = vadd.f32 %v3006, %v3263
        %v3392 = vadd.f32 %v3007, %v3264
        %v3393 = vadd.f32 %v3008, %v3265
        %v3394 = vadd.f32 %v3009, %v3266
        %v3395 = vadd.f32 %v3010, %v3267
        %v3396 = vadd.f32 %v3011, %v3268
        %v3397 = vadd.f32 %v3012, %v3269
        %v3398 = vadd.f32 %v3013, %v3270
        %v3399 = vadd.f32 %v3014, %v3271
        %v3400 = vadd.f32 %v3015, %v3272
        %v3401 = vadd.f32 %v3016, %v3273
        %v3402 = vadd.f32 %v3017, %v3274
        %v3403 = vadd.f32 %v3018, %v3275
        %v3404 = vadd.f32 %v3019, %v3276
        %v3405 = vadd.f32 %v3020, %v3277
        %v3406 = vadd.f32 %v3021, %v3278
        %v3407 = vadd.f32 %v3022, %v3279
        %v3408 = vadd.f32 %v3023, %v3280
        %v3409 = vadd.f32 %v3024, %v3281
        %v3410 = vadd.f32 %v3025, %v3282
        %v3411 = vadd.f32 %v3026, %v3283
        %v3412 = vadd.f32 %v3027, %v3284
        %v3413 = vadd.f32 %v3028, %v3285
        %v3414 = vadd.f32 %v3029, %v3286
        %v3415 = vadd.f32 %v3030, %v3287
        %v3416 = vadd.f32 %v3031, %v3288
        %v3417 = vadd.f32 %v3032, %v3289
        %v3418 = vadd.f32 %v3033, %v3290
        %v3419 = vadd.f32 %v3034, %v3291
        %v3420 = vadd.f32 %v3035, %v3292
        %v3421 = vadd.f32 %v3036, %v3293
        %v3422 = vadd.f32 %v3037, %v3294
        %v3423 = vadd.f32 %v3038, %v3295
        %v3424 = vadd.f32 %v3039, %v3296
        %v3425 = vadd.f32 %v3040, %v3297
        %v3426 = vadd.f32 %v3041, %v3298
        %v3427 = vadd.f32 %v3042, %v3299
        %v3428 = vadd.f32 %v3043, %v3300
        %v3429 = vadd.f32 %v3044, %v3301
        %v3430 = vadd.f32 %v3045, %v3302
        %v3431 = vadd.f32 %v3046, %v3303
        %v3432 = vadd.f32 %v3047, %v3304
        %v3433 = vadd.f32 %v3048, %v3305
        %v3434 = vadd.f32 %v3049, %v3306
        %v3435 = vadd.f32 %v3050, %v3307
        %v3436 = vadd.f32 %v3051, %v3308
        %v3437 = vadd.f32 %v3052, %v3309
        %v3438 = vadd.f32 %v3053, %v3310
        %v3439 = vadd.f32 %v3054, %v3311
        %v3440 = vadd.f32 %v3055, %v3312
        %v3441 = vadd.f32 %v3056, %v3313
        %v3442 = vadd.f32 %v3057, %v3314
        %v3443 = vadd.f32 %v3058, %v3315
        %v3444 = vadd.f32 %v3059, %v3316
        %v3445 = vadd.f32 %v3060, %v3317
        %v3446 = vadd.f32 %v3061, %v3318
        %v3447 = vadd.f32 %v3062, %v3319
        %v3448 = vadd.f32 %v3063, %v3320
        %v3449 = vadd.f32 %v3064, %v3321
        %v3450 = vadd.f32 %v3065, %v3322
        %v3451 = vadd.f32 %v3066, %v3323
        %v3452 = vadd.f32 %v3067, %v3324
        %v3453 = vadd.f32 %v3068, %v3325
        %v3454 = vadd.f32 %v3069, %v3326
        %v3455 = vadd.f32 %v3070, %v3327
        %v3456 = vadd.f32 %v3071, %v3328
        %v3457 = vadd.f32 %v3072, %v3329
        %v3458 = vadd.f32 %v3073, %v3330
        %v3459 = vadd.f32 %v3074, %v3331
        %v3460 = vadd.f32 %v3075, %v3332
        %v3461 = vadd.f32 %v3076, %v3333
        %v3462 = vadd.f32 %v3077, %v3334
        %v3463 = vadd.f32 %v3078, %v3335
        %v3464 = vadd.f32 %v3079, %v3336
        %v3465 = vadd.f32 %v3080, %v3337
        %v3466 = vadd.f32 %v3081, %v3338
        %v3467 = vadd.f32 %v3082, %v3339
        %v3468 = vadd.f32 %v3083, %v3340
        %v3469 = vadd.f32 %v3084, %v3341
        %v3470 = vadd.f32 %v3085, %v3342
        %v3471 = vadd.f32 %v3086, %v3343
        %v3472 = vadd.f32 %v3087, %v3344
        %v3473 = vadd.f32 %v3088, %v3345
        %v3474 = vadd.f32 %v3089, %v3346
        %v3475 = vadd.f32 %v3090, %v3347
        %v3476 = vadd.f32 %v3091, %v3348
        %v3477 = vadd.f32 %v3092, %v3349
        %v3478 = vadd.f32 %v3093, %v3350
        %v3479 = vadd.f32 %v3094, %v3351
        %v3480 = vadd.f32 %v3095, %v3352
        %v3481 = vadd.f32 %v3096, %v3353
        %v3482 = vadd.f32 %v3097, %v3354
        %v3483 = vadd.f32 %v3098, %v3355
        %v3484 = vadd.f32 %v3099, %v3356
        %v3485 = vadd.f32 %v3100, %v3357
        %v3486 = vadd.f32 %v3101, %v3358
        %v3487 = vadd.f32 %v3102, %v3359
        %v3488 = vadd.f32 %v3103, %v3360
        %v3489 = vadd.f32 %v3104, %v3361
        %v3490 = vadd.f32 %v3105, %v3362
        %v3491 = vadd.f32 %v3106, %v3363
        %v3492 = vadd.f32 %v3107, %v3364
        %v3493 = vadd.f32 %v3108, %v3365
        %v3494 = vadd.f32 %v3109, %v3366
        %v3495 = vadd.f32 %v3110, %v3367
        %v3496 = vadd.f32 %v3111, %v3368
        %v3497 = vadd.f32 %v3112, %v3369
        %v3498 = vadd.f32 %v3113, %v3370
        %v3499 = vadd.f32 %v3114, %v3371
        %v3500 = vadd.f32 %v3115, %v3372
        %v3501 = vadd.f32 %v3116, %v3373
        %v3502 = vadd.f32 %v3117, %v3374
        %v3503 = vadd.f32 %v3118, %v3375
        %v3504 = vadd.f32 %v3119, %v3376
        %v3505 = vadd.f32 %v3120, %v3377
        %v3506 = vadd.f32 %v3121, %v3378
        %v3507 = vadd.f32 %v3122, %v3379
        %v3508 = vadd.f32 %v3123, %v3380
        %v3509 = vadd.f32 %v3124, %v3381
        %v3510 = vadd.f32 %v3125, %v3382
        %v3511 = vadd.f32 %v3126, %v3383
        %v3512 = vadd.f32 %v3127, %v3384
        %v3513 = vadd.f32 %v3128, %v3385
        %v3514 = vadd.f32 %v3129, %v3386
        %v3515 = vadd.f32 %v3130, %v3387
        %v3516 = vadd.f32 %v3131, %v3388
        %v3517 = vadd.f32 %v3132, %v3389
        %v3518 = vmax.f32 %v3390, 0.0
        %v3519 = vmax.f32 %v3391, 0.0
        %v3520 = vmax.f32 %v3392, 0.0
        %v3521 = vmax.f32 %v3393, 0.0
        %v3522 = vmax.f32 %v3394, 0.0
        %v3523 = vmax.f32 %v3395, 0.0
        %v3524 = vmax.f32 %v3396, 0.0
        %v3525 = vmax.f32 %v3397, 0.0
        %v3526 = vmax.f32 %v3398, 0.0
        %v3527 = vmax.f32 %v3399, 0.0
        %v3528 = vmax.f32 %v3400, 0.0
        %v3529 = vmax.f32 %v3401, 0.0
        %v3530 = vmax.f32 %v3402, 0.0
        %v3531 = vmax.f32 %v3403, 0.0
        %v3532 = vmax.f32 %v3404, 0.0
        %v3533 = vmax.f32 %v3405, 0.0
        %v3534 = vmax.f32 %v3406, 0.0
        %v3535 = vmax.f32 %v3407, 0.0
        %v3536 = vmax.f32 %v3408, 0.0
        %v3537 = vmax.f32 %v3409, 0.0
        %v3538 = vmax.f32 %v3410, 0.0
        %v3539 = vmax.f32 %v3411, 0.0
        %v3540 = vmax.f32 %v3412, 0.0
        %v3541 = vmax.f32 %v3413, 0.0
        %v3542 = vmax.f32 %v3414, 0.0
        %v3543 = vmax.f32 %v3415, 0.0
        %v3544 = vmax.f32 %v3416, 0.0
        %v3545 = vmax.f32 %v3417, 0.0
        %v3546 = vmax.f32 %v3418, 0.0
        %v3547 = vmax.f32 %v3419, 0.0
        %v3548 = vmax.f32 %v3420, 0.0
        %v3549 = vmax.f32 %v3421, 0.0
        %v3550 = vmax.f32 %v3422, 0.0
        %v3551 = vmax.f32 %v3423, 0.0
        %v3552 = vmax.f32 %v3424, 0.0
        %v3553 = vmax.f32 %v3425, 0.0
        %v3554 = vmax.f32 %v3426, 0.0
        %v3555 = vmax.f32 %v3427, 0.0
        %v3556 = vmax.f32 %v3428, 0.0
        %v3557 = vmax.f32 %v3429, 0.0
        %v3558 = vmax.f32 %v3430, 0.0
        %v3559 = vmax.f32 %v3431, 0.0
        %v3560 = vmax.f32 %v3432, 0.0
        %v3561 = vmax.f32 %v3433, 0.0
        %v3562 = vmax.f32 %v3434, 0.0
        %v3563 = vmax.f32 %v3435, 0.0
        %v3564 = vmax.f32 %v3436, 0.0
        %v3565 = vmax.f32 %v3437, 0.0
        %v3566 = vmax.f32 %v3438, 0.0
        %v3567 = vmax.f32 %v3439, 0.0
        %v3568 = vmax.f32 %v3440, 0.0
        %v3569 = vmax.f32 %v3441, 0.0
        %v3570 = vmax.f32 %v3442, 0.0
        %v3571 = vmax.f32 %v3443, 0.0
        %v3572 = vmax.f32 %v3444, 0.0
        %v3573 = vmax.f32 %v3445, 0.0
        %v3574 = vmax.f32 %v3446, 0.0
        %v3575 = vmax.f32 %v3447, 0.0
        %v3576 = vmax.f32 %v3448, 0.0
        %v3577 = vmax.f32 %v3449, 0.0
        %v3578 = vmax.f32 %v3450, 0.0
        %v3579 = vmax.f32 %v3451, 0.0
        %v3580 = vmax.f32 %v3452, 0.0
        %v3581 = vmax.f32 %v3453, 0.0
        %v3582 = vmax.f32 %v3454, 0.0
        %v3583 = vmax.f32 %v3455, 0.0
        %v3584 = vmax.f32 %v3456, 0.0
        %v3585 = vmax.f32 %v3457, 0.0
        %v3586 = vmax.f32 %v3458, 0.0
        %v3587 = vmax.f32 %v3459, 0.0
        %v3588 = vmax.f32 %v3460, 0.0
        %v3589 = vmax.f32 %v3461, 0.0
        %v3590 = vmax.f32 %v3462, 0.0
        %v3591 = vmax.f32 %v3463, 0.0
        %v3592 = vmax.f32 %v3464, 0.0
        %v3593 = vmax.f32 %v3465, 0.0
        %v3594 = vmax.f32 %v3466, 0.0
        %v3595 = vmax.f32 %v3467, 0.0
        %v3596 = vmax.f32 %v3468, 0.0
        %v3597 = vmax.f32 %v3469, 0.0
        %v3598 = vmax.f32 %v3470, 0.0
        %v3599 = vmax.f32 %v3471, 0.0
        %v3600 = vmax.f32 %v3472, 0.0
        %v3601 = vmax.f32 %v3473, 0.0
        %v3602 = vmax.f32 %v3474, 0.0
        %v3603 = vmax.f32 %v3475, 0.0
        %v3604 = vmax.f32 %v3476, 0.0
        %v3605 = vmax.f32 %v3477, 0.0
        %v3606 = vmax.f32 %v3478, 0.0
        %v3607 = vmax.f32 %v3479, 0.0
        %v3608 = vmax.f32 %v3480, 0.0
        %v3609 = vmax.f32 %v3481, 0.0
        %v3610 = vmax.f32 %v3482, 0.0
        %v3611 = vmax.f32 %v3483, 0.0
        %v3612 = vmax.f32 %v3484, 0.0
        %v3613 = vmax.f32 %v3485, 0.0
        %v3614 = vmax.f32 %v3486, 0.0
        %v3615 = vmax.f32 %v3487, 0.0
        %v3616 = vmax.f32 %v3488, 0.0
        %v3617 = vmax.f32 %v3489, 0.0
        %v3618 = vmax.f32 %v3490, 0.0
        %v3619 = vmax.f32 %v3491, 0.0
        %v3620 = vmax.f32 %v3492, 0.0
        %v3621 = vmax.f32 %v3493, 0.0
        %v3622 = vmax.f32 %v3494, 0.0
        %v3623 = vmax.f32 %v3495, 0.0
        %v3624 = vmax.f32 %v3496, 0.0
        %v3625 = vmax.f32 %v3497, 0.0
        %v3626 = vmax.f32 %v3498, 0.0
        %v3627 = vmax.f32 %v3499, 0.0
        %v3628 = vmax.f32 %v3500, 0.0
        %v3629 = vmax.f32 %v3501, 0.0
        %v3630 = vmax.f32 %v3502, 0.0
        %v3631 = vmax.f32 %v3503, 0.0
        %v3632 = vmax.f32 %v3504, 0.0
        %v3633 = vmax.f32 %v3505, 0.0
        %v3634 = vmax.f32 %v3506, 0.0
        %v3635 = vmax.f32 %v3507, 0.0
        %v3636 = vmax.f32 %v3508, 0.0
        %v3637 = vmax.f32 %v3509, 0.0
        %v3638 = vmax.f32 %v3510, 0.0
        %v3639 = vmax.f32 %v3511, 0.0
        %v3640 = vmax.f32 %v3512, 0.0
        %v3641 = vmax.f32 %v3513, 0.0
        %v3642 = vmax.f32 %v3514, 0.0
        %v3643 = vmax.f32 %v3515, 0.0
        %v3644 = vmax.f32 %v3516, 0.0
        %v3645 = vmax.f32 %v3517, 0.0
        %v3646 = vld [vmem:[#allocation2] sm:$0xff]
        %v3647 = vld [vmem:[#allocation2 + $0x8] sm:$0xff]
        %v3648 = vld [vmem:[#allocation2 + $0x10] sm:$0xff]
        %v3649 = vld [vmem:[#allocation2 + $0x18] sm:$0xff]
        %v3650 = vld [vmem:[#allocation2 + $0x20] sm:$0xff]
        %v3651 = vld [vmem:[#allocation2 + $0x28] sm:$0xff]
        %v3652 = vld [vmem:[#allocation2 + $0x30] sm:$0xff]
        %v3653 = vld [vmem:[#allocation2 + $0x38] sm:$0xff]
        %v3654 = vld [vmem:[#allocation2 + $0x40] sm:$0xff]
        %v3655 = vld [vmem:[#allocation2 + $0x48] sm:$0xff]
        %v3656 = vld [vmem:[#allocation2 + $0x50] sm:$0xff]
        %v3657 = vld [vmem:[#allocation2 + $0x58] sm:$0xff]
        %v3658 = vld [vmem:[#allocation2 + $0x60] sm:$0xff]
        %v3659 = vld [vmem:[#allocation2 + $0x68] sm:$0xff]
        %v3660 = vld [vmem:[#allocation2 + $0x70] sm:$0xff]
        %v3661 = vld [vmem:[#allocation2 + $0x78] sm:$0xff]
        %v3662 = vld [vmem:[#allocation2 + $0x80] sm:$0xff]
        %v3663 = vld [vmem:[#allocation2 + $0x88] sm:$0xff]
        %v3664 = vld [vmem:[#allocation2 + $0x90] sm:$0xff]
        %v3665 = vld [vmem:[#allocation2 + $0x98] sm:$0xff]
        %v3666 = vld [vmem:[#allocation2 + $0xa0] sm:$0xff]
        %v3667 = vld [vmem:[#allocation2 + $0xa8] sm:$0xff]
        %v3668 = vld [vmem:[#allocation2 + $0xb0] sm:$0xff]
        %v3669 = vld [vmem:[#allocation2 + $0xb8] sm:$0xff]
        %v3670 = vld [vmem:[#allocation2 + $0xc0] sm:$0xff]
        %v3671 = vld [vmem:[#allocation2 + $0xc8] sm:$0xff]
        %v3672 = vld [vmem:[#allocation2 + $0xd0] sm:$0xff]
        %v3673 = vld [vmem:[#allocation2 + $0xd8] sm:$0xff]
        %v3674 = vld [vmem:[#allocation2 + $0xe0] sm:$0xff]
        %v3675 = vld [vmem:[#allocation2 + $0xe8] sm:$0xff]
        %v3676 = vld [vmem:[#allocation2 + $0xf0] sm:$0xff]
        %v3677 = vld [vmem:[#allocation2 + $0xf8] sm:$0xff]
        %v3678 = vld [vmem:[#allocation2 + $0x100] sm:$0xff]
        %v3679 = vld [vmem:[#allocation2 + $0x108] sm:$0xff]
        %v3680 = vld [vmem:[#allocation2 + $0x110] sm:$0xff]
        %v3681 = vld [vmem:[#allocation2 + $0x118] sm:$0xff]
        %v3682 = vld [vmem:[#allocation2 + $0x120] sm:$0xff]
        %v3683 = vld [vmem:[#allocation2 + $0x128] sm:$0xff]
        %v3684 = vld [vmem:[#allocation2 + $0x130] sm:$0xff]
        %v3685 = vld [vmem:[#allocation2 + $0x138] sm:$0xff]
        %v3686 = vld [vmem:[#allocation2 + $0x140] sm:$0xff]
        %v3687 = vld [vmem:[#allocation2 + $0x148] sm:$0xff]
        %v3688 = vld [vmem:[#allocation2 + $0x150] sm:$0xff]
        %v3689 = vld [vmem:[#allocation2 + $0x158] sm:$0xff]
        %v3690 = vld [vmem:[#allocation2 + $0x160] sm:$0xff]
        %v3691 = vld [vmem:[#allocation2 + $0x168] sm:$0xff]
        %v3692 = vld [vmem:[#allocation2 + $0x170] sm:$0xff]
        %v3693 = vld [vmem:[#allocation2 + $0x178] sm:$0xff]
        %v3694 = vld [vmem:[#allocation2 + $0x180] sm:$0xff]
        %v3695 = vld [vmem:[#allocation2 + $0x188] sm:$0xff]
        %v3696 = vld [vmem:[#allocation2 + $0x190] sm:$0xff]
        %v3697 = vld [vmem:[#allocation2 + $0x198] sm:$0xff]
        %v3698 = vld [vmem:[#allocation2 + $0x1a0] sm:$0xff]
        %v3699 = vld [vmem:[#allocation2 + $0x1a8] sm:$0xff]
        %v3700 = vld [vmem:[#allocation2 + $0x1b0] sm:$0xff]
        %v3701 = vld [vmem:[#allocation2 + $0x1b8] sm:$0xff]
        %v3702 = vld [vmem:[#allocation2 + $0x1c0] sm:$0xff]
        %v3703 = vld [vmem:[#allocation2 + $0x1c8] sm:$0xff]
        %v3704 = vld [vmem:[#allocation2 + $0x1d0] sm:$0xff]
        %v3705 = vld [vmem:[#allocation2 + $0x1d8] sm:$0xff]
        %v3706 = vld [vmem:[#allocation2 + $0x1e0] sm:$0xff]
        %v3707 = vld [vmem:[#allocation2 + $0x1e8] sm:$0xff]
        %v3708 = vld [vmem:[#allocation2 + $0x1f0] sm:$0xff]
        %v3709 = vld [vmem:[#allocation2 + $0x1f8] sm:$0xff]
        %v3710 = vld [vmem:[#allocation2 + $0x200] sm:$0xff]
        %v3711 = vld [vmem:[#allocation2 + $0x208] sm:$0xff]
        %v3712 = vld [vmem:[#allocation2 + $0x210] sm:$0xff]
        %v3713 = vld [vmem:[#allocation2 + $0x218] sm:$0xff]
        %v3714 = vld [vmem:[#allocation2 + $0x220] sm:$0xff]
        %v3715 = vld [vmem:[#allocation2 + $0x228] sm:$0xff]
        %v3716 = vld [vmem:[#allocation2 + $0x230] sm:$0xff]
        %v3717 = vld [vmem:[#allocation2 + $0x238] sm:$0xff]
        %v3718 = vld [vmem:[#allocation2 + $0x240] sm:$0xff]
        %v3719 = vld [vmem:[#allocation2 + $0x248] sm:$0xff]
        %v3720 = vld [vmem:[#allocation2 + $0x250] sm:$0xff]
        %v3721 = vld [vmem:[#allocation2 + $0x258] sm:$0xff]
        %v3722 = vld [vmem:[#allocation2 + $0x260] sm:$0xff]
        %v3723 = vld [vmem:[#allocation2 + $0x268] sm:$0xff]
        %v3724 = vld [vmem:[#allocation2 + $0x270] sm:$0xff]
        %v3725 = vld [vmem:[#allocation2 + $0x278] sm:$0xff]
        %v3726 = vld [vmem:[#allocation2 + $0x280] sm:$0xff]
        %v3727 = vld [vmem:[#allocation2 + $0x288] sm:$0xff]
        %v3728 = vld [vmem:[#allocation2 + $0x290] sm:$0xff]
        %v3729 = vld [vmem:[#allocation2 + $0x298] sm:$0xff]
        %v3730 = vld [vmem:[#allocation2 + $0x2a0] sm:$0xff]
        %v3731 = vld [vmem:[#allocation2 + $0x2a8] sm:$0xff]
        %v3732 = vld [vmem:[#allocation2 + $0x2b0] sm:$0xff]
        %v3733 = vld [vmem:[#allocation2 + $0x2b8] sm:$0xff]
        %v3734 = vld [vmem:[#allocation2 + $0x2c0] sm:$0xff]
        %v3735 = vld [vmem:[#allocation2 + $0x2c8] sm:$0xff]
        %v3736 = vld [vmem:[#allocation2 + $0x2d0] sm:$0xff]
        %v3737 = vld [vmem:[#allocation2 + $0x2d8] sm:$0xff]
        %v3738 = vld [vmem:[#allocation2 + $0x2e0] sm:$0xff]
        %v3739 = vld [vmem:[#allocation2 + $0x2e8] sm:$0xff]
        %v3740 = vld [vmem:[#allocation2 + $0x2f0] sm:$0xff]
        %v3741 = vld [vmem:[#allocation2 + $0x2f8] sm:$0xff]
        %v3742 = vld [vmem:[#allocation2 + $0x300] sm:$0xff]
        %v3743 = vld [vmem:[#allocation2 + $0x308] sm:$0xff]
        %v3744 = vld [vmem:[#allocation2 + $0x310] sm:$0xff]
        %v3745 = vld [vmem:[#allocation2 + $0x318] sm:$0xff]
        %v3746 = vld [vmem:[#allocation2 + $0x320] sm:$0xff]
        %v3747 = vld [vmem:[#allocation2 + $0x328] sm:$0xff]
        %v3748 = vld [vmem:[#allocation2 + $0x330] sm:$0xff]
        %v3749 = vld [vmem:[#allocation2 + $0x338] sm:$0xff]
        %v3750 = vld [vmem:[#allocation2 + $0x340] sm:$0xff]
        %v3751 = vld [vmem:[#allocation2 + $0x348] sm:$0xff]
        %v3752 = vld [vmem:[#allocation2 + $0x350] sm:$0xff]
        %v3753 = vld [vmem:[#allocation2 + $0x358] sm:$0xff]
        %v3754 = vld [vmem:[#allocation2 + $0x360] sm:$0xff]
        %v3755 = vld [vmem:[#allocation2 + $0x368] sm:$0xff]
        %v3756 = vld [vmem:[#allocation2 + $0x370] sm:$0xff]
        %v3757 = vld [vmem:[#allocation2 + $0x378] sm:$0xff]
        %v3758 = vld [vmem:[#allocation2 + $0x380] sm:$0xff]
        %v3759 = vld [vmem:[#allocation2 + $0x388] sm:$0xff]
        %v3760 = vld [vmem:[#allocation2 + $0x390] sm:$0xff]
        %v3761 = vld [vmem:[#allocation2 + $0x398] sm:$0xff]
        %v3762 = vld [vmem:[#allocation2 + $0x3a0] sm:$0xff]
        %v3763 = vld [vmem:[#allocation2 + $0x3a8] sm:$0xff]
        %v3764 = vld [vmem:[#allocation2 + $0x3b0] sm:$0xff]
        %v3765 = vld [vmem:[#allocation2 + $0x3b8] sm:$0xff]
        %v3766 = vld [vmem:[#allocation2 + $0x3c0] sm:$0xff]
        %v3767 = vld [vmem:[#allocation2 + $0x3c8] sm:$0xff]
        %v3768 = vld [vmem:[#allocation2 + $0x3d0] sm:$0xff]
        %v3769 = vld [vmem:[#allocation2 + $0x3d8] sm:$0xff]
        %v3770 = vld [vmem:[#allocation2 + $0x3e0] sm:$0xff]
        %v3771 = vld [vmem:[#allocation2 + $0x3e8] sm:$0xff]
        %v3772 = vld [vmem:[#allocation2 + $0x3f0] sm:$0xff]
        %v3773 = vld [vmem:[#allocation2 + $0x3f8] sm:$0xff]
        %v3774 = vadd.f32 %v3646, %v3518
        %v3775 = vadd.f32 %v3647, %v3519
        %v3776 = vadd.f32 %v3648, %v3520
        %v3777 = vadd.f32 %v3649, %v3521
        %v3778 = vadd.f32 %v3650, %v3522
        %v3779 = vadd.f32 %v3651, %v3523
        %v3780 = vadd.f32 %v3652, %v3524
        %v3781 = vadd.f32 %v3653, %v3525
        %v3782 = vadd.f32 %v3654, %v3526
        %v3783 = vadd.f32 %v3655, %v3527
        %v3784 = vadd.f32 %v3656, %v3528
        %v3785 = vadd.f32 %v3657, %v3529
        %v3786 = vadd.f32 %v3658, %v3530
        %v3787 = vadd.f32 %v3659, %v3531
        %v3788 = vadd.f32 %v3660, %v3532
        %v3789 = vadd.f32 %v3661, %v3533
        %v3790 = vadd.f32 %v3662, %v3534
        %v3791 = vadd.f32 %v3663, %v3535
        %v3792 = vadd.f32 %v3664, %v3536
        %v3793 = vadd.f32 %v3665, %v3537
        %v3794 = vadd.f32 %v3666, %v3538
        %v3795 = vadd.f32 %v3667, %v3539
        %v3796 = vadd.f32 %v3668, %v3540
        %v3797 = vadd.f32 %v3669, %v3541
        %v3798 = vadd.f32 %v3670, %v3542
        %v3799 = vadd.f32 %v3671, %v3543
        %v3800 = vadd.f32 %v3672, %v3544
        %v3801 = vadd.f32 %v3673, %v3545
        %v3802 = vadd.f32 %v3674, %v3546
        %v3803 = vadd.f32 %v3675, %v3547
        %v3804 = vadd.f32 %v3676, %v3548
        %v3805 = vadd.f32 %v3677, %v3549
        %v3806 = vadd.f32 %v3678, %v3550
        %v3807 = vadd.f32 %v3679, %v3551
        %v3808 = vadd.f32 %v3680, %v3552
        %v3809 = vadd.f32 %v3681, %v3553
        %v3810 = vadd.f32 %v3682, %v3554
        %v3811 = vadd.f32 %v3683, %v3555
        %v3812 = vadd.f32 %v3684, %v3556
        %v3813 = vadd.f32 %v3685, %v3557
        %v3814 = vadd.f32 %v3686, %v3558
        %v3815 = vadd.f32 %v3687, %v3559
        %v3816 = vadd.f32 %v3688, %v3560
        %v3817 = vadd.f32 %v3689, %v3561
        %v3818 = vadd.f32 %v3690, %v3562
        %v3819 = vadd.f32 %v3691, %v3563
        %v3820 = vadd.f32 %v3692, %v3564
        %v3821 = vadd.f32 %v3693, %v3565
        %v3822 = vadd.f32 %v3694, %v3566
        %v3823 = vadd.f32 %v3695, %v3567
        %v3824 = vadd.f32 %v3696, %v3568
        %v3825 = vadd.f32 %v3697, %v3569
        %v3826 = vadd.f32 %v3698, %v3570
        %v3827 = vadd.f32 %v3699, %v3571
        %v3828 = vadd.f32 %v3700, %v3572
        %v3829 = vadd.f32 %v3701, %v3573
        %v3830 = vadd.f32 %v3702, %v3574
        %v3831 = vadd.f32 %v3703, %v3575
        %v3832 = vadd.f32 %v3704, %v3576
        %v3833 = vadd.f32 %v3705, %v3577
        %v3834 = vadd.f32 %v3706, %v3578
        %v3835 = vadd.f32 %v3707, %v3579
        %v3836 = vadd.f32 %v3708, %v3580
        %v3837 = vadd.f32 %v3709, %v3581
        %v3838 = vadd.f32 %v3710, %v3582
        %v3839 = vadd.f32 %v3711, %v3583
        %v3840 = vadd.f32 %v3712, %v3584
        %v3841 = vadd.f32 %v3713, %v3585
        %v3842 = vadd.f32 %v3714, %v3586
        %v3843 = vadd.f32 %v3715, %v3587
        %v3844 = vadd.f32 %v3716, %v3588
        %v3845 = vadd.f32 %v3717, %v3589
        %v3846 = vadd.f32 %v3718, %v3590
        %v3847 = vadd.f32 %v3719, %v3591
        %v3848 = vadd.f32 %v3720, %v3592
        %v3849 = vadd.f32 %v3721, %v3593
        %v3850 = vadd.f32 %v3722, %v3594
        %v3851 = vadd.f32 %v3723, %v3595
        %v3852 = vadd.f32 %v3724, %v3596
        %v3853 = vadd.f32 %v3725, %v3597
        %v3854 = vadd.f32 %v3726, %v3598
        %v3855 = vadd.f32 %v3727, %v3599
        %v3856 = vadd.f32 %v3728, %v3600
        %v3857 = vadd.f32 %v3729, %v3601
        %v3858 = vadd.f32 %v3730, %v3602
        %v3859 = vadd.f32 %v3731, %v3603
        %v3860 = vadd.f32 %v3732, %v3604
        %v3861 = vadd.f32 %v3733, %v3605
        %v3862 = vadd.f32 %v3734, %v3606
        %v3863 = vadd.f32 %v3735, %v3607
        %v3864 = vadd.f32 %v3736, %v3608
        %v3865 = vadd.f32 %v3737, %v3609
        %v3866 = vadd.f32 %v3738, %v3610
        %v3867 = vadd.f32 %v3739, %v3611
        %v3868 = vadd.f32 %v3740, %v3612
        %v3869 = vadd.f32 %v3741, %v3613
        %v3870 = vadd.f32 %v3742, %v3614
        %v3871 = vadd.f32 %v3743, %v3615
        %v3872 = vadd.f32 %v3744, %v3616
        %v3873 = vadd.f32 %v3745, %v3617
        %v3874 = vadd.f32 %v3746, %v3618
        %v3875 = vadd.f32 %v3747, %v3619
        %v3876 = vadd.f32 %v3748, %v3620
        %v3877 = vadd.f32 %v3749, %v3621
        %v3878 = vadd.f32 %v3750, %v3622
        %v3879 = vadd.f32 %v3751, %v3623
        %v3880 = vadd.f32 %v3752, %v3624
        %v3881 = vadd.f32 %v3753, %v3625
        %v3882 = vadd.f32 %v3754, %v3626
        %v3883 = vadd.f32 %v3755, %v3627
        %v3884 = vadd.f32 %v3756, %v3628
        %v3885 = vadd.f32 %v3757, %v3629
        %v3886 = vadd.f32 %v3758, %v3630
        %v3887 = vadd.f32 %v3759, %v3631
        %v3888 = vadd.f32 %v3760, %v3632
        %v3889 = vadd.f32 %v3761, %v3633
        %v3890 = vadd.f32 %v3762, %v3634
        %v3891 = vadd.f32 %v3763, %v3635
        %v3892 = vadd.f32 %v3764, %v3636
        %v3893 = vadd.f32 %v3765, %v3637
        %v3894 = vadd.f32 %v3766, %v3638
        %v3895 = vadd.f32 %v3767, %v3639
        %v3896 = vadd.f32 %v3768, %v3640
        %v3897 = vadd.f32 %v3769, %v3641
        %v3898 = vadd.f32 %v3770, %v3642
        %v3899 = vadd.f32 %v3771, %v3643
        %v3900 = vadd.f32 %v3772, %v3644
        %v3901 = vadd.f32 %v3773, %v3645
        %3902 = vst [vmem:[#allocation2] sm:$0xff] %v3774
        %3903 = vst [vmem:[#allocation2 + $0x8] sm:$0xff] %v3775
        %3904 = vst [vmem:[#allocation2 + $0x10] sm:$0xff] %v3776
        %3905 = vst [vmem:[#allocation2 + $0x18] sm:$0xff] %v3777
        %3906 = vst [vmem:[#allocation2 + $0x20] sm:$0xff] %v3778
        %3907 = vst [vmem:[#allocation2 + $0x28] sm:$0xff] %v3779
        %3908 = vst [vmem:[#allocation2 + $0x30] sm:$0xff] %v3780
        %3909 = vst [vmem:[#allocation2 + $0x38] sm:$0xff] %v3781
        %3910 = vst [vmem:[#allocation2 + $0x40] sm:$0xff] %v3782
        %3911 = vst [vmem:[#allocation2 + $0x48] sm:$0xff] %v3783
        %3912 = vst [vmem:[#allocation2 + $0x50] sm:$0xff] %v3784
        %3913 = vst [vmem:[#allocation2 + $0x58] sm:$0xff] %v3785
        %3914 = vst [vmem:[#allocation2 + $0x60] sm:$0xff] %v3786
        %3915 = vst [vmem:[#allocation2 + $0x68] sm:$0xff] %v3787
        %3916 = vst [vmem:[#allocation2 + $0x70] sm:$0xff] %v3788
        %3917 = vst [vmem:[#allocation2 + $0x78] sm:$0xff] %v3789
        %3918 = vst [vmem:[#allocation2 + $0x80] sm:$0xff] %v3790
        %3919 = vst [vmem:[#allocation2 + $0x88] sm:$0xff] %v3791
        %3920 = vst [vmem:[#allocation2 + $0x90] sm:$0xff] %v3792
        %3921 = vst [vmem:[#allocation2 + $0x98] sm:$0xff] %v3793
        %3922 = vst [vmem:[#allocation2 + $0xa0] sm:$0xff] %v3794
        %3923 = vst [vmem:[#allocation2 + $0xa8] sm:$0xff] %v3795
        %3924 = vst [vmem:[#allocation2 + $0xb0] sm:$0xff] %v3796
        %3925 = vst [vmem:[#allocation2 + $0xb8] sm:$0xff] %v3797
        %3926 = vst [vmem:[#allocation2 + $0xc0] sm:$0xff] %v3798
        %3927 = vst [vmem:[#allocation2 + $0xc8] sm:$0xff] %v3799
        %3928 = vst [vmem:[#allocation2 + $0xd0] sm:$0xff] %v3800
        %3929 = vst [vmem:[#allocation2 + $0xd8] sm:$0xff] %v3801
        %3930 = vst [vmem:[#allocation2 + $0xe0] sm:$0xff] %v3802
        %3931 = vst [vmem:[#allocation2 + $0xe8] sm:$0xff] %v3803
        %3932 = vst [vmem:[#allocation2 + $0xf0] sm:$0xff] %v3804
        %3933 = vst [vmem:[#allocation2 + $0xf8] sm:$0xff] %v3805
        %3934 = vst [vmem:[#allocation2 + $0x100] sm:$0xff] %v3806
        %3935 = vst [vmem:[#allocation2 + $0x108] sm:$0xff] %v3807
        %3936 = vst [vmem:[#allocation2 + $0x110] sm:$0xff] %v3808
        %3937 = vst [vmem:[#allocation2 + $0x118] sm:$0xff] %v3809
        %3938 = vst [vmem:[#allocation2 + $0x120] sm:$0xff] %v3810
        %3939 = vst [vmem:[#allocation2 + $0x128] sm:$0xff] %v3811
        %3940 = vst [vmem:[#allocation2 + $0x130] sm:$0xff] %v3812
        %3941 = vst [vmem:[#allocation2 + $0x138] sm:$0xff] %v3813
        %3942 = vst [vmem:[#allocation2 + $0x140] sm:$0xff] %v3814
        %3943 = vst [vmem:[#allocation2 + $0x148] sm:$0xff] %v3815
        %3944 = vst [vmem:[#allocation2 + $0x150] sm:$0xff] %v3816
        %3945 = vst [vmem:[#allocation2 + $0x158] sm:$0xff] %v3817
        %3946 = vst [vmem:[#allocation2 + $0x160] sm:$0xff] %v3818
        %3947 = vst [vmem:[#allocation2 + $0x168] sm:$0xff] %v3819
        %3948 = vst [vmem:[#allocation2 + $0x170] sm:$0xff] %v3820
        %3949 = vst [vmem:[#allocation2 + $0x178] sm:$0xff] %v3821
        %3950 = vst [vmem:[#allocation2 + $0x180] sm:$0xff] %v3822
        %3951 = vst [vmem:[#allocation2 + $0x188] sm:$0xff] %v3823
        %3952 = vst [vmem:[#allocation2 + $0x190] sm:$0xff] %v3824
        %3953 = vst [vmem:[#allocation2 + $0x198] sm:$0xff] %v3825
        %3954 = vst [vmem:[#allocation2 + $0x1a0] sm:$0xff] %v3826
        %3955 = vst [vmem:[#allocation2 + $0x1a8] sm:$0xff] %v3827
        %3956 = vst [vmem:[#allocation2 + $0x1b0] sm:$0xff] %v3828
        %3957 = vst [vmem:[#allocation2 + $0x1b8] sm:$0xff] %v3829
        %3958 = vst [vmem:[#allocation2 + $0x1c0] sm:$0xff] %v3830
        %3959 = vst [vmem:[#allocation2 + $0x1c8] sm:$0xff] %v3831
        %3960 = vst [vmem:[#allocation2 + $0x1d0] sm:$0xff] %v3832
        %3961 = vst [vmem:[#allocation2 + $0x1d8] sm:$0xff] %v3833
        %3962 = vst [vmem:[#allocation2 + $0x1e0] sm:$0xff] %v3834
        %3963 = vst [vmem:[#allocation2 + $0x1e8] sm:$0xff] %v3835
        %3964 = vst [vmem:[#allocation2 + $0x1f0] sm:$0xff] %v3836
        %3965 = vst [vmem:[#allocation2 + $0x1f8] sm:$0xff] %v3837
        %3966 = vst [vmem:[#allocation2 + $0x200] sm:$0xff] %v3838
        %3967 = vst [vmem:[#allocation2 + $0x208] sm:$0xff] %v3839
        %3968 = vst [vmem:[#allocation2 + $0x210] sm:$0xff] %v3840
        %3969 = vst [vmem:[#allocation2 + $0x218] sm:$0xff] %v3841
        %3970 = vst [vmem:[#allocation2 + $0x220] sm:$0xff] %v3842
        %3971 = vst [vmem:[#allocation2 + $0x228] sm:$0xff] %v3843
        %3972 = vst [vmem:[#allocation2 + $0x230] sm:$0xff] %v3844
        %3973 = vst [vmem:[#allocation2 + $0x238] sm:$0xff] %v3845
        %3974 = vst [vmem:[#allocation2 + $0x240] sm:$0xff] %v3846
        %3975 = vst [vmem:[#allocation2 + $0x248] sm:$0xff] %v3847
        %3976 = vst [vmem:[#allocation2 + $0x250] sm:$0xff] %v3848
        %3977 = vst [vmem:[#allocation2 + $0x258] sm:$0xff] %v3849
        %3978 = vst [vmem:[#allocation2 + $0x260] sm:$0xff] %v3850
        %3979 = vst [vmem:[#allocation2 + $0x268] sm:$0xff] %v3851
        %3980 = vst [vmem:[#allocation2 + $0x270] sm:$0xff] %v3852
        %3981 = vst [vmem:[#allocation2 + $0x278] sm:$0xff] %v3853
        %3982 = vst [vmem:[#allocation2 + $0x280] sm:$0xff] %v3854
        %3983 = vst [vmem:[#allocation2 + $0x288] sm:$0xff] %v3855
        %3984 = vst [vmem:[#allocation2 + $0x290] sm:$0xff] %v3856
        %3985 = vst [vmem:[#allocation2 + $0x298] sm:$0xff] %v3857
        %3986 = vst [vmem:[#allocation2 + $0x2a0] sm:$0xff] %v3858
        %3987 = vst [vmem:[#allocation2 + $0x2a8] sm:$0xff] %v3859
        %3988 = vst [vmem:[#allocation2 + $0x2b0] sm:$0xff] %v3860
        %3989 = vst [vmem:[#allocation2 + $0x2b8] sm:$0xff] %v3861
        %3990 = vst [vmem:[#allocation2 + $0x2c0] sm:$0xff] %v3862
        %3991 = vst [vmem:[#allocation2 + $0x2c8] sm:$0xff] %v3863
        %3992 = vst [vmem:[#allocation2 + $0x2d0] sm:$0xff] %v3864
        %3993 = vst [vmem:[#allocation2 + $0x2d8] sm:$0xff] %v3865
        %3994 = vst [vmem:[#allocation2 + $0x2e0] sm:$0xff] %v3866
        %3995 = vst [vmem:[#allocation2 + $0x2e8] sm:$0xff] %v3867
        %3996 = vst [vmem:[#allocation2 + $0x2f0] sm:$0xff] %v3868
        %3997 = vst [vmem:[#allocation2 + $0x2f8] sm:$0xff] %v3869
        %3998 = vst [vmem:[#allocation2 + $0x300] sm:$0xff] %v3870
        %3999 = vst [vmem:[#allocation2 + $0x308] sm:$0xff] %v3871
        %4000 = vst [vmem:[#allocation2 + $0x310] sm:$0xff] %v3872
        %4001 = vst [vmem:[#allocation2 + $0x318] sm:$0xff] %v3873
        %4002 = vst [vmem:[#allocation2 + $0x320] sm:$0xff] %v3874
        %4003 = vst [vmem:[#allocation2 + $0x328] sm:$0xff] %v3875
        %4004 = vst [vmem:[#allocation2 + $0x330] sm:$0xff] %v3876
        %4005 = vst [vmem:[#allocation2 + $0x338] sm:$0xff] %v3877
        %4006 = vst [vmem:[#allocation2 + $0x340] sm:$0xff] %v3878
        %4007 = vst [vmem:[#allocation2 + $0x348] sm:$0xff] %v3879
        %4008 = vst [vmem:[#allocation2 + $0x350] sm:$0xff] %v3880
        %4009 = vst [vmem:[#allocation2 + $0x358] sm:$0xff] %v3881
        %4010 = vst [vmem:[#allocation2 + $0x360] sm:$0xff] %v3882
        %4011 = vst [vmem:[#allocation2 + $0x368] sm:$0xff] %v3883
        %4012 = vst [vmem:[#allocation2 + $0x370] sm:$0xff] %v3884
        %4013 = vst [vmem:[#allocation2 + $0x378] sm:$0xff] %v3885
        %4014 = vst [vmem:[#allocation2 + $0x380] sm:$0xff] %v3886
        %4015 = vst [vmem:[#allocation2 + $0x388] sm:$0xff] %v3887
        %4016 = vst [vmem:[#allocation2 + $0x390] sm:$0xff] %v3888
        %4017 = vst [vmem:[#allocation2 + $0x398] sm:$0xff] %v3889
        %4018 = vst [vmem:[#allocation2 + $0x3a0] sm:$0xff] %v3890
        %4019 = vst [vmem:[#allocation2 + $0x3a8] sm:$0xff] %v3891
        %4020 = vst [vmem:[#allocation2 + $0x3b0] sm:$0xff] %v3892
        %4021 = vst [vmem:[#allocation2 + $0x3b8] sm:$0xff] %v3893
        %4022 = vst [vmem:[#allocation2 + $0x3c0] sm:$0xff] %v3894
        %4023 = vst [vmem:[#allocation2 + $0x3c8] sm:$0xff] %v3895
        %4024 = vst [vmem:[#allocation2 + $0x3d0] sm:$0xff] %v3896
        %4025 = vst [vmem:[#allocation2 + $0x3d8] sm:$0xff] %v3897
        %4026 = vst [vmem:[#allocation2 + $0x3e0] sm:$0xff] %v3898
        %4027 = vst [vmem:[#allocation2 + $0x3e8] sm:$0xff] %v3899
        %4028 = vst [vmem:[#allocation2 + $0x3f0] sm:$0xff] %v3900
        %4029 = vst [vmem:[#allocation2 + $0x3f8] sm:$0xff] %v3901
        // Predicated region
        $region57: #{classification_model_forward.1} parent=39 // pred_check
          %p4030 = pneg %p303
        $region58: #{classification_model_forward.1} parent=39 // pred_check_branch
          %4032 = sbr.rel (%p4030) target = $region60
        $region59: #{classification_model_forward.1} parent=39 // pred_region
          %v4033 = vld [vmem:[#allocation7] sm:$0xff]
          %v4034 = vld [vmem:[#allocation7 + $0x8] sm:$0xff]
          %v4035 = vld [vmem:[#allocation7 + $0x10] sm:$0xff]
          %v4036 = vld [vmem:[#allocation7 + $0x18] sm:$0xff]
          %v4037 = vld [vmem:[#allocation7 + $0x20] sm:$0xff]
          %v4038 = vld [vmem:[#allocation7 + $0x28] sm:$0xff]
          %v4039 = vld [vmem:[#allocation7 + $0x30] sm:$0xff]
          %v4040 = vld [vmem:[#allocation7 + $0x38] sm:$0xff]
          %v4041 = vld [vmem:[#allocation7 + $0x40] sm:$0xff]
          %v4042 = vld [vmem:[#allocation7 + $0x48] sm:$0xff]
          %v4043 = vld [vmem:[#allocation7 + $0x50] sm:$0xff]
          %v4044 = vld [vmem:[#allocation7 + $0x58] sm:$0xff]
          %v4045 = vld [vmem:[#allocation7 + $0x60] sm:$0xff]
          %v4046 = vld [vmem:[#allocation7 + $0x68] sm:$0xff]
          %v4047 = vld [vmem:[#allocation7 + $0x70] sm:$0xff]
          %v4048 = vld [vmem:[#allocation7 + $0x78] sm:$0xff]
          %v4049 = vld [vmem:[#allocation7 + $0x80] sm:$0xff]
          %v4050 = vld [vmem:[#allocation7 + $0x88] sm:$0xff]
          %v4051 = vld [vmem:[#allocation7 + $0x90] sm:$0xff]
          %v4052 = vld [vmem:[#allocation7 + $0x98] sm:$0xff]
          %v4053 = vld [vmem:[#allocation7 + $0xa0] sm:$0xff]
          %v4054 = vld [vmem:[#allocation7 + $0xa8] sm:$0xff]
          %v4055 = vld [vmem:[#allocation7 + $0xb0] sm:$0xff]
          %v4056 = vld [vmem:[#allocation7 + $0xb8] sm:$0xff]
          %v4057 = vld [vmem:[#allocation7 + $0xc0] sm:$0xff]
          %v4058 = vld [vmem:[#allocation7 + $0xc8] sm:$0xff]
          %v4059 = vld [vmem:[#allocation7 + $0xd0] sm:$0xff]
          %v4060 = vld [vmem:[#allocation7 + $0xd8] sm:$0xff]
          %v4061 = vld [vmem:[#allocation7 + $0xe0] sm:$0xff]
          %v4062 = vld [vmem:[#allocation7 + $0xe8] sm:$0xff]
          %v4063 = vld [vmem:[#allocation7 + $0xf0] sm:$0xff]
          %v4064 = vld [vmem:[#allocation7 + $0xf8] sm:$0xff]
          %v4065 = vld [vmem:[#allocation7 + $0x100] sm:$0xff]
          %v4066 = vld [vmem:[#allocation7 + $0x108] sm:$0xff]
          %v4067 = vld [vmem:[#allocation7 + $0x110] sm:$0xff]
          %v4068 = vld [vmem:[#allocation7 + $0x118] sm:$0xff]
          %v4069 = vld [vmem:[#allocation7 + $0x120] sm:$0xff]
          %v4070 = vld [vmem:[#allocation7 + $0x128] sm:$0xff]
          %v4071 = vld [vmem:[#allocation7 + $0x130] sm:$0xff]
          %v4072 = vld [vmem:[#allocation7 + $0x138] sm:$0xff]
          %v4073 = vld [vmem:[#allocation7 + $0x140] sm:$0xff]
          %v4074 = vld [vmem:[#allocation7 + $0x148] sm:$0xff]
          %v4075 = vld [vmem:[#allocation7 + $0x150] sm:$0xff]
          %v4076 = vld [vmem:[#allocation7 + $0x158] sm:$0xff]
          %v4077 = vld [vmem:[#allocation7 + $0x160] sm:$0xff]
          %v4078 = vld [vmem:[#allocation7 + $0x168] sm:$0xff]
          %v4079 = vld [vmem:[#allocation7 + $0x170] sm:$0xff]
          %v4080 = vld [vmem:[#allocation7 + $0x178] sm:$0xff]
          %v4081 = vld [vmem:[#allocation7 + $0x180] sm:$0xff]
          %v4082 = vld [vmem:[#allocation7 + $0x188] sm:$0xff]
          %v4083 = vld [vmem:[#allocation7 + $0x190] sm:$0xff]
          %v4084 = vld [vmem:[#allocation7 + $0x198] sm:$0xff]
          %v4085 = vld [vmem:[#allocation7 + $0x1a0] sm:$0xff]
          %v4086 = vld [vmem:[#allocation7 + $0x1a8] sm:$0xff]
          %v4087 = vld [vmem:[#allocation7 + $0x1b0] sm:$0xff]
          %v4088 = vld [vmem:[#allocation7 + $0x1b8] sm:$0xff]
          %v4089 = vld [vmem:[#allocation7 + $0x1c0] sm:$0xff]
          %v4090 = vld [vmem:[#allocation7 + $0x1c8] sm:$0xff]
          %v4091 = vld [vmem:[#allocation7 + $0x1d0] sm:$0xff]
          %v4092 = vld [vmem:[#allocation7 + $0x1d8] sm:$0xff]
          %v4093 = vld [vmem:[#allocation7 + $0x1e0] sm:$0xff]
          %v4094 = vld [vmem:[#allocation7 + $0x1e8] sm:$0xff]
          %v4095 = vld [vmem:[#allocation7 + $0x1f0] sm:$0xff]
          %v4096 = vld [vmem:[#allocation7 + $0x1f8] sm:$0xff]
          %v4097 = vld [vmem:[#allocation7 + $0x200] sm:$0xff]
          %v4098 = vld [vmem:[#allocation7 + $0x208] sm:$0xff]
          %v4099 = vld [vmem:[#allocation7 + $0x210] sm:$0xff]
          %v4100 = vld [vmem:[#allocation7 + $0x218] sm:$0xff]
          %v4101 = vld [vmem:[#allocation7 + $0x220] sm:$0xff]
          %v4102 = vld [vmem:[#allocation7 + $0x228] sm:$0xff]
          %v4103 = vld [vmem:[#allocation7 + $0x230] sm:$0xff]
          %v4104 = vld [vmem:[#allocation7 + $0x238] sm:$0xff]
          %v4105 = vld [vmem:[#allocation7 + $0x240] sm:$0xff]
          %v4106 = vld [vmem:[#allocation7 + $0x248] sm:$0xff]
          %v4107 = vld [vmem:[#allocation7 + $0x250] sm:$0xff]
          %v4108 = vld [vmem:[#allocation7 + $0x258] sm:$0xff]
          %v4109 = vld [vmem:[#allocation7 + $0x260] sm:$0xff]
          %v4110 = vld [vmem:[#allocation7 + $0x268] sm:$0xff]
          %v4111 = vld [vmem:[#allocation7 + $0x270] sm:$0xff]
          %v4112 = vld [vmem:[#allocation7 + $0x278] sm:$0xff]
          %v4113 = vld [vmem:[#allocation7 + $0x280] sm:$0xff]
          %v4114 = vld [vmem:[#allocation7 + $0x288] sm:$0xff]
          %v4115 = vld [vmem:[#allocation7 + $0x290] sm:$0xff]
          %v4116 = vld [vmem:[#allocation7 + $0x298] sm:$0xff]
          %v4117 = vld [vmem:[#allocation7 + $0x2a0] sm:$0xff]
          %v4118 = vld [vmem:[#allocation7 + $0x2a8] sm:$0xff]
          %v4119 = vld [vmem:[#allocation7 + $0x2b0] sm:$0xff]
          %v4120 = vld [vmem:[#allocation7 + $0x2b8] sm:$0xff]
          %v4121 = vld [vmem:[#allocation7 + $0x2c0] sm:$0xff]
          %v4122 = vld [vmem:[#allocation7 + $0x2c8] sm:$0xff]
          %v4123 = vld [vmem:[#allocation7 + $0x2d0] sm:$0xff]
          %v4124 = vld [vmem:[#allocation7 + $0x2d8] sm:$0xff]
          %v4125 = vld [vmem:[#allocation7 + $0x2e0] sm:$0xff]
          %v4126 = vld [vmem:[#allocation7 + $0x2e8] sm:$0xff]
          %v4127 = vld [vmem:[#allocation7 + $0x2f0] sm:$0xff]
          %v4128 = vld [vmem:[#allocation7 + $0x2f8] sm:$0xff]
          %v4129 = vld [vmem:[#allocation7 + $0x300] sm:$0xff]
          %v4130 = vld [vmem:[#allocation7 + $0x308] sm:$0xff]
          %v4131 = vld [vmem:[#allocation7 + $0x310] sm:$0xff]
          %v4132 = vld [vmem:[#allocation7 + $0x318] sm:$0xff]
          %v4133 = vld [vmem:[#allocation7 + $0x320] sm:$0xff]
          %v4134 = vld [vmem:[#allocation7 + $0x328] sm:$0xff]
          %v4135 = vld [vmem:[#allocation7 + $0x330] sm:$0xff]
          %v4136 = vld [vmem:[#allocation7 + $0x338] sm:$0xff]
          %v4137 = vld [vmem:[#allocation7 + $0x340] sm:$0xff]
          %v4138 = vld [vmem:[#allocation7 + $0x348] sm:$0xff]
          %v4139 = vld [vmem:[#allocation7 + $0x350] sm:$0xff]
          %v4140 = vld [vmem:[#allocation7 + $0x358] sm:$0xff]
          %v4141 = vld [vmem:[#allocation7 + $0x360] sm:$0xff]
          %v4142 = vld [vmem:[#allocation7 + $0x368] sm:$0xff]
          %v4143 = vld [vmem:[#allocation7 + $0x370] sm:$0xff]
          %v4144 = vld [vmem:[#allocation7 + $0x378] sm:$0xff]
          %v4145 = vld [vmem:[#allocation7 + $0x380] sm:$0xff]
          %v4146 = vld [vmem:[#allocation7 + $0x388] sm:$0xff]
          %v4147 = vld [vmem:[#allocation7 + $0x390] sm:$0xff]
          %v4148 = vld [vmem:[#allocation7 + $0x398] sm:$0xff]
          %v4149 = vld [vmem:[#allocation7 + $0x3a0] sm:$0xff]
          %v4150 = vld [vmem:[#allocation7 + $0x3a8] sm:$0xff]
          %v4151 = vld [vmem:[#allocation7 + $0x3b0] sm:$0xff]
          %v4152 = vld [vmem:[#allocation7 + $0x3b8] sm:$0xff]
          %v4153 = vld [vmem:[#allocation7 + $0x3c0] sm:$0xff]
          %v4154 = vld [vmem:[#allocation7 + $0x3c8] sm:$0xff]
          %v4155 = vld [vmem:[#allocation7 + $0x3d0] sm:$0xff]
          %v4156 = vld [vmem:[#allocation7 + $0x3d8] sm:$0xff]
          %v4157 = vld [vmem:[#allocation7 + $0x3e0] sm:$0xff]
          %v4158 = vld [vmem:[#allocation7 + $0x3e8] sm:$0xff]
          %v4159 = vld [vmem:[#allocation7 + $0x3f0] sm:$0xff]
          %v4160 = vld [vmem:[#allocation7 + $0x3f8] sm:$0xff]
          %v4161 = vld [vmem:[#allocation2] sm:$0xff]
          %v4162 = vld [vmem:[#allocation2 + $0x8] sm:$0xff]
          %v4163 = vld [vmem:[#allocation2 + $0x10] sm:$0xff]
          %v4164 = vld [vmem:[#allocation2 + $0x18] sm:$0xff]
          %v4165 = vld [vmem:[#allocation2 + $0x20] sm:$0xff]
          %v4166 = vld [vmem:[#allocation2 + $0x28] sm:$0xff]
          %v4167 = vld [vmem:[#allocation2 + $0x30] sm:$0xff]
          %v4168 = vld [vmem:[#allocation2 + $0x38] sm:$0xff]
          %v4169 = vld [vmem:[#allocation2 + $0x40] sm:$0xff]
          %v4170 = vld [vmem:[#allocation2 + $0x48] sm:$0xff]
          %v4171 = vld [vmem:[#allocation2 + $0x50] sm:$0xff]
          %v4172 = vld [vmem:[#allocation2 + $0x58] sm:$0xff]
          %v4173 = vld [vmem:[#allocation2 + $0x60] sm:$0xff]
          %v4174 = vld [vmem:[#allocation2 + $0x68] sm:$0xff]
          %v4175 = vld [vmem:[#allocation2 + $0x70] sm:$0xff]
          %v4176 = vld [vmem:[#allocation2 + $0x78] sm:$0xff]
          %v4177 = vld [vmem:[#allocation2 + $0x80] sm:$0xff]
          %v4178 = vld [vmem:[#allocation2 + $0x88] sm:$0xff]
          %v4179 = vld [vmem:[#allocation2 + $0x90] sm:$0xff]
          %v4180 = vld [vmem:[#allocation2 + $0x98] sm:$0xff]
          %v4181 = vld [vmem:[#allocation2 + $0xa0] sm:$0xff]
          %v4182 = vld [vmem:[#allocation2 + $0xa8] sm:$0xff]
          %v4183 = vld [vmem:[#allocation2 + $0xb0] sm:$0xff]
          %v4184 = vld [vmem:[#allocation2 + $0xb8] sm:$0xff]
          %v4185 = vld [vmem:[#allocation2 + $0xc0] sm:$0xff]
          %v4186 = vld [vmem:[#allocation2 + $0xc8] sm:$0xff]
          %v4187 = vld [vmem:[#allocation2 + $0xd0] sm:$0xff]
          %v4188 = vld [vmem:[#allocation2 + $0xd8] sm:$0xff]
          %v4189 = vld [vmem:[#allocation2 + $0xe0] sm:$0xff]
          %v4190 = vld [vmem:[#allocation2 + $0xe8] sm:$0xff]
          %v4191 = vld [vmem:[#allocation2 + $0xf0] sm:$0xff]
          %v4192 = vld [vmem:[#allocation2 + $0xf8] sm:$0xff]
          %v4193 = vld [vmem:[#allocation2 + $0x100] sm:$0xff]
          %v4194 = vld [vmem:[#allocation2 + $0x108] sm:$0xff]
          %v4195 = vld [vmem:[#allocation2 + $0x110] sm:$0xff]
          %v4196 = vld [vmem:[#allocation2 + $0x118] sm:$0xff]
          %v4197 = vld [vmem:[#allocation2 + $0x120] sm:$0xff]
          %v4198 = vld [vmem:[#allocation2 + $0x128] sm:$0xff]
          %v4199 = vld [vmem:[#allocation2 + $0x130] sm:$0xff]
          %v4200 = vld [vmem:[#allocation2 + $0x138] sm:$0xff]
          %v4201 = vld [vmem:[#allocation2 + $0x140] sm:$0xff]
          %v4202 = vld [vmem:[#allocation2 + $0x148] sm:$0xff]
          %v4203 = vld [vmem:[#allocation2 + $0x150] sm:$0xff]
          %v4204 = vld [vmem:[#allocation2 + $0x158] sm:$0xff]
          %v4205 = vld [vmem:[#allocation2 + $0x160] sm:$0xff]
          %v4206 = vld [vmem:[#allocation2 + $0x168] sm:$0xff]
          %v4207 = vld [vmem:[#allocation2 + $0x170] sm:$0xff]
          %v4208 = vld [vmem:[#allocation2 + $0x178] sm:$0xff]
          %v4209 = vld [vmem:[#allocation2 + $0x180] sm:$0xff]
          %v4210 = vld [vmem:[#allocation2 + $0x188] sm:$0xff]
          %v4211 = vld [vmem:[#allocation2 + $0x190] sm:$0xff]
          %v4212 = vld [vmem:[#allocation2 + $0x198] sm:$0xff]
          %v4213 = vld [vmem:[#allocation2 + $0x1a0] sm:$0xff]
          %v4214 = vld [vmem:[#allocation2 + $0x1a8] sm:$0xff]
          %v4215 = vld [vmem:[#allocation2 + $0x1b0] sm:$0xff]
          %v4216 = vld [vmem:[#allocation2 + $0x1b8] sm:$0xff]
          %v4217 = vld [vmem:[#allocation2 + $0x1c0] sm:$0xff]
          %v4218 = vld [vmem:[#allocation2 + $0x1c8] sm:$0xff]
          %v4219 = vld [vmem:[#allocation2 + $0x1d0] sm:$0xff]
          %v4220 = vld [vmem:[#allocation2 + $0x1d8] sm:$0xff]
          %v4221 = vld [vmem:[#allocation2 + $0x1e0] sm:$0xff]
          %v4222 = vld [vmem:[#allocation2 + $0x1e8] sm:$0xff]
          %v4223 = vld [vmem:[#allocation2 + $0x1f0] sm:$0xff]
          %v4224 = vld [vmem:[#allocation2 + $0x1f8] sm:$0xff]
          %v4225 = vld [vmem:[#allocation2 + $0x200] sm:$0xff]
          %v4226 = vld [vmem:[#allocation2 + $0x208] sm:$0xff]
          %v4227 = vld [vmem:[#allocation2 + $0x210] sm:$0xff]
          %v4228 = vld [vmem:[#allocation2 + $0x218] sm:$0xff]
          %v4229 = vld [vmem:[#allocation2 + $0x220] sm:$0xff]
          %v4230 = vld [vmem:[#allocation2 + $0x228] sm:$0xff]
          %v4231 = vld [vmem:[#allocation2 + $0x230] sm:$0xff]
          %v4232 = vld [vmem:[#allocation2 + $0x238] sm:$0xff]
          %v4233 = vld [vmem:[#allocation2 + $0x240] sm:$0xff]
          %v4234 = vld [vmem:[#allocation2 + $0x248] sm:$0xff]
          %v4235 = vld [vmem:[#allocation2 + $0x250] sm:$0xff]
          %v4236 = vld [vmem:[#allocation2 + $0x258] sm:$0xff]
          %v4237 = vld [vmem:[#allocation2 + $0x260] sm:$0xff]
          %v4238 = vld [vmem:[#allocation2 + $0x268] sm:$0xff]
          %v4239 = vld [vmem:[#allocation2 + $0x270] sm:$0xff]
          %v4240 = vld [vmem:[#allocation2 + $0x278] sm:$0xff]
          %v4241 = vld [vmem:[#allocation2 + $0x280] sm:$0xff]
          %v4242 = vld [vmem:[#allocation2 + $0x288] sm:$0xff]
          %v4243 = vld [vmem:[#allocation2 + $0x290] sm:$0xff]
          %v4244 = vld [vmem:[#allocation2 + $0x298] sm:$0xff]
          %v4245 = vld [vmem:[#allocation2 + $0x2a0] sm:$0xff]
          %v4246 = vld [vmem:[#allocation2 + $0x2a8] sm:$0xff]
          %v4247 = vld [vmem:[#allocation2 + $0x2b0] sm:$0xff]
          %v4248 = vld [vmem:[#allocation2 + $0x2b8] sm:$0xff]
          %v4249 = vld [vmem:[#allocation2 + $0x2c0] sm:$0xff]
          %v4250 = vld [vmem:[#allocation2 + $0x2c8] sm:$0xff]
          %v4251 = vld [vmem:[#allocation2 + $0x2d0] sm:$0xff]
          %v4252 = vld [vmem:[#allocation2 + $0x2d8] sm:$0xff]
          %v4253 = vld [vmem:[#allocation2 + $0x2e0] sm:$0xff]
          %v4254 = vld [vmem:[#allocation2 + $0x2e8] sm:$0xff]
          %v4255 = vld [vmem:[#allocation2 + $0x2f0] sm:$0xff]
          %v4256 = vld [vmem:[#allocation2 + $0x2f8] sm:$0xff]
          %v4257 = vld [vmem:[#allocation2 + $0x300] sm:$0xff]
          %v4258 = vld [vmem:[#allocation2 + $0x308] sm:$0xff]
          %v4259 = vld [vmem:[#allocation2 + $0x310] sm:$0xff]
          %v4260 = vld [vmem:[#allocation2 + $0x318] sm:$0xff]
          %v4261 = vld [vmem:[#allocation2 + $0x320] sm:$0xff]
          %v4262 = vld [vmem:[#allocation2 + $0x328] sm:$0xff]
          %v4263 = vld [vmem:[#allocation2 + $0x330] sm:$0xff]
          %v4264 = vld [vmem:[#allocation2 + $0x338] sm:$0xff]
          %v4265 = vld [vmem:[#allocation2 + $0x340] sm:$0xff]
          %v4266 = vld [vmem:[#allocation2 + $0x348] sm:$0xff]
          %v4267 = vld [vmem:[#allocation2 + $0x350] sm:$0xff]
          %v4268 = vld [vmem:[#allocation2 + $0x358] sm:$0xff]
          %v4269 = vld [vmem:[#allocation2 + $0x360] sm:$0xff]
          %v4270 = vld [vmem:[#allocation2 + $0x368] sm:$0xff]
          %v4271 = vld [vmem:[#allocation2 + $0x370] sm:$0xff]
          %v4272 = vld [vmem:[#allocation2 + $0x378] sm:$0xff]
          %v4273 = vld [vmem:[#allocation2 + $0x380] sm:$0xff]
          %v4274 = vld [vmem:[#allocation2 + $0x388] sm:$0xff]
          %v4275 = vld [vmem:[#allocation2 + $0x390] sm:$0xff]
          %v4276 = vld [vmem:[#allocation2 + $0x398] sm:$0xff]
          %v4277 = vld [vmem:[#allocation2 + $0x3a0] sm:$0xff]
          %v4278 = vld [vmem:[#allocation2 + $0x3a8] sm:$0xff]
          %v4279 = vld [vmem:[#allocation2 + $0x3b0] sm:$0xff]
          %v4280 = vld [vmem:[#allocation2 + $0x3b8] sm:$0xff]
          %v4281 = vld [vmem:[#allocation2 + $0x3c0] sm:$0xff]
          %v4282 = vld [vmem:[#allocation2 + $0x3c8] sm:$0xff]
          %v4283 = vld [vmem:[#allocation2 + $0x3d0] sm:$0xff]
          %v4284 = vld [vmem:[#allocation2 + $0x3d8] sm:$0xff]
          %v4285 = vld [vmem:[#allocation2 + $0x3e0] sm:$0xff]
          %v4286 = vld [vmem:[#allocation2 + $0x3e8] sm:$0xff]
          %v4287 = vld [vmem:[#allocation2 + $0x3f0] sm:$0xff]
          %v4288 = vld [vmem:[#allocation2 + $0x3f8] sm:$0xff]
          %4289 = vmatpush.msra.mxu0 %v4176
          %4290 = vmatpush.msra.mxu0 %v4175
          %4291 = vmatpush.msra.mxu0 %v4174
          %4292 = vmatpush.msra.mxu0 %v4173
          %4293 = vmatpush.msra.mxu0 %v4172
          %4294 = vmatpush.msra.mxu0 %v4171
          %4295 = vmatpush.msra.mxu0 %v4170
          %4296 = vmatpush.msra.mxu0 %v4169
          %4297 = vmatpush.msra.mxu0 %v4168
          %4298 = vmatpush.msra.mxu0 %v4167
          %4299 = vmatpush.msra.mxu0 %v4166
          %4300 = vmatpush.msra.mxu0 %v4165
          %4301 = vmatpush.msra.mxu0 %v4164
          %4302 = vmatpush.msra.mxu0 %v4163
          %4303 = vmatpush.msra.mxu0 %v4162
          %4304 = vmatpush.msra.mxu0 %v4161
          %4305 = vmatmul.f32.gmra.mxu0 %v4033
          %v4306 = vpop.f32.mrf.mxu0
          %v4307 = vadd.f32 0.0, %v4306
          %4308 = vmatmul.f32.gmra.mxu0 %v4041
          %v4309 = vpop.f32.mrf.mxu0
          %v4310 = vadd.f32 0.0, %v4309
          %4311 = vmatmul.f32.gmra.mxu0 %v4049
          %v4312 = vpop.f32.mrf.mxu0
          %v4313 = vadd.f32 0.0, %v4312
          %4314 = vmatmul.f32.gmra.mxu0 %v4057
          %v4315 = vpop.f32.mrf.mxu0
          %v4316 = vadd.f32 0.0, %v4315
          %4317 = vmatmul.f32.gmra.mxu0 %v4065
          %v4318 = vpop.f32.mrf.mxu0
          %v4319 = vadd.f32 0.0, %v4318
          %4320 = vmatmul.f32.gmra.mxu0 %v4073
          %v4321 = vpop.f32.mrf.mxu0
          %v4322 = vadd.f32 0.0, %v4321
          %4323 = vmatmul.f32.gmra.mxu0 %v4081
          %v4324 = vpop.f32.mrf.mxu0
          %v4325 = vadd.f32 0.0, %v4324
          %4326 = vmatmul.f32.gmra.mxu0 %v4089
          %v4327 = vpop.f32.mrf.mxu0
          %v4328 = vadd.f32 0.0, %v4327
          %4329 = vmatmul.f32.gmra.mxu0 %v4097
          %v4330 = vpop.f32.mrf.mxu0
          %v4331 = vadd.f32 0.0, %v4330
          %4332 = vmatmul.f32.gmra.mxu0 %v4105
          %v4333 = vpop.f32.mrf.mxu0
          %v4334 = vadd.f32 0.0, %v4333
          %4335 = vmatmul.f32.gmra.mxu0 %v4113
          %v4336 = vpop.f32.mrf.mxu0
          %v4337 = vadd.f32 0.0, %v4336
          %4338 = vmatmul.f32.gmra.mxu0 %v4121
          %v4339 = vpop.f32.mrf.mxu0
          %v4340 = vadd.f32 0.0, %v4339
          %4341 = vmatmul.f32.gmra.mxu0 %v4129
          %v4342 = vpop.f32.mrf.mxu0
          %v4343 = vadd.f32 0.0, %v4342
          %4344 = vmatmul.f32.gmra.mxu0 %v4137
          %v4345 = vpop.f32.mrf.mxu0
          %v4346 = vadd.f32 0.0, %v4345
          %4347 = vmatmul.f32.gmra.mxu0 %v4145
          %v4348 = vpop.f32.mrf.mxu0
          %v4349 = vadd.f32 0.0, %v4348
          %4350 = vmatmul.f32.gmra.mxu0 %v4153
          %v4351 = vpop.f32.mrf.mxu0
          %v4352 = vadd.f32 0.0, %v4351
          %4353 = vdwg.mxu0
          %4354 = vmatpush.msra.mxu0 %v4192
          %4355 = vmatpush.msra.mxu0 %v4191
          %4356 = vmatpush.msra.mxu0 %v4190
          %4357 = vmatpush.msra.mxu0 %v4189
          %4358 = vmatpush.msra.mxu0 %v4188
          %4359 = vmatpush.msra.mxu0 %v4187
          %4360 = vmatpush.msra.mxu0 %v4186
          %4361 = vmatpush.msra.mxu0 %v4185
          %4362 = vmatpush.msra.mxu0 %v4184
          %4363 = vmatpush.msra.mxu0 %v4183
          %4364 = vmatpush.msra.mxu0 %v4182
          %4365 = vmatpush.msra.mxu0 %v4181
          %4366 = vmatpush.msra.mxu0 %v4180
          %4367 = vmatpush.msra.mxu0 %v4179
          %4368 = vmatpush.msra.mxu0 %v4178
          %4369 = vmatpush.msra.mxu0 %v4177
          %4370 = vmatmul.f32.gmra.mxu0 %v4034
          %v4371 = vpop.f32.mrf.mxu0
          %v4372 = vadd.f32 %v4307, %v4371
          %4373 = vmatmul.f32.gmra.mxu0 %v4042
          %v4374 = vpop.f32.mrf.mxu0
          %v4375 = vadd.f32 %v4310, %v4374
          %4376 = vmatmul.f32.gmra.mxu0 %v4050
          %v4377 = vpop.f32.mrf.mxu0
          %v4378 = vadd.f32 %v4313, %v4377
          %4379 = vmatmul.f32.gmra.mxu0 %v4058
          %v4380 = vpop.f32.mrf.mxu0
          %v4381 = vadd.f32 %v4316, %v4380
          %4382 = vmatmul.f32.gmra.mxu0 %v4066
          %v4383 = vpop.f32.mrf.mxu0
          %v4384 = vadd.f32 %v4319, %v4383
          %4385 = vmatmul.f32.gmra.mxu0 %v4074
          %v4386 = vpop.f32.mrf.mxu0
          %v4387 = vadd.f32 %v4322, %v4386
          %4388 = vmatmul.f32.gmra.mxu0 %v4082
          %v4389 = vpop.f32.mrf.mxu0
          %v4390 = vadd.f32 %v4325, %v4389
          %4391 = vmatmul.f32.gmra.mxu0 %v4090
          %v4392 = vpop.f32.mrf.mxu0
          %v4393 = vadd.f32 %v4328, %v4392
          %4394 = vmatmul.f32.gmra.mxu0 %v4098
          %v4395 = vpop.f32.mrf.mxu0
          %v4396 = vadd.f32 %v4331, %v4395
          %4397 = vmatmul.f32.gmra.mxu0 %v4106
          %v4398 = vpop.f32.mrf.mxu0
          %v4399 = vadd.f32 %v4334, %v4398
          %4400 = vmatmul.f32.gmra.mxu0 %v4114
          %v4401 = vpop.f32.mrf.mxu0
          %v4402 = vadd.f32 %v4337, %v4401
          %4403 = vmatmul.f32.gmra.mxu0 %v4122
          %v4404 = vpop.f32.mrf.mxu0
          %v4405 = vadd.f32 %v4340, %v4404
          %4406 = vmatmul.f32.gmra.mxu0 %v4130
          %v4407 = vpop.f32.mrf.mxu0
          %v4408 = vadd.f32 %v4343, %v4407
          %4409 = vmatmul.f32.gmra.mxu0 %v4138
          %v4410 = vpop.f32.mrf.mxu0
          %v4411 = vadd.f32 %v4346, %v4410
          %4412 = vmatmul.f32.gmra.mxu0 %v4146
          %v4413 = vpop.f32.mrf.mxu0
          %v4414 = vadd.f32 %v4349, %v4413
          %4415 = vmatmul.f32.gmra.mxu0 %v4154
          %v4416 = vpop.f32.mrf.mxu0
          %v4417 = vadd.f32 %v4352, %v4416
          %4418 = vdwg.mxu0
          %4419 = vmatpush.msra.mxu0 %v4208
          %4420 = vmatpush.msra.mxu0 %v4207
          %4421 = vmatpush.msra.mxu0 %v4206
          %4422 = vmatpush.msra.mxu0 %v4205
          %4423 = vmatpush.msra.mxu0 %v4204
          %4424 = vmatpush.msra.mxu0 %v4203
          %4425 = vmatpush.msra.mxu0 %v4202
          %4426 = vmatpush.msra.mxu0 %v4201
          %4427 = vmatpush.msra.mxu0 %v4200
          %4428 = vmatpush.msra.mxu0 %v4199
          %4429 = vmatpush.msra.mxu0 %v4198
          %4430 = vmatpush.msra.mxu0 %v4197
          %4431 = vmatpush.msra.mxu0 %v4196
          %4432 = vmatpush.msra.mxu0 %v4195
          %4433 = vmatpush.msra.mxu0 %v4194
          %4434 = vmatpush.msra.mxu0 %v4193
          %4435 = vmatmul.f32.gmra.mxu0 %v4035
          %v4436 = vpop.f32.mrf.mxu0
          %v4437 = vadd.f32 %v4372, %v4436
          %4438 = vmatmul.f32.gmra.mxu0 %v4043
          %v4439 = vpop.f32.mrf.mxu0
          %v4440 = vadd.f32 %v4375, %v4439
          %4441 = vmatmul.f32.gmra.mxu0 %v4051
          %v4442 = vpop.f32.mrf.mxu0
          %v4443 = vadd.f32 %v4378, %v4442
          %4444 = vmatmul.f32.gmra.mxu0 %v4059
          %v4445 = vpop.f32.mrf.mxu0
          %v4446 = vadd.f32 %v4381, %v4445
          %4447 = vmatmul.f32.gmra.mxu0 %v4067
          %v4448 = vpop.f32.mrf.mxu0
          %v4449 = vadd.f32 %v4384, %v4448
          %4450 = vmatmul.f32.gmra.mxu0 %v4075
          %v4451 = vpop.f32.mrf.mxu0
          %v4452 = vadd.f32 %v4387, %v4451
          %4453 = vmatmul.f32.gmra.mxu0 %v4083
          %v4454 = vpop.f32.mrf.mxu0
          %v4455 = vadd.f32 %v4390, %v4454
          %4456 = vmatmul.f32.gmra.mxu0 %v4091
          %v4457 = vpop.f32.mrf.mxu0
          %v4458 = vadd.f32 %v4393, %v4457
          %4459 = vmatmul.f32.gmra.mxu0 %v4099
          %v4460 = vpop.f32.mrf.mxu0
          %v4461 = vadd.f32 %v4396, %v4460
          %4462 = vmatmul.f32.gmra.mxu0 %v4107
          %v4463 = vpop.f32.mrf.mxu0
          %v4464 = vadd.f32 %v4399, %v4463
          %4465 = vmatmul.f32.gmra.mxu0 %v4115
          %v4466 = vpop.f32.mrf.mxu0
          %v4467 = vadd.f32 %v4402, %v4466
          %4468 = vmatmul.f32.gmra.mxu0 %v4123
          %v4469 = vpop.f32.mrf.mxu0
          %v4470 = vadd.f32 %v4405, %v4469
          %4471 = vmatmul.f32.gmra.mxu0 %v4131
          %v4472 = vpop.f32.mrf.mxu0
          %v4473 = vadd.f32 %v4408, %v4472
          %4474 = vmatmul.f32.gmra.mxu0 %v4139
          %v4475 = vpop.f32.mrf.mxu0
          %v4476 = vadd.f32 %v4411, %v4475
          %4477 = vmatmul.f32.gmra.mxu0 %v4147
          %v4478 = vpop.f32.mrf.mxu0
          %v4479 = vadd.f32 %v4414, %v4478
          %4480 = vmatmul.f32.gmra.mxu0 %v4155
          %v4481 = vpop.f32.mrf.mxu0
          %v4482 = vadd.f32 %v4417, %v4481
          %4483 = vdwg.mxu0
          %4484 = vmatpush.msra.mxu0 %v4224
          %4485 = vmatpush.msra.mxu0 %v4223
          %4486 = vmatpush.msra.mxu0 %v4222
          %4487 = vmatpush.msra.mxu0 %v4221
          %4488 = vmatpush.msra.mxu0 %v4220
          %4489 = vmatpush.msra.mxu0 %v4219
          %4490 = vmatpush.msra.mxu0 %v4218
          %4491 = vmatpush.msra.mxu0 %v4217
          %4492 = vmatpush.msra.mxu0 %v4216
          %4493 = vmatpush.msra.mxu0 %v4215
          %4494 = vmatpush.msra.mxu0 %v4214
          %4495 = vmatpush.msra.mxu0 %v4213
          %4496 = vmatpush.msra.mxu0 %v4212
          %4497 = vmatpush.msra.mxu0 %v4211
          %4498 = vmatpush.msra.mxu0 %v4210
          %4499 = vmatpush.msra.mxu0 %v4209
          %4500 = vmatmul.f32.gmra.mxu0 %v4036
          %v4501 = vpop.f32.mrf.mxu0
          %v4502 = vadd.f32 %v4437, %v4501
          %4503 = vmatmul.f32.gmra.mxu0 %v4044
          %v4504 = vpop.f32.mrf.mxu0
          %v4505 = vadd.f32 %v4440, %v4504
          %4506 = vmatmul.f32.gmra.mxu0 %v4052
          %v4507 = vpop.f32.mrf.mxu0
          %v4508 = vadd.f32 %v4443, %v4507
          %4509 = vmatmul.f32.gmra.mxu0 %v4060
          %v4510 = vpop.f32.mrf.mxu0
          %v4511 = vadd.f32 %v4446, %v4510
          %4512 = vmatmul.f32.gmra.mxu0 %v4068
          %v4513 = vpop.f32.mrf.mxu0
          %v4514 = vadd.f32 %v4449, %v4513
          %4515 = vmatmul.f32.gmra.mxu0 %v4076
          %v4516 = vpop.f32.mrf.mxu0
          %v4517 = vadd.f32 %v4452, %v4516
          %4518 = vmatmul.f32.gmra.mxu0 %v4084
          %v4519 = vpop.f32.mrf.mxu0
          %v4520 = vadd.f32 %v4455, %v4519
          %4521 = vmatmul.f32.gmra.mxu0 %v4092
          %v4522 = vpop.f32.mrf.mxu0
          %v4523 = vadd.f32 %v4458, %v4522
          %4524 = vmatmul.f32.gmra.mxu0 %v4100
          %v4525 = vpop.f32.mrf.mxu0
          %v4526 = vadd.f32 %v4461, %v4525
          %4527 = vmatmul.f32.gmra.mxu0 %v4108
          %v4528 = vpop.f32.mrf.mxu0
          %v4529 = vadd.f32 %v4464, %v4528
          %4530 = vmatmul.f32.gmra.mxu0 %v4116
          %v4531 = vpop.f32.mrf.mxu0
          %v4532 = vadd.f32 %v4467, %v4531
          %4533 = vmatmul.f32.gmra.mxu0 %v4124
          %v4534 = vpop.f32.mrf.mxu0
          %v4535 = vadd.f32 %v4470, %v4534
          %4536 = vmatmul.f32.gmra.mxu0 %v4132
          %v4537 = vpop.f32.mrf.mxu0
          %v4538 = vadd.f32 %v4473, %v4537
          %4539 = vmatmul.f32.gmra.mxu0 %v4140
          %v4540 = vpop.f32.mrf.mxu0
          %v4541 = vadd.f32 %v4476, %v4540
          %4542 = vmatmul.f32.gmra.mxu0 %v4148
          %v4543 = vpop.f32.mrf.mxu0
          %v4544 = vadd.f32 %v4479, %v4543
          %4545 = vmatmul.f32.gmra.mxu0 %v4156
          %v4546 = vpop.f32.mrf.mxu0
          %v4547 = vadd.f32 %v4482, %v4546
          %4548 = vdwg.mxu0
          %4549 = vmatpush.msra.mxu0 %v4240
          %4550 = vmatpush.msra.mxu0 %v4239
          %4551 = vmatpush.msra.mxu0 %v4238
          %4552 = vmatpush.msra.mxu0 %v4237
          %4553 = vmatpush.msra.mxu0 %v4236
          %4554 = vmatpush.msra.mxu0 %v4235
          %4555 = vmatpush.msra.mxu0 %v4234
          %4556 = vmatpush.msra.mxu0 %v4233
          %4557 = vmatpush.msra.mxu0 %v4232
          %4558 = vmatpush.msra.mxu0 %v4231
          %4559 = vmatpush.msra.mxu0 %v4230
          %4560 = vmatpush.msra.mxu0 %v4229
          %4561 = vmatpush.msra.mxu0 %v4228
          %4562 = vmatpush.msra.mxu0 %v4227
          %4563 = vmatpush.msra.mxu0 %v4226
          %4564 = vmatpush.msra.mxu0 %v4225
          %4565 = vmatmul.f32.gmra.mxu0 %v4037
          %v4566 = vpop.f32.mrf.mxu0
          %v4567 = vadd.f32 %v4502, %v4566
          %4568 = vmatmul.f32.gmra.mxu0 %v4045
          %v4569 = vpop.f32.mrf.mxu0
          %v4570 = vadd.f32 %v4505, %v4569
          %4571 = vmatmul.f32.gmra.mxu0 %v4053
          %v4572 = vpop.f32.mrf.mxu0
          %v4573 = vadd.f32 %v4508, %v4572
          %4574 = vmatmul.f32.gmra.mxu0 %v4061
          %v4575 = vpop.f32.mrf.mxu0
          %v4576 = vadd.f32 %v4511, %v4575
          %4577 = vmatmul.f32.gmra.mxu0 %v4069
          %v4578 = vpop.f32.mrf.mxu0
          %v4579 = vadd.f32 %v4514, %v4578
          %4580 = vmatmul.f32.gmra.mxu0 %v4077
          %v4581 = vpop.f32.mrf.mxu0
          %v4582 = vadd.f32 %v4517, %v4581
          %4583 = vmatmul.f32.gmra.mxu0 %v4085
          %v4584 = vpop.f32.mrf.mxu0
          %v4585 = vadd.f32 %v4520, %v4584
          %4586 = vmatmul.f32.gmra.mxu0 %v4093
          %v4587 = vpop.f32.mrf.mxu0
          %v4588 = vadd.f32 %v4523, %v4587
          %4589 = vmatmul.f32.gmra.mxu0 %v4101
          %v4590 = vpop.f32.mrf.mxu0
          %v4591 = vadd.f32 %v4526, %v4590
          %4592 = vmatmul.f32.gmra.mxu0 %v4109
          %v4593 = vpop.f32.mrf.mxu0
          %v4594 = vadd.f32 %v4529, %v4593
          %4595 = vmatmul.f32.gmra.mxu0 %v4117
          %v4596 = vpop.f32.mrf.mxu0
          %v4597 = vadd.f32 %v4532, %v4596
          %4598 = vmatmul.f32.gmra.mxu0 %v4125
          %v4599 = vpop.f32.mrf.mxu0
          %v4600 = vadd.f32 %v4535, %v4599
          %4601 = vmatmul.f32.gmra.mxu0 %v4133
          %v4602 = vpop.f32.mrf.mxu0
          %v4603 = vadd.f32 %v4538, %v4602
          %4604 = vmatmul.f32.gmra.mxu0 %v4141
          %v4605 = vpop.f32.mrf.mxu0
          %v4606 = vadd.f32 %v4541, %v4605
          %4607 = vmatmul.f32.gmra.mxu0 %v4149
          %v4608 = vpop.f32.mrf.mxu0
          %v4609 = vadd.f32 %v4544, %v4608
          %4610 = vmatmul.f32.gmra.mxu0 %v4157
          %v4611 = vpop.f32.mrf.mxu0
          %v4612 = vadd.f32 %v4547, %v4611
          %4613 = vdwg.mxu0
          %4614 = vmatpush.msra.mxu0 %v4256
          %4615 = vmatpush.msra.mxu0 %v4255
          %4616 = vmatpush.msra.mxu0 %v4254
          %4617 = vmatpush.msra.mxu0 %v4253
          %4618 = vmatpush.msra.mxu0 %v4252
          %4619 = vmatpush.msra.mxu0 %v4251
          %4620 = vmatpush.msra.mxu0 %v4250
          %4621 = vmatpush.msra.mxu0 %v4249
          %4622 = vmatpush.msra.mxu0 %v4248
          %4623 = vmatpush.msra.mxu0 %v4247
          %4624 = vmatpush.msra.mxu0 %v4246
          %4625 = vmatpush.msra.mxu0 %v4245
          %4626 = vmatpush.msra.mxu0 %v4244
          %4627 = vmatpush.msra.mxu0 %v4243
          %4628 = vmatpush.msra.mxu0 %v4242
          %4629 = vmatpush.msra.mxu0 %v4241
          %4630 = vmatmul.f32.gmra.mxu0 %v4038
          %v4631 = vpop.f32.mrf.mxu0
          %v4632 = vadd.f32 %v4567, %v4631
          %4633 = vmatmul.f32.gmra.mxu0 %v4046
          %v4634 = vpop.f32.mrf.mxu0
          %v4635 = vadd.f32 %v4570, %v4634
          %4636 = vmatmul.f32.gmra.mxu0 %v4054
          %v4637 = vpop.f32.mrf.mxu0
          %v4638 = vadd.f32 %v4573, %v4637
          %4639 = vmatmul.f32.gmra.mxu0 %v4062
          %v4640 = vpop.f32.mrf.mxu0
          %v4641 = vadd.f32 %v4576, %v4640
          %4642 = vmatmul.f32.gmra.mxu0 %v4070
          %v4643 = vpop.f32.mrf.mxu0
          %v4644 = vadd.f32 %v4579, %v4643
          %4645 = vmatmul.f32.gmra.mxu0 %v4078
          %v4646 = vpop.f32.mrf.mxu0
          %v4647 = vadd.f32 %v4582, %v4646
          %4648 = vmatmul.f32.gmra.mxu0 %v4086
          %v4649 = vpop.f32.mrf.mxu0
          %v4650 = vadd.f32 %v4585, %v4649
          %4651 = vmatmul.f32.gmra.mxu0 %v4094
          %v4652 = vpop.f32.mrf.mxu0
          %v4653 = vadd.f32 %v4588, %v4652
          %4654 = vmatmul.f32.gmra.mxu0 %v4102
          %v4655 = vpop.f32.mrf.mxu0
          %v4656 = vadd.f32 %v4591, %v4655
          %4657 = vmatmul.f32.gmra.mxu0 %v4110
          %v4658 = vpop.f32.mrf.mxu0
          %v4659 = vadd.f32 %v4594, %v4658
          %4660 = vmatmul.f32.gmra.mxu0 %v4118
          %v4661 = vpop.f32.mrf.mxu0
          %v4662 = vadd.f32 %v4597, %v4661
          %4663 = vmatmul.f32.gmra.mxu0 %v4126
          %v4664 = vpop.f32.mrf.mxu0
          %v4665 = vadd.f32 %v4600, %v4664
          %4666 = vmatmul.f32.gmra.mxu0 %v4134
          %v4667 = vpop.f32.mrf.mxu0
          %v4668 = vadd.f32 %v4603, %v4667
          %4669 = vmatmul.f32.gmra.mxu0 %v4142
          %v4670 = vpop.f32.mrf.mxu0
          %v4671 = vadd.f32 %v4606, %v4670
          %4672 = vmatmul.f32.gmra.mxu0 %v4150
          %v4673 = vpop.f32.mrf.mxu0
          %v4674 = vadd.f32 %v4609, %v4673
          %4675 = vmatmul.f32.gmra.mxu0 %v4158
          %v4676 = vpop.f32.mrf.mxu0
          %v4677 = vadd.f32 %v4612, %v4676
          %4678 = vdwg.mxu0
          %4679 = vmatpush.msra.mxu0 %v4272
          %4680 = vmatpush.msra.mxu0 %v4271
          %4681 = vmatpush.msra.mxu0 %v4270
          %4682 = vmatpush.msra.mxu0 %v4269
          %4683 = vmatpush.msra.mxu0 %v4268
          %4684 = vmatpush.msra.mxu0 %v4267
          %4685 = vmatpush.msra.mxu0 %v4266
          %4686 = vmatpush.msra.mxu0 %v4265
          %4687 = vmatpush.msra.mxu0 %v4264
          %4688 = vmatpush.msra.mxu0 %v4263
          %4689 = vmatpush.msra.mxu0 %v4262
          %4690 = vmatpush.msra.mxu0 %v4261
          %4691 = vmatpush.msra.mxu0 %v4260
          %4692 = vmatpush.msra.mxu0 %v4259
          %4693 = vmatpush.msra.mxu0 %v4258
          %4694 = vmatpush.msra.mxu0 %v4257
          %4695 = vmatmul.f32.gmra.mxu0 %v4039
          %v4696 = vpop.f32.mrf.mxu0
          %v4697 = vadd.f32 %v4632, %v4696
          %4698 = vmatmul.f32.gmra.mxu0 %v4047
          %v4699 = vpop.f32.mrf.mxu0
          %v4700 = vadd.f32 %v4635, %v4699
          %4701 = vmatmul.f32.gmra.mxu0 %v4055
          %v4702 = vpop.f32.mrf.mxu0
          %v4703 = vadd.f32 %v4638, %v4702
          %4704 = vmatmul.f32.gmra.mxu0 %v4063
          %v4705 = vpop.f32.mrf.mxu0
          %v4706 = vadd.f32 %v4641, %v4705
          %4707 = vmatmul.f32.gmra.mxu0 %v4071
          %v4708 = vpop.f32.mrf.mxu0
          %v4709 = vadd.f32 %v4644, %v4708
          %4710 = vmatmul.f32.gmra.mxu0 %v4079
          %v4711 = vpop.f32.mrf.mxu0
          %v4712 = vadd.f32 %v4647, %v4711
          %4713 = vmatmul.f32.gmra.mxu0 %v4087
          %v4714 = vpop.f32.mrf.mxu0
          %v4715 = vadd.f32 %v4650, %v4714
          %4716 = vmatmul.f32.gmra.mxu0 %v4095
          %v4717 = vpop.f32.mrf.mxu0
          %v4718 = vadd.f32 %v4653, %v4717
          %4719 = vmatmul.f32.gmra.mxu0 %v4103
          %v4720 = vpop.f32.mrf.mxu0
          %v4721 = vadd.f32 %v4656, %v4720
          %4722 = vmatmul.f32.gmra.mxu0 %v4111
          %v4723 = vpop.f32.mrf.mxu0
          %v4724 = vadd.f32 %v4659, %v4723
          %4725 = vmatmul.f32.gmra.mxu0 %v4119
          %v4726 = vpop.f32.mrf.mxu0
          %v4727 = vadd.f32 %v4662, %v4726
          %4728 = vmatmul.f32.gmra.mxu0 %v4127
          %v4729 = vpop.f32.mrf.mxu0
          %v4730 = vadd.f32 %v4665, %v4729
          %4731 = vmatmul.f32.gmra.mxu0 %v4135
          %v4732 = vpop.f32.mrf.mxu0
          %v4733 = vadd.f32 %v4668, %v4732
          %4734 = vmatmul.f32.gmra.mxu0 %v4143
          %v4735 = vpop.f32.mrf.mxu0
          %v4736 = vadd.f32 %v4671, %v4735
          %4737 = vmatmul.f32.gmra.mxu0 %v4151
          %v4738 = vpop.f32.mrf.mxu0
          %v4739 = vadd.f32 %v4674, %v4738
          %4740 = vmatmul.f32.gmra.mxu0 %v4159
          %v4741 = vpop.f32.mrf.mxu0
          %v4742 = vadd.f32 %v4677, %v4741
          %4743 = vdwg.mxu0
          %4744 = vmatpush.msra.mxu0 %v4288
          %4745 = vmatpush.msra.mxu0 %v4287
          %4746 = vmatpush.msra.mxu0 %v4286
          %4747 = vmatpush.msra.mxu0 %v4285
          %4748 = vmatpush.msra.mxu0 %v4284
          %4749 = vmatpush.msra.mxu0 %v4283
          %4750 = vmatpush.msra.mxu0 %v4282
          %4751 = vmatpush.msra.mxu0 %v4281
          %4752 = vmatpush.msra.mxu0 %v4280
          %4753 = vmatpush.msra.mxu0 %v4279
          %4754 = vmatpush.msra.mxu0 %v4278
          %4755 = vmatpush.msra.mxu0 %v4277
          %4756 = vmatpush.msra.mxu0 %v4276
          %4757 = vmatpush.msra.mxu0 %v4275
          %4758 = vmatpush.msra.mxu0 %v4274
          %4759 = vmatpush.msra.mxu0 %v4273
          %4760 = vmatmul.f32.gmra.mxu0 %v4040
          %v4761 = vpop.f32.mrf.mxu0
          %v4762 = vadd.f32 %v4697, %v4761
          %4763 = vmatmul.f32.gmra.mxu0 %v4048
          %v4764 = vpop.f32.mrf.mxu0
          %v4765 = vadd.f32 %v4700, %v4764
          %4766 = vmatmul.f32.gmra.mxu0 %v4056
          %v4767 = vpop.f32.mrf.mxu0
          %v4768 = vadd.f32 %v4703, %v4767
          %4769 = vmatmul.f32.gmra.mxu0 %v4064
          %v4770 = vpop.f32.mrf.mxu0
          %v4771 = vadd.f32 %v4706, %v4770
          %4772 = vmatmul.f32.gmra.mxu0 %v4072
          %v4773 = vpop.f32.mrf.mxu0
          %v4774 = vadd.f32 %v4709, %v4773
          %4775 = vmatmul.f32.gmra.mxu0 %v4080
          %v4776 = vpop.f32.mrf.mxu0
          %v4777 = vadd.f32 %v4712, %v4776
          %4778 = vmatmul.f32.gmra.mxu0 %v4088
          %v4779 = vpop.f32.mrf.mxu0
          %v4780 = vadd.f32 %v4715, %v4779
          %4781 = vmatmul.f32.gmra.mxu0 %v4096
          %v4782 = vpop.f32.mrf.mxu0
          %v4783 = vadd.f32 %v4718, %v4782
          %4784 = vmatmul.f32.gmra.mxu0 %v4104
          %v4785 = vpop.f32.mrf.mxu0
          %v4786 = vadd.f32 %v4721, %v4785
          %4787 = vmatmul.f32.gmra.mxu0 %v4112
          %v4788 = vpop.f32.mrf.mxu0
          %v4789 = vadd.f32 %v4724, %v4788
          %4790 = vmatmul.f32.gmra.mxu0 %v4120
          %v4791 = vpop.f32.mrf.mxu0
          %v4792 = vadd.f32 %v4727, %v4791
          %4793 = vmatmul.f32.gmra.mxu0 %v4128
          %v4794 = vpop.f32.mrf.mxu0
          %v4795 = vadd.f32 %v4730, %v4794
          %4796 = vmatmul.f32.gmra.mxu0 %v4136
          %v4797 = vpop.f32.mrf.mxu0
          %v4798 = vadd.f32 %v4733, %v4797
          %4799 = vmatmul.f32.gmra.mxu0 %v4144
          %v4800 = vpop.f32.mrf.mxu0
          %v4801 = vadd.f32 %v4736, %v4800
          %4802 = vmatmul.f32.gmra.mxu0 %v4152
          %v4803 = vpop.f32.mrf.mxu0
          %v4804 = vadd.f32 %v4739, %v4803
          %4805 = vmatmul.f32.gmra.mxu0 %v4160
          %v4806 = vpop.f32.mrf.mxu0
          %v4807 = vadd.f32 %v4742, %v4806
          %4808 = vdwg.mxu0
          %4809 = vadd.xlane.f32.xlu0 %v4762
          %v4810 = vpop.xlane.xlu0 %4809
          %4811 = vadd.xlane.f32.xlu0 %v4765
          %v4812 = vpop.xlane.xlu0 %4811
          %4813 = vadd.xlane.f32.xlu0 %v4768
          %v4814 = vpop.xlane.xlu0 %4813
          %4815 = vadd.xlane.f32.xlu0 %v4771
          %v4816 = vpop.xlane.xlu0 %4815
          %4817 = vadd.xlane.f32.xlu0 %v4774
          %v4818 = vpop.xlane.xlu0 %4817
          %4819 = vadd.xlane.f32.xlu0 %v4777
          %v4820 = vpop.xlane.xlu0 %4819
          %4821 = vadd.xlane.f32.xlu0 %v4780
          %v4822 = vpop.xlane.xlu0 %4821
          %4823 = vadd.xlane.f32.xlu0 %v4783
          %v4824 = vpop.xlane.xlu0 %4823
          %4825 = vadd.xlane.f32.xlu0 %v4786
          %v4826 = vpop.xlane.xlu0 %4825
          %4827 = vadd.xlane.f32.xlu0 %v4789
          %v4828 = vpop.xlane.xlu0 %4827
          %4829 = vadd.xlane.f32.xlu0 %v4792
          %v4830 = vpop.xlane.xlu0 %4829
          %4831 = vadd.xlane.f32.xlu0 %v4795
          %v4832 = vpop.xlane.xlu0 %4831
          %4833 = vadd.xlane.f32.xlu0 %v4798
          %v4834 = vpop.xlane.xlu0 %4833
          %4835 = vadd.xlane.f32.xlu0 %v4801
          %v4836 = vpop.xlane.xlu0 %4835
          %4837 = vadd.xlane.f32.xlu0 %v4804
          %v4838 = vpop.xlane.xlu0 %4837
          %4839 = vadd.xlane.f32.xlu0 %v4807
          %v4840 = vpop.xlane.xlu0 %4839
          %v4841 = vmul.f32 %v4810, 0.00390625
          %v4842 = vmul.f32 %v4812, 0.00390625
          %v4843 = vmul.f32 %v4814, 0.00390625
          %v4844 = vmul.f32 %v4816, 0.00390625
          %v4845 = vmul.f32 %v4818, 0.00390625
          %v4846 = vmul.f32 %v4820, 0.00390625
          %v4847 = vmul.f32 %v4822, 0.00390625
          %v4848 = vmul.f32 %v4824, 0.00390625
          %v4849 = vmul.f32 %v4826, 0.00390625
          %v4850 = vmul.f32 %v4828, 0.00390625
          %v4851 = vmul.f32 %v4830, 0.00390625
          %v4852 = vmul.f32 %v4832, 0.00390625
          %v4853 = vmul.f32 %v4834, 0.00390625
          %v4854 = vmul.f32 %v4836, 0.00390625
          %v4855 = vmul.f32 %v4838, 0.00390625
          %v4856 = vmul.f32 %v4840, 0.00390625
          %v4857 = vld [vmem:[%s4] sm:$0xff]
          %v4858 = vld [vmem:[%s4 + $0x8] sm:$0xff]
          %v4859 = vld [vmem:[%s4 + $0x10] sm:$0xff]
          %v4860 = vld [vmem:[%s4 + $0x18] sm:$0xff]
          %v4861 = vld [vmem:[%s4 + $0x20] sm:$0xff]
          %v4862 = vld [vmem:[%s4 + $0x28] sm:$0xff]
          %v4863 = vld [vmem:[%s4 + $0x30] sm:$0xff]
          %v4864 = vld [vmem:[%s4 + $0x38] sm:$0xff]
          %v4865 = vld [vmem:[%s4 + $0x40] sm:$0xff]
          %v4866 = vld [vmem:[%s4 + $0x48] sm:$0xff]
          %v4867 = vld [vmem:[%s4 + $0x50] sm:$0xff]
          %v4868 = vld [vmem:[%s4 + $0x58] sm:$0xff]
          %v4869 = vld [vmem:[%s4 + $0x60] sm:$0xff]
          %v4870 = vld [vmem:[%s4 + $0x68] sm:$0xff]
          %v4871 = vld [vmem:[%s4 + $0x70] sm:$0xff]
          %v4872 = vld [vmem:[%s4 + $0x78] sm:$0xff]
          %v4873 = vadd.f32 %v4841, %v4857
          %v4874 = vadd.f32 %v4842, %v4858
          %v4875 = vadd.f32 %v4843, %v4859
          %v4876 = vadd.f32 %v4844, %v4860
          %v4877 = vadd.f32 %v4845, %v4861
          %v4878 = vadd.f32 %v4846, %v4862
          %v4879 = vadd.f32 %v4847, %v4863
          %v4880 = vadd.f32 %v4848, %v4864
          %v4881 = vadd.f32 %v4849, %v4865
          %v4882 = vadd.f32 %v4850, %v4866
          %v4883 = vadd.f32 %v4851, %v4867
          %v4884 = vadd.f32 %v4852, %v4868
          %v4885 = vadd.f32 %v4853, %v4869
          %v4886 = vadd.f32 %v4854, %v4870
          %v4887 = vadd.f32 %v4855, %v4871
          %v4888 = vadd.f32 %v4856, %v4872
          %vm4889 = vcmask 7168
          %4890 = vst.msk [vmem:[%s302] sm:$0xff] %vm4889, %v4873
          %4891 = vst.msk [vmem:[%s302 + $0x8] sm:$0xff] %vm4889, %v4874
          %4892 = vst.msk [vmem:[%s302 + $0x10] sm:$0xff] %vm4889, %v4875
          %4893 = vst.msk [vmem:[%s302 + $0x18] sm:$0xff] %vm4889, %v4876
          %4894 = vst.msk [vmem:[%s302 + $0x20] sm:$0xff] %vm4889, %v4877
          %4895 = vst.msk [vmem:[%s302 + $0x28] sm:$0xff] %vm4889, %v4878
          %4896 = vst.msk [vmem:[%s302 + $0x30] sm:$0xff] %vm4889, %v4879
          %4897 = vst.msk [vmem:[%s302 + $0x38] sm:$0xff] %vm4889, %v4880
          %4898 = vst.msk [vmem:[%s302 + $0x40] sm:$0xff] %vm4889, %v4881
          %4899 = vst.msk [vmem:[%s302 + $0x48] sm:$0xff] %vm4889, %v4882
          %4900 = vst.msk [vmem:[%s302 + $0x50] sm:$0xff] %vm4889, %v4883
          %4901 = vst.msk [vmem:[%s302 + $0x58] sm:$0xff] %vm4889, %v4884
          %4902 = vst.msk [vmem:[%s302 + $0x60] sm:$0xff] %vm4889, %v4885
          %4903 = vst.msk [vmem:[%s302 + $0x68] sm:$0xff] %vm4889, %v4886
          %4904 = vst.msk [vmem:[%s302 + $0x70] sm:$0xff] %vm4889, %v4887
          %4905 = vst.msk [vmem:[%s302 + $0x78] sm:$0xff] %vm4889, %v4888
        $region60: #{classification_model_forward.1} parent=39 // pred_fallthru
          _
        %p4906 = scmp.lt.s32.totalorder %s22, 1
        %s4907 = scalar_select %p4906, %s22, 1
        %s4908 = smul.addr %s4907, 16
        %s4909 = smul.addr %s4908, 8
        %s4910 = scalar_lea.vmem %s5, %s4909
        // Predicated region
        $region61: #{classification_model_forward.1} parent=39 // pred_check
          %p4911 = pneg %p160
        $region62: #{classification_model_forward.1} parent=39 // pred_check_branch
          %4913 = sbr.rel (%p4911) target = $region64
        $region63: #{classification_model_forward.1} parent=39 // pred_region
          _
        $region64: #{classification_model_forward.1} parent=39 // pred_fallthru
          _
      $region40: #{classification_model_forward.1} parent=5 // pred_fallthru
        _
      %p4914 = scmp.le.s32.totalorder 2, %s13
      // Predicated region
      $region65: #{classification_model_forward.1} parent=5 // pred_check
        %p4915 = pneg %p4914
      $region66: #{classification_model_forward.1} parent=5 // pred_check_branch
        %4917 = sbr.rel (%p4915) target = $region68
      $region67: #{classification_model_forward.1} parent=5 // pred_region
        %s4918 = ssub.s32 %s13, 2
        // Predicated region
        $region69: #{classification_model_forward.1} parent=67 // pred_check
          %p4919 = pneg %p166
        $region70: #{classification_model_forward.1} parent=67 // pred_check_branch
          %4921 = sbr.rel (%p4919) target = $region72
        $region71: #{classification_model_forward.1} parent=67 // pred_region
          %p4922 = scmp.lt.s32.totalorder %s24, 1
          %s4923 = scalar_select %p4922, %s24, 1
          %s4924 = smul.addr %s4923, 16
          %s4925 = smul.addr %s4924, 8
          %s4926 = scalar_lea.vmem %s5, %s4925
        $region72: #{classification_model_forward.1} parent=67 // pred_fallthru
          _
      $region68: #{classification_model_forward.1} parent=5 // pred_fallthru
        _
    $region6: #{classification_model_forward.1} parent=1 // loop_footer
      %s17 = sadd.s32 1, %s13
    $region7: #{classification_model_forward.1} parent=1 // loop_footer_branch
      %12 = sbr.rel target = $region3
    $region8: #{classification_model_forward.1} parent=1 // loop_exit
      _
    %4927 = vsyncpa [#allocation4], 1
    %s4928 = scalar_lea.sflag [#allocation4], 1
    %4929 = vsyncpa %s4928, 1
    %4930 = vsyncpa [#allocation6], 1

</llo_original>
